<compile_context>
chip_gen: v5e
topology: v5e:2x2
jax: 0.10.0
libtpu: 0.0.40
codegen_flags: <defaults>
</compile_context>

<pallas_src>
import functools

import jax
import jax.numpy as jnp
from jax.experimental import pallas as pl
from jax.experimental.pallas import tpu as pltpu


# ----------------------------- Pallas kernel -----------------------------

def _spec(shape):
    zeros = (0,) * len(shape)
    return pl.BlockSpec(shape, lambda i, _z=zeros: _z)


def _neurosat_kernel(
        # graph data
        x_ref, adj_ref, pmat_ref, mask_ref, pool_ref,
        # init linears
        li_w_ref, li_b_ref, ci_w_ref, ci_b_ref,
        # L_msg MLP
        lm_w1_ref, lm_b1_ref, lm_w2_ref, lm_b2_ref, lm_w3_ref, lm_b3_ref,
        # C_msg MLP
        cm_w1_ref, cm_b1_ref, cm_w2_ref, cm_b2_ref, cm_w3_ref, cm_b3_ref,
        # L_update LSTM (per-gate, input weights split into [flipped | c_msg])
        lu_wiha_ref, lu_wihb_ref, lu_whh_ref, lu_b_ref,
        # C_update LSTM (per-gate)
        cu_wih_ref, cu_whh_ref, cu_b_ref,
        # LayerNorms
        ln_g_ref, ln_b_ref, cn_g_ref, cn_b_ref,
        # L_vote MLP
        lv_w1_ref, lv_b1_ref, lv_w2_ref, lv_b2_ref, lv_w3_ref, lv_b3_ref,
        # output
        o_ref,
        *, iterations):
    f32 = jnp.float32
    bf16 = jnp.bfloat16

    def dot(a, b):
        # MXU matmul; operands bf16, accumulate in f32.
        return jnp.dot(a, b, preferred_element_type=f32)

    mask = mask_ref[...]                 # [N, 1] f32
    inv_mask = 1.0 - mask

    def mlp3(v, w1, b1, w2, b2, w3, b3):
        h = dot(v.astype(bf16), w1[...]) + b1[...]
        h = dot(h.astype(bf16), w2[...]) + b2[...]
        return dot(h.astype(bf16), w3[...]) + b3[...]

    def layer_norm(v, g_ref, b_ref):
        mu = jnp.mean(v, axis=-1, keepdims=True)
        var = jnp.mean((v - mu) ** 2, axis=-1, keepdims=True)
        return (v - mu) * jax.lax.rsqrt(var + 1e-5) * g_ref[...] + b_ref[...]

    def lstm_ln(inputs, h, c, whh_ref, b_ref, g_ref, beta_ref):
        # inputs: tuple of (x_bf16, wih_ref[(4, in, H)]); gate order (i,f,g,o).
        h_b = h.astype(bf16)
        acts = []
        for gi in range(4):
            acc = b_ref[gi]                       # (1, H) f32
            for xv, wih_ref in inputs:
                acc = acc + dot(xv, wih_ref[gi])
            acc = acc + dot(h_b, whh_ref[gi])
            acts.append(acc)
        i_g = jax.nn.sigmoid(acts[0])
        f_g = jax.nn.sigmoid(acts[1])
        g_g = jnp.tanh(acts[2])
        o_g = jax.nn.sigmoid(acts[3])
        c_new = f_g * c + i_g * g_g
        h_new = layer_norm(o_g * jnp.tanh(c_new), g_ref, beta_ref)
        return h_new, c_new

    # ---- prologue: out = L_init(x)*(1-mask) + C_init(x)*mask ----
    x_b = x_ref[...]                     # bf16 [N, 2]
    out0 = ((dot(x_b, li_w_ref[...]) + li_b_ref[...]) * inv_mask
            + (dot(x_b, ci_w_ref[...]) + ci_b_ref[...]) * mask)
    zeros = jnp.zeros_like(out0)

    # ---- recurrence: everything stays in VMEM / vregs ----
    def body(_, carry):
        out, l_h, l_c, c_h, c_c = carry
        # literal -> clause messages (MessagePassing aggr='add' + self loops
        # realized as dense adjacency matmul)
        l_msg = mlp3(out, lm_w1_ref, lm_b1_ref, lm_w2_ref, lm_b2_ref,
                     lm_w3_ref, lm_b3_ref)
        l_msg = dot(adj_ref[...], l_msg.astype(bf16))
        c_h, c_c = lstm_ln(((l_msg.astype(bf16), cu_wih_ref),),
                           c_h, c_c, cu_whh_ref, cu_b_ref, cn_g_ref, cn_b_ref)
        temp_out = out * inv_mask + c_h * mask
        # clause -> literal messages
        c_msg = mlp3(temp_out, cm_w1_ref, cm_b1_ref, cm_w2_ref, cm_b2_ref,
                     cm_w3_ref, cm_b3_ref)
        c_msg = dot(adj_ref[...], c_msg.astype(bf16))
        # flip(): static row permutation as a permutation-matrix matmul;
        # concat([flipped, c_msg]) folded into two partial input matmuls.
        flipped = dot(pmat_ref[...], out.astype(bf16))
        l_h, l_c = lstm_ln(((flipped.astype(bf16), lu_wiha_ref),
                            (c_msg.astype(bf16), lu_wihb_ref)),
                           l_h, l_c, lu_whh_ref, lu_b_ref, ln_g_ref, ln_b_ref)
        out = l_h * inv_mask + c_h * mask
        return out, l_h, l_c, c_h, c_c

    out, _, _, _, _ = jax.lax.fori_loop(
        0, iterations - 1, body, (out0, zeros, zeros, zeros, zeros))

    # ---- epilogue: L_vote + global_mean_pool over literal nodes ----
    votes = mlp3(out * inv_mask, lv_w1_ref, lv_b1_ref, lv_w2_ref, lv_b2_ref,
                 lv_w3_ref, lv_b3_ref)                     # [N, 1]
    o_ref[...] = jnp.dot(pool_ref[...], votes, preferred_element_type=f32)


# ----------------------------- wrapper -----------------------------

def _cost_numbers(n, h, g, iterations, operands):
    it = max(iterations - 1, 0)
    per_iter = (2 * 6 * n * h * h          # two 3-layer MLPs
                + 2 * 2 * n * n * h        # two adjacency propagations
                + 2 * n * n * h            # flip permutation matmul
                + 2 * 20 * n * h * h)      # LSTM gate matmuls (8 + 12 dots)
    flops = (it * per_iter
             + 2 * 2 * n * 2 * h           # init linears
             + 2 * 6 * n * h * h           # L_vote MLP
             + 2 * g * n)                  # pooling
    trans = it * (2 * 5 * n * h)           # sigmoid/tanh per LSTM step
    bytes_acc = sum(int(a.size) * a.dtype.itemsize for a in operands) + g * 4
    return flops, trans, bytes_acc


def neurosat_forward(params, x, adj, pmat, mask, pool, *, iterations):
    """Reproduces NeuroSAT.forward with one fused Pallas kernel."""
    bf16 = jnp.bfloat16
    N = x.shape[0]
    G = pool.shape[0]
    H = params['L_init'][0].shape[1]

    # Pad the node axis to a multiple of 16 (bf16 sublane packing).  Pad rows
    # have zero adjacency / permutation / pool weight, so they never affect
    # real nodes or the pooled output.
    Np = ((N + 15) // 16) * 16
    pad = Np - N
    x_p = jnp.pad(x, ((0, pad), (0, 0))).astype(bf16)
    adj_p = jnp.pad(adj, ((0, pad), (0, pad))).astype(bf16)
    pmat_p = jnp.pad(pmat, ((0, pad), (0, pad))).astype(bf16)
    mask_p = jnp.pad(mask.reshape(N, 1), ((0, pad), (0, 0)))
    pool_p = jnp.pad(pool, ((0, 0), (0, pad)))

    def w16(w):
        return w.astype(bf16)

    def brow(b):
        return b.reshape(1, -1)

    li_w, li_b = params['L_init']
    ci_w, ci_b = params['C_init']
    lm1, lm2, lm3 = params['L_msg']
    cm1, cm2, cm3 = params['C_msg']
    lv1, lv2, lv3 = params['L_vote']
    lu_wih, lu_whh, lu_b = params['L_update']
    cu_wih, cu_whh, cu_b = params['C_update']
    ln_g, ln_be = params['L_norm']
    cn_g, cn_be = params['C_norm']

    def per_gate(w, in_d):
        # (in_d, 4H) with gate blocks (i,f,g,o) along columns -> (4, in_d, H)
        return w.reshape(in_d, 4, H).transpose(1, 0, 2)

    lu_wih_g = per_gate(lu_wih, 2 * H)
    lu_wih_a = w16(lu_wih_g[:, :H, :])     # acts on flipped(out)
    lu_wih_b = w16(lu_wih_g[:, H:, :])     # acts on c_msg
    lu_whh_g = w16(per_gate(lu_whh, H))
    lu_b_g = lu_b.reshape(4, 1, H)
    cu_wih_g = w16(per_gate(cu_wih, H))
    cu_whh_g = w16(per_gate(cu_whh, H))
    cu_b_g = cu_b.reshape(4, 1, H)

    operands = [
        x_p, adj_p, pmat_p, mask_p, pool_p,
        w16(li_w), brow(li_b), w16(ci_w), brow(ci_b),
        w16(lm1[0]), brow(lm1[1]), w16(lm2[0]), brow(lm2[1]),
        w16(lm3[0]), brow(lm3[1]),
        w16(cm1[0]), brow(cm1[1]), w16(cm2[0]), brow(cm2[1]),
        w16(cm3[0]), brow(cm3[1]),
        lu_wih_a, lu_wih_b, lu_whh_g, lu_b_g,
        cu_wih_g, cu_whh_g, cu_b_g,
        brow(ln_g), brow(ln_be), brow(cn_g), brow(cn_be),
        w16(lv1[0]), brow(lv1[1]), w16(lv2[0]), brow(lv2[1]),
        w16(lv3[0]), brow(lv3[1]),
    ]
    in_specs = [_spec(a.shape) for a in operands]
    flops, trans, bytes_acc = _cost_numbers(Np, H, G, iterations, operands)

    pooled = pl.pallas_call(
        functools.partial(_neurosat_kernel, iterations=iterations),
        grid=(1,),
        out_shape=jax.ShapeDtypeStruct((G, 1), jnp.float32),
        in_specs=in_specs,
        out_specs=_spec((G, 1)),
        compiler_params=pltpu.CompilerParams(
            dimension_semantics=("arbitrary",)),
        cost_estimate=pl.CostEstimate(
            flops=flops, transcendentals=trans, bytes_accessed=bytes_acc),
    )(*operands)
    return jnp.squeeze(pooled, axis=-1)     # [num_graphs]


# ----------------------------- params / data -----------------------------

def init_params(key, hidden):
    keys = iter(jax.random.split(key, 32))

    def lin(in_d, out_d):
        k1, k2 = next(keys), next(keys)
        return (jax.random.normal(k1, (in_d, out_d), jnp.float32) * 0.1,
                jax.random.normal(k2, (out_d,), jnp.float32) * 0.1)

    def mlp(in_d, hid, out_d):
        return (lin(in_d, hid), lin(hid, hid), lin(hid, out_d))

    def lstm(in_d, hid):
        k1, k2, k3 = next(keys), next(keys), next(keys)
        # weights stored transposed ([in, 4H] / [H, 4H]); bias = b_ih + b_hh
        return (jax.random.normal(k1, (in_d, 4 * hid), jnp.float32) * 0.1,
                jax.random.normal(k2, (hid, 4 * hid), jnp.float32) * 0.1,
                jax.random.normal(k3, (4 * hid,), jnp.float32) * 0.1)

    return {
        'L_init': lin(2, hidden),
        'C_init': lin(2, hidden),
        'L_msg': mlp(hidden, hidden, hidden),
        'C_msg': mlp(hidden, hidden, hidden),
        'L_update': lstm(2 * hidden, hidden),
        'C_update': lstm(hidden, hidden),
        'L_norm': (jnp.ones((hidden,), jnp.float32),
                   jnp.zeros((hidden,), jnp.float32)),
        'C_norm': (jnp.ones((hidden,), jnp.float32),
                   jnp.zeros((hidden,), jnp.float32)),
        'L_vote': mlp(hidden, hidden, 1),
    }


def build_graph():
    # Two SAT graphs; per graph nodes are ordered
    # [positive literals | negative literals | clauses] (as `flip` assumes).
    graphs = [(3, 4), (2, 3)]            # (n_vars, n_clauses)
    mask, batch, perm = [], [], []
    edges_src, edges_dst = [], []
    offset = 0
    for gid, (nv, nc) in enumerate(graphs):
        n_lit = 2 * nv
        n_nodes = n_lit + nc
        mask += [0.0] * n_lit + [1.0] * nc
        batch += [gid] * n_nodes
        # flip permutation: swap positive/negative literal halves; clauses identity
        perm += [offset + nv + j for j in range(nv)]
        perm += [offset + j for j in range(nv)]
        perm += [offset + n_lit + k for k in range(nc)]
        # clause k <-> two literals, edges both directions
        for k in range(nc):
            for lit in (k % n_lit, (k + 1) % n_lit):
                l_node = offset + lit
                c_node = offset + n_lit + k
                edges_src += [l_node, c_node]
                edges_dst += [c_node, l_node]
        offset += n_nodes

    N = offset
    G = len(graphs)
    src = jnp.array(edges_src, jnp.int32)
    dst = jnp.array(edges_dst, jnp.int32)
    # adjacency for aggr='add' with self loops: out[t] = x[t] + sum_{(s,t)} x[s]
    adj = (jnp.zeros((N, N), jnp.float32).at[dst, src].add(1.0)
           + jnp.eye(N, dtype=jnp.float32))
    mask_a = jnp.array(mask, jnp.float32)
    batch_a = jnp.array(batch, jnp.int32)
    perm_a = jnp.array(perm, jnp.int32)
    pmat = jnp.eye(N, dtype=jnp.float32)[perm_a]        # flipped = pmat @ out
    # mean-pool matrix over literal nodes per graph (global_mean_pool)
    pool = jnp.zeros((G, N), jnp.float32)
    for g in range(G):
        lit_rows = (batch_a == g) & (mask_a == 0.0)
        n_lit_g = max(float(jnp.sum(lit_rows)), 1.0)    # guard zero-literal graph
        pool = pool.at[g, :].set(jnp.where(lit_rows, 1.0 / n_lit_g, 0.0))
    return N, mask_a, adj, pmat, pool


if __name__ == "__main__":
    HIDDEN = 32        # small hidden_dim (module default 64)
    ITERATIONS = 4     # small iteration count (module default 24)

    key = jax.random.PRNGKey(0)
    kp, kx = jax.random.split(key)
    params = init_params(kp, HIDDEN)
    N, mask, adj, pmat, pool_mat = build_graph()
    x = jax.random.normal(kx, (N, 2), jnp.float32)      # data.x : [N, 2]

    fwd = jax.jit(functools.partial(neurosat_forward, iterations=ITERATIONS))
    out = fwd(params, x, adj, pmat, mask, pool_mat)     # [num_graphs]
    jax.block_until_ready(out)
    assert out.shape == (2,) and bool(jnp.all(jnp.isfinite(out)))
    print("KERNEL_OK")
</pallas_src>

<mosaic_0001>
module attributes {stable_mosaic.version = 11 : i64} {
  func.func @_neurosat_kernel(%arg0: i32, %arg1: memref<32x2xbf16, #tpu.memory_space<vmem>>, %arg2: memref<32x32xbf16, #tpu.memory_space<vmem>>, %arg3: memref<32x32xbf16, #tpu.memory_space<vmem>>, %arg4: memref<32x1xf32, #tpu.memory_space<vmem>>, %arg5: memref<2x32xf32, #tpu.memory_space<vmem>>, %arg6: memref<2x32xbf16, #tpu.memory_space<vmem>>, %arg7: memref<1x32xf32, #tpu.memory_space<vmem>>, %arg8: memref<2x32xbf16, #tpu.memory_space<vmem>>, %arg9: memref<1x32xf32, #tpu.memory_space<vmem>>, %arg10: memref<32x32xbf16, #tpu.memory_space<vmem>>, %arg11: memref<1x32xf32, #tpu.memory_space<vmem>>, %arg12: memref<32x32xbf16, #tpu.memory_space<vmem>>, %arg13: memref<1x32xf32, #tpu.memory_space<vmem>>, %arg14: memref<32x32xbf16, #tpu.memory_space<vmem>>, %arg15: memref<1x32xf32, #tpu.memory_space<vmem>>, %arg16: memref<32x32xbf16, #tpu.memory_space<vmem>>, %arg17: memref<1x32xf32, #tpu.memory_space<vmem>>, %arg18: memref<32x32xbf16, #tpu.memory_space<vmem>>, %arg19: memref<1x32xf32, #tpu.memory_space<vmem>>, %arg20: memref<32x32xbf16, #tpu.memory_space<vmem>>, %arg21: memref<1x32xf32, #tpu.memory_space<vmem>>, %arg22: memref<4x32x32xbf16, #tpu.memory_space<vmem>>, %arg23: memref<4x32x32xbf16, #tpu.memory_space<vmem>>, %arg24: memref<4x32x32xbf16, #tpu.memory_space<vmem>>, %arg25: memref<4x1x32xf32, #tpu.memory_space<vmem>>, %arg26: memref<4x32x32xbf16, #tpu.memory_space<vmem>>, %arg27: memref<4x32x32xbf16, #tpu.memory_space<vmem>>, %arg28: memref<4x1x32xf32, #tpu.memory_space<vmem>>, %arg29: memref<1x32xf32, #tpu.memory_space<vmem>>, %arg30: memref<1x32xf32, #tpu.memory_space<vmem>>, %arg31: memref<1x32xf32, #tpu.memory_space<vmem>>, %arg32: memref<1x32xf32, #tpu.memory_space<vmem>>, %arg33: memref<32x32xbf16, #tpu.memory_space<vmem>>, %arg34: memref<1x32xf32, #tpu.memory_space<vmem>>, %arg35: memref<32x32xbf16, #tpu.memory_space<vmem>>, %arg36: memref<1x32xf32, #tpu.memory_space<vmem>>, %arg37: memref<32x1xbf16, #tpu.memory_space<vmem>>, %arg38: memref<1x1xf32, #tpu.memory_space<vmem>>, %arg39: memref<2x1xf32, #tpu.memory_space<vmem>>) attributes {dimension_semantics = [#tpu.dimension_semantics<arbitrary>], iteration_bounds = array<i64: 1>, scalar_prefetch = 0 : i64, scratch_operands = 0 : i64, tpu.core_type = #tpu.core_type<tc>, window_params = [{pipeline_mode = #tpu.pipeline_mode<synchronous>, transform_indices = @transform_0, window_bounds = array<i64: 32, 2>}, {pipeline_mode = #tpu.pipeline_mode<synchronous>, transform_indices = @transform_1, window_bounds = array<i64: 32, 32>}, {pipeline_mode = #tpu.pipeline_mode<synchronous>, transform_indices = @transform_2, window_bounds = array<i64: 32, 32>}, {pipeline_mode = #tpu.pipeline_mode<synchronous>, transform_indices = @transform_3, window_bounds = array<i64: 32, 1>}, {pipeline_mode = #tpu.pipeline_mode<synchronous>, transform_indices = @transform_4, window_bounds = array<i64: 2, 32>}, {pipeline_mode = #tpu.pipeline_mode<synchronous>, transform_indices = @transform_5, window_bounds = array<i64: 2, 32>}, {pipeline_mode = #tpu.pipeline_mode<synchronous>, transform_indices = @transform_6, window_bounds = array<i64: 1, 32>}, {pipeline_mode = #tpu.pipeline_mode<synchronous>, transform_indices = @transform_7, window_bounds = array<i64: 2, 32>}, {pipeline_mode = #tpu.pipeline_mode<synchronous>, transform_indices = @transform_8, window_bounds = array<i64: 1, 32>}, {pipeline_mode = #tpu.pipeline_mode<synchronous>, transform_indices = @transform_9, window_bounds = array<i64: 32, 32>}, {pipeline_mode = #tpu.pipeline_mode<synchronous>, transform_indices = @transform_10, window_bounds = array<i64: 1, 32>}, {pipeline_mode = #tpu.pipeline_mode<synchronous>, transform_indices = @transform_11, window_bounds = array<i64: 32, 32>}, {pipeline_mode = #tpu.pipeline_mode<synchronous>, transform_indices = @transform_12, window_bounds = array<i64: 1, 32>}, {pipeline_mode = #tpu.pipeline_mode<synchronous>, transform_indices = @transform_13, window_bounds = array<i64: 32, 32>}, {pipeline_mode = #tpu.pipeline_mode<synchronous>, transform_indices = @transform_14, window_bounds = array<i64: 1, 32>}, {pipeline_mode = #tpu.pipeline_mode<synchronous>, transform_indices = @transform_15, window_bounds = array<i64: 32, 32>}, {pipeline_mode = #tpu.pipeline_mode<synchronous>, transform_indices = @transform_16, window_bounds = array<i64: 1, 32>}, {pipeline_mode = #tpu.pipeline_mode<synchronous>, transform_indices = @transform_17, window_bounds = array<i64: 32, 32>}, {pipeline_mode = #tpu.pipeline_mode<synchronous>, transform_indices = @transform_18, window_bounds = array<i64: 1, 32>}, {pipeline_mode = #tpu.pipeline_mode<synchronous>, transform_indices = @transform_19, window_bounds = array<i64: 32, 32>}, {pipeline_mode = #tpu.pipeline_mode<synchronous>, transform_indices = @transform_20, window_bounds = array<i64: 1, 32>}, {pipeline_mode = #tpu.pipeline_mode<synchronous>, transform_indices = @transform_21, window_bounds = array<i64: 4, 32, 32>}, {pipeline_mode = #tpu.pipeline_mode<synchronous>, transform_indices = @transform_22, window_bounds = array<i64: 4, 32, 32>}, {pipeline_mode = #tpu.pipeline_mode<synchronous>, transform_indices = @transform_23, window_bounds = array<i64: 4, 32, 32>}, {pipeline_mode = #tpu.pipeline_mode<synchronous>, transform_indices = @transform_24, window_bounds = array<i64: 4, 1, 32>}, {pipeline_mode = #tpu.pipeline_mode<synchronous>, transform_indices = @transform_25, window_bounds = array<i64: 4, 32, 32>}, {pipeline_mode = #tpu.pipeline_mode<synchronous>, transform_indices = @transform_26, window_bounds = array<i64: 4, 32, 32>}, {pipeline_mode = #tpu.pipeline_mode<synchronous>, transform_indices = @transform_27, window_bounds = array<i64: 4, 1, 32>}, {pipeline_mode = #tpu.pipeline_mode<synchronous>, transform_indices = @transform_28, window_bounds = array<i64: 1, 32>}, {pipeline_mode = #tpu.pipeline_mode<synchronous>, transform_indices = @transform_29, window_bounds = array<i64: 1, 32>}, {pipeline_mode = #tpu.pipeline_mode<synchronous>, transform_indices = @transform_30, window_bounds = array<i64: 1, 32>}, {pipeline_mode = #tpu.pipeline_mode<synchronous>, transform_indices = @transform_31, window_bounds = array<i64: 1, 32>}, {pipeline_mode = #tpu.pipeline_mode<synchronous>, transform_indices = @transform_32, window_bounds = array<i64: 32, 32>}, {pipeline_mode = #tpu.pipeline_mode<synchronous>, transform_indices = @transform_33, window_bounds = array<i64: 1, 32>}, {pipeline_mode = #tpu.pipeline_mode<synchronous>, transform_indices = @transform_34, window_bounds = array<i64: 32, 32>}, {pipeline_mode = #tpu.pipeline_mode<synchronous>, transform_indices = @transform_35, window_bounds = array<i64: 1, 32>}, {pipeline_mode = #tpu.pipeline_mode<synchronous>, transform_indices = @transform_36, window_bounds = array<i64: 32, 1>}, {pipeline_mode = #tpu.pipeline_mode<synchronous>, transform_indices = @transform_37, window_bounds = array<i64: 1, 1>}, {pipeline_mode = #tpu.pipeline_mode<synchronous>, transform_indices = @transform_38, window_bounds = array<i64: 2, 1>}]} {
    %c0 = arith.constant 0 : index
    %c0_0 = arith.constant 0 : index
    %0 = vector.load %arg4[%c0, %c0_0] : memref<32x1xf32, #tpu.memory_space<vmem>>, vector<32x1xf32>
    %cst = arith.constant 1.000000e+00 : f32
    %1 = vector.broadcast %cst : f32 to vector<32x1xf32>
    %2 = arith.subf %1, %0 : vector<32x1xf32>
    %c0_1 = arith.constant 0 : index
    %c0_2 = arith.constant 0 : index
    %3 = vector.load %arg1[%c0_1, %c0_2] : memref<32x2xbf16, #tpu.memory_space<vmem>>, vector<32x2xbf16>
    %c0_3 = arith.constant 0 : index
    %c0_4 = arith.constant 0 : index
    %4 = vector.load %arg6[%c0_3, %c0_4] : memref<2x32xbf16, #tpu.memory_space<vmem>>, vector<2x32xbf16>
    %cst_5 = arith.constant dense<0.000000e+00> : vector<32x32xf32>
    %5 = tpu.matmul %3, %4, %cst_5 {dimension_numbers = #tpu.dot_dimension_numbers<[1], [0], [0], [1], [0, 0, 1, 1], [], []>} : vector<32x2xbf16>, vector<2x32xbf16>, vector<32x32xf32> -> vector<32x32xf32>
    %c0_6 = arith.constant 0 : index
    %c0_7 = arith.constant 0 : index
    %6 = vector.load %arg7[%c0_6, %c0_7] : memref<1x32xf32, #tpu.memory_space<vmem>>, vector<1x32xf32>
    %7 = vector.broadcast %6 : vector<1x32xf32> to vector<32x32xf32>
    %8 = arith.addf %5, %7 : vector<32x32xf32>
    %9 = vector.broadcast %2 : vector<32x1xf32> to vector<32x32xf32>
    %10 = arith.mulf %8, %9 : vector<32x32xf32>
    %c0_8 = arith.constant 0 : index
    %c0_9 = arith.constant 0 : index
    %11 = vector.load %arg8[%c0_8, %c0_9] : memref<2x32xbf16, #tpu.memory_space<vmem>>, vector<2x32xbf16>
    %cst_10 = arith.constant dense<0.000000e+00> : vector<32x32xf32>
    %12 = tpu.matmul %3, %11, %cst_10 {dimension_numbers = #tpu.dot_dimension_numbers<[1], [0], [0], [1], [0, 0, 1, 1], [], []>} : vector<32x2xbf16>, vector<2x32xbf16>, vector<32x32xf32> -> vector<32x32xf32>
    %c0_11 = arith.constant 0 : index
    %c0_12 = arith.constant 0 : index
    %13 = vector.load %arg9[%c0_11, %c0_12] : memref<1x32xf32, #tpu.memory_space<vmem>>, vector<1x32xf32>
    %14 = vector.broadcast %13 : vector<1x32xf32> to vector<32x32xf32>
    %15 = arith.addf %12, %14 : vector<32x32xf32>
    %16 = vector.broadcast %0 : vector<32x1xf32> to vector<32x32xf32>
    %17 = arith.mulf %15, %16 : vector<32x32xf32>
    %18 = arith.addf %10, %17 : vector<32x32xf32>
    %cst_13 = arith.constant 0.000000e+00 : f32
    %19 = vector.broadcast %cst_13 : f32 to vector<32x32xf32>
    %c0_i32 = arith.constant 0 : i32
    %c3_i32 = arith.constant 3 : i32
    %20 = arith.addi %c0_i32, %c3_i32 : i32
    %c1_i32 = arith.constant 1 : i32
    %21:5 = scf.for %arg40 = %c0_i32 to %20 step %c1_i32 iter_args(%arg41 = %18, %arg42 = %19, %arg43 = %19, %arg44 = %19, %arg45 = %19) -> (vector<32x32xf32>, vector<32x32xf32>, vector<32x32xf32>, vector<32x32xf32>, vector<32x32xf32>)  : i32 {
      %45 = arith.truncf %arg41 : vector<32x32xf32> to vector<32x32xbf16>
      %c0_34 = arith.constant 0 : index
      %c0_35 = arith.constant 0 : index
      %46 = vector.load %arg10[%c0_34, %c0_35] : memref<32x32xbf16, #tpu.memory_space<vmem>>, vector<32x32xbf16>
      %cst_36 = arith.constant dense<0.000000e+00> : vector<32x32xf32>
      %47 = tpu.matmul %45, %46, %cst_36 {dimension_numbers = #tpu.dot_dimension_numbers<[1], [0], [0], [1], [0, 0, 1, 1], [], []>} : vector<32x32xbf16>, vector<32x32xbf16>, vector<32x32xf32> -> vector<32x32xf32>
      %c0_37 = arith.constant 0 : index
      %c0_38 = arith.constant 0 : index
      %48 = vector.load %arg11[%c0_37, %c0_38] : memref<1x32xf32, #tpu.memory_space<vmem>>, vector<1x32xf32>
      %49 = vector.broadcast %48 : vector<1x32xf32> to vector<32x32xf32>
      %50 = arith.addf %47, %49 : vector<32x32xf32>
      %51 = arith.truncf %50 : vector<32x32xf32> to vector<32x32xbf16>
      %c0_39 = arith.constant 0 : index
      %c0_40 = arith.constant 0 : index
      %52 = vector.load %arg12[%c0_39, %c0_40] : memref<32x32xbf16, #tpu.memory_space<vmem>>, vector<32x32xbf16>
      %cst_41 = arith.constant dense<0.000000e+00> : vector<32x32xf32>
      %53 = tpu.matmul %51, %52, %cst_41 {dimension_numbers = #tpu.dot_dimension_numbers<[1], [0], [0], [1], [0, 0, 1, 1], [], []>} : vector<32x32xbf16>, vector<32x32xbf16>, vector<32x32xf32> -> vector<32x32xf32>
      %c0_42 = arith.constant 0 : index
      %c0_43 = arith.constant 0 : index
      %54 = vector.load %arg13[%c0_42, %c0_43] : memref<1x32xf32, #tpu.memory_space<vmem>>, vector<1x32xf32>
      %55 = vector.broadcast %54 : vector<1x32xf32> to vector<32x32xf32>
      %56 = arith.addf %53, %55 : vector<32x32xf32>
      %57 = arith.truncf %56 : vector<32x32xf32> to vector<32x32xbf16>
      %c0_44 = arith.constant 0 : index
      %c0_45 = arith.constant 0 : index
      %58 = vector.load %arg14[%c0_44, %c0_45] : memref<32x32xbf16, #tpu.memory_space<vmem>>, vector<32x32xbf16>
      %cst_46 = arith.constant dense<0.000000e+00> : vector<32x32xf32>
      %59 = tpu.matmul %57, %58, %cst_46 {dimension_numbers = #tpu.dot_dimension_numbers<[1], [0], [0], [1], [0, 0, 1, 1], [], []>} : vector<32x32xbf16>, vector<32x32xbf16>, vector<32x32xf32> -> vector<32x32xf32>
      %c0_47 = arith.constant 0 : index
      %c0_48 = arith.constant 0 : index
      %60 = vector.load %arg15[%c0_47, %c0_48] : memref<1x32xf32, #tpu.memory_space<vmem>>, vector<1x32xf32>
      %61 = vector.broadcast %60 : vector<1x32xf32> to vector<32x32xf32>
      %62 = arith.addf %59, %61 : vector<32x32xf32>
      %c0_49 = arith.constant 0 : index
      %c0_50 = arith.constant 0 : index
      %63 = vector.load %arg2[%c0_49, %c0_50] : memref<32x32xbf16, #tpu.memory_space<vmem>>, vector<32x32xbf16>
      %64 = arith.truncf %62 : vector<32x32xf32> to vector<32x32xbf16>
      %cst_51 = arith.constant dense<0.000000e+00> : vector<32x32xf32>
      %65 = tpu.matmul %63, %64, %cst_51 {dimension_numbers = #tpu.dot_dimension_numbers<[1], [0], [0], [1], [0, 0, 1, 1], [], []>} : vector<32x32xbf16>, vector<32x32xbf16>, vector<32x32xf32> -> vector<32x32xf32>
      %66 = arith.truncf %65 : vector<32x32xf32> to vector<32x32xbf16>
      %67 = arith.truncf %arg44 : vector<32x32xf32> to vector<32x32xbf16>
      %c0_52 = arith.constant 0 : index
      %c0_53 = arith.constant 0 : index
      %c0_54 = arith.constant 0 : index
      %68 = vector.load %arg28[%c0_52, %c0_53, %c0_54] : memref<4x1x32xf32, #tpu.memory_space<vmem>>, vector<1x1x32xf32>
      %69 = vector.shape_cast %68 : vector<1x1x32xf32> to vector<1x32xf32>
      %c0_55 = arith.constant 0 : index
      %c0_56 = arith.constant 0 : index
      %c0_57 = arith.constant 0 : index
      %70 = vector.load %arg26[%c0_55, %c0_56, %c0_57] : memref<4x32x32xbf16, #tpu.memory_space<vmem>>, vector<1x32x32xbf16>
      %71 = vector.shape_cast %70 : vector<1x32x32xbf16> to vector<32x32xbf16>
      %cst_58 = arith.constant dense<0.000000e+00> : vector<32x32xf32>
      %72 = tpu.matmul %66, %71, %cst_58 {dimension_numbers = #tpu.dot_dimension_numbers<[1], [0], [0], [1], [0, 0, 1, 1], [], []>} : vector<32x32xbf16>, vector<32x32xbf16>, vector<32x32xf32> -> vector<32x32xf32>
      %73 = vector.broadcast %69 : vector<1x32xf32> to vector<32x32xf32>
      %74 = arith.addf %73, %72 : vector<32x32xf32>
      %c0_59 = arith.constant 0 : index
      %c0_60 = arith.constant 0 : index
      %c0_61 = arith.constant 0 : index
      %75 = vector.load %arg27[%c0_59, %c0_60, %c0_61] : memref<4x32x32xbf16, #tpu.memory_space<vmem>>, vector<1x32x32xbf16>
      %76 = vector.shape_cast %75 : vector<1x32x32xbf16> to vector<32x32xbf16>
      %cst_62 = arith.constant dense<0.000000e+00> : vector<32x32xf32>
      %77 = tpu.matmul %67, %76, %cst_62 {dimension_numbers = #tpu.dot_dimension_numbers<[1], [0], [0], [1], [0, 0, 1, 1], [], []>} : vector<32x32xbf16>, vector<32x32xbf16>, vector<32x32xf32> -> vector<32x32xf32>
      %78 = arith.addf %74, %77 : vector<32x32xf32>
      %c1 = arith.constant 1 : index
      %c0_63 = arith.constant 0 : index
      %c0_64 = arith.constant 0 : index
      %79 = vector.load %arg28[%c1, %c0_63, %c0_64] : memref<4x1x32xf32, #tpu.memory_space<vmem>>, vector<1x1x32xf32>
      %80 = vector.shape_cast %79 : vector<1x1x32xf32> to vector<1x32xf32>
      %c1_65 = arith.constant 1 : index
      %c0_66 = arith.constant 0 : index
      %c0_67 = arith.constant 0 : index
      %81 = vector.load %arg26[%c1_65, %c0_66, %c0_67] : memref<4x32x32xbf16, #tpu.memory_space<vmem>>, vector<1x32x32xbf16>
      %82 = vector.shape_cast %81 : vector<1x32x32xbf16> to vector<32x32xbf16>
      %cst_68 = arith.constant dense<0.000000e+00> : vector<32x32xf32>
      %83 = tpu.matmul %66, %82, %cst_68 {dimension_numbers = #tpu.dot_dimension_numbers<[1], [0], [0], [1], [0, 0, 1, 1], [], []>} : vector<32x32xbf16>, vector<32x32xbf16>, vector<32x32xf32> -> vector<32x32xf32>
      %84 = vector.broadcast %80 : vector<1x32xf32> to vector<32x32xf32>
      %85 = arith.addf %84, %83 : vector<32x32xf32>
      %c1_69 = arith.constant 1 : index
      %c0_70 = arith.constant 0 : index
      %c0_71 = arith.constant 0 : index
      %86 = vector.load %arg27[%c1_69, %c0_70, %c0_71] : memref<4x32x32xbf16, #tpu.memory_space<vmem>>, vector<1x32x32xbf16>
      %87 = vector.shape_cast %86 : vector<1x32x32xbf16> to vector<32x32xbf16>
      %cst_72 = arith.constant dense<0.000000e+00> : vector<32x32xf32>
      %88 = tpu.matmul %67, %87, %cst_72 {dimension_numbers = #tpu.dot_dimension_numbers<[1], [0], [0], [1], [0, 0, 1, 1], [], []>} : vector<32x32xbf16>, vector<32x32xbf16>, vector<32x32xf32> -> vector<32x32xf32>
      %89 = arith.addf %85, %88 : vector<32x32xf32>
      %c2 = arith.constant 2 : index
      %c0_73 = arith.constant 0 : index
      %c0_74 = arith.constant 0 : index
      %90 = vector.load %arg28[%c2, %c0_73, %c0_74] : memref<4x1x32xf32, #tpu.memory_space<vmem>>, vector<1x1x32xf32>
      %91 = vector.shape_cast %90 : vector<1x1x32xf32> to vector<1x32xf32>
      %c2_75 = arith.constant 2 : index
      %c0_76 = arith.constant 0 : index
      %c0_77 = arith.constant 0 : index
      %92 = vector.load %arg26[%c2_75, %c0_76, %c0_77] : memref<4x32x32xbf16, #tpu.memory_space<vmem>>, vector<1x32x32xbf16>
      %93 = vector.shape_cast %92 : vector<1x32x32xbf16> to vector<32x32xbf16>
      %cst_78 = arith.constant dense<0.000000e+00> : vector<32x32xf32>
      %94 = tpu.matmul %66, %93, %cst_78 {dimension_numbers = #tpu.dot_dimension_numbers<[1], [0], [0], [1], [0, 0, 1, 1], [], []>} : vector<32x32xbf16>, vector<32x32xbf16>, vector<32x32xf32> -> vector<32x32xf32>
      %95 = vector.broadcast %91 : vector<1x32xf32> to vector<32x32xf32>
      %96 = arith.addf %95, %94 : vector<32x32xf32>
      %c2_79 = arith.constant 2 : index
      %c0_80 = arith.constant 0 : index
      %c0_81 = arith.constant 0 : index
      %97 = vector.load %arg27[%c2_79, %c0_80, %c0_81] : memref<4x32x32xbf16, #tpu.memory_space<vmem>>, vector<1x32x32xbf16>
      %98 = vector.shape_cast %97 : vector<1x32x32xbf16> to vector<32x32xbf16>
      %cst_82 = arith.constant dense<0.000000e+00> : vector<32x32xf32>
      %99 = tpu.matmul %67, %98, %cst_82 {dimension_numbers = #tpu.dot_dimension_numbers<[1], [0], [0], [1], [0, 0, 1, 1], [], []>} : vector<32x32xbf16>, vector<32x32xbf16>, vector<32x32xf32> -> vector<32x32xf32>
      %100 = arith.addf %96, %99 : vector<32x32xf32>
      %c3 = arith.constant 3 : index
      %c0_83 = arith.constant 0 : index
      %c0_84 = arith.constant 0 : index
      %101 = vector.load %arg28[%c3, %c0_83, %c0_84] : memref<4x1x32xf32, #tpu.memory_space<vmem>>, vector<1x1x32xf32>
      %102 = vector.shape_cast %101 : vector<1x1x32xf32> to vector<1x32xf32>
      %c3_85 = arith.constant 3 : index
      %c0_86 = arith.constant 0 : index
      %c0_87 = arith.constant 0 : index
      %103 = vector.load %arg26[%c3_85, %c0_86, %c0_87] : memref<4x32x32xbf16, #tpu.memory_space<vmem>>, vector<1x32x32xbf16>
      %104 = vector.shape_cast %103 : vector<1x32x32xbf16> to vector<32x32xbf16>
      %cst_88 = arith.constant dense<0.000000e+00> : vector<32x32xf32>
      %105 = tpu.matmul %66, %104, %cst_88 {dimension_numbers = #tpu.dot_dimension_numbers<[1], [0], [0], [1], [0, 0, 1, 1], [], []>} : vector<32x32xbf16>, vector<32x32xbf16>, vector<32x32xf32> -> vector<32x32xf32>
      %106 = vector.broadcast %102 : vector<1x32xf32> to vector<32x32xf32>
      %107 = arith.addf %106, %105 : vector<32x32xf32>
      %c3_89 = arith.constant 3 : index
      %c0_90 = arith.constant 0 : index
      %c0_91 = arith.constant 0 : index
      %108 = vector.load %arg27[%c3_89, %c0_90, %c0_91] : memref<4x32x32xbf16, #tpu.memory_space<vmem>>, vector<1x32x32xbf16>
      %109 = vector.shape_cast %108 : vector<1x32x32xbf16> to vector<32x32xbf16>
      %cst_92 = arith.constant dense<0.000000e+00> : vector<32x32xf32>
      %110 = tpu.matmul %67, %109, %cst_92 {dimension_numbers = #tpu.dot_dimension_numbers<[1], [0], [0], [1], [0, 0, 1, 1], [], []>} : vector<32x32xbf16>, vector<32x32xbf16>, vector<32x32xf32> -> vector<32x32xf32>
      %111 = arith.addf %107, %110 : vector<32x32xf32>
      %112 = arith.negf %78 : vector<32x32xf32>
      %113 = math.exp %112 : vector<32x32xf32>
      %cst_93 = arith.constant 1.000000e+00 : f32
      %114 = vector.broadcast %cst_93 : f32 to vector<32x32xf32>
      %115 = arith.addf %114, %113 : vector<32x32xf32>
      %116 = arith.divf %114, %115 : vector<32x32xf32>
      %117 = arith.negf %89 : vector<32x32xf32>
      %118 = math.exp %117 : vector<32x32xf32>
      %cst_94 = arith.constant 1.000000e+00 : f32
      %119 = vector.broadcast %cst_94 : f32 to vector<32x32xf32>
      %120 = arith.addf %119, %118 : vector<32x32xf32>
      %121 = arith.divf %119, %120 : vector<32x32xf32>
      %122 = math.tanh %100 : vector<32x32xf32>
      %123 = arith.negf %111 : vector<32x32xf32>
      %124 = math.exp %123 : vector<32x32xf32>
      %cst_95 = arith.constant 1.000000e+00 : f32
      %125 = vector.broadcast %cst_95 : f32 to vector<32x32xf32>
      %126 = arith.addf %125, %124 : vector<32x32xf32>
      %127 = arith.divf %125, %126 : vector<32x32xf32>
      %128 = arith.mulf %121, %arg45 : vector<32x32xf32>
      %129 = arith.mulf %116, %122 : vector<32x32xf32>
      %130 = arith.addf %128, %129 : vector<32x32xf32>
      %131 = math.tanh %130 : vector<32x32xf32>
      %132 = arith.mulf %127, %131 : vector<32x32xf32>
      %cst_96 = arith.constant dense<0.000000e+00> : vector<32xf32>
      %133 = vector.multi_reduction <add>, %132, %cst_96 [1] : vector<32x32xf32> to vector<32xf32>
      %134 = vector.shape_cast %133 : vector<32xf32> to vector<32x1xf32>
      %cst_97 = arith.constant 3.200000e+01 : f32
      %135 = vector.broadcast %cst_97 : f32 to vector<32x1xf32>
      %136 = arith.divf %134, %135 : vector<32x1xf32>
      %137 = vector.broadcast %136 : vector<32x1xf32> to vector<32x32xf32>
      %138 = arith.subf %132, %137 : vector<32x32xf32>
      %139 = arith.mulf %138, %138 : vector<32x32xf32>
      %cst_98 = arith.constant dense<0.000000e+00> : vector<32xf32>
      %140 = vector.multi_reduction <add>, %139, %cst_98 [1] : vector<32x32xf32> to vector<32xf32>
      %141 = vector.shape_cast %140 : vector<32xf32> to vector<32x1xf32>
      %cst_99 = arith.constant 3.200000e+01 : f32
      %142 = vector.broadcast %cst_99 : f32 to vector<32x1xf32>
      %143 = arith.divf %141, %142 : vector<32x1xf32>
      %144 = vector.broadcast %136 : vector<32x1xf32> to vector<32x32xf32>
      %145 = arith.subf %132, %144 : vector<32x32xf32>
      %cst_100 = arith.constant 9.99999974E-6 : f32
      %146 = vector.broadcast %cst_100 : f32 to vector<32x1xf32>
      %147 = arith.addf %143, %146 : vector<32x1xf32>
      %148 = math.rsqrt %147 : vector<32x1xf32>
      %149 = vector.broadcast %148 : vector<32x1xf32> to vector<32x32xf32>
      %150 = arith.mulf %145, %149 : vector<32x32xf32>
      %c0_101 = arith.constant 0 : index
      %c0_102 = arith.constant 0 : index
      %151 = vector.load %arg31[%c0_101, %c0_102] : memref<1x32xf32, #tpu.memory_space<vmem>>, vector<1x32xf32>
      %152 = vector.broadcast %151 : vector<1x32xf32> to vector<32x32xf32>
      %153 = arith.mulf %150, %152 : vector<32x32xf32>
      %c0_103 = arith.constant 0 : index
      %c0_104 = arith.constant 0 : index
      %154 = vector.load %arg32[%c0_103, %c0_104] : memref<1x32xf32, #tpu.memory_space<vmem>>, vector<1x32xf32>
      %155 = vector.broadcast %154 : vector<1x32xf32> to vector<32x32xf32>
      %156 = arith.addf %153, %155 : vector<32x32xf32>
      %157 = vector.broadcast %2 : vector<32x1xf32> to vector<32x32xf32>
      %158 = arith.mulf %arg41, %157 : vector<32x32xf32>
      %159 = vector.broadcast %0 : vector<32x1xf32> to vector<32x32xf32>
      %160 = arith.mulf %156, %159 : vector<32x32xf32>
      %161 = arith.addf %158, %160 : vector<32x32xf32>
      %162 = arith.truncf %161 : vector<32x32xf32> to vector<32x32xbf16>
      %c0_105 = arith.constant 0 : index
      %c0_106 = arith.constant 0 : index
      %163 = vector.load %arg16[%c0_105, %c0_106] : memref<32x32xbf16, #tpu.memory_space<vmem>>, vector<32x32xbf16>
      %cst_107 = arith.constant dense<0.000000e+00> : vector<32x32xf32>
      %164 = tpu.matmul %162, %163, %cst_107 {dimension_numbers = #tpu.dot_dimension_numbers<[1], [0], [0], [1], [0, 0, 1, 1], [], []>} : vector<32x32xbf16>, vector<32x32xbf16>, vector<32x32xf32> -> vector<32x32xf32>
      %c0_108 = arith.constant 0 : index
      %c0_109 = arith.constant 0 : index
      %165 = vector.load %arg17[%c0_108, %c0_109] : memref<1x32xf32, #tpu.memory_space<vmem>>, vector<1x32xf32>
      %166 = vector.broadcast %165 : vector<1x32xf32> to vector<32x32xf32>
      %167 = arith.addf %164, %166 : vector<32x32xf32>
      %168 = arith.truncf %167 : vector<32x32xf32> to vector<32x32xbf16>
      %c0_110 = arith.constant 0 : index
      %c0_111 = arith.constant 0 : index
      %169 = vector.load %arg18[%c0_110, %c0_111] : memref<32x32xbf16, #tpu.memory_space<vmem>>, vector<32x32xbf16>
      %cst_112 = arith.constant dense<0.000000e+00> : vector<32x32xf32>
      %170 = tpu.matmul %168, %169, %cst_112 {dimension_numbers = #tpu.dot_dimension_numbers<[1], [0], [0], [1], [0, 0, 1, 1], [], []>} : vector<32x32xbf16>, vector<32x32xbf16>, vector<32x32xf32> -> vector<32x32xf32>
      %c0_113 = arith.constant 0 : index
      %c0_114 = arith.constant 0 : index
      %171 = vector.load %arg19[%c0_113, %c0_114] : memref<1x32xf32, #tpu.memory_space<vmem>>, vector<1x32xf32>
      %172 = vector.broadcast %171 : vector<1x32xf32> to vector<32x32xf32>
      %173 = arith.addf %170, %172 : vector<32x32xf32>
      %174 = arith.truncf %173 : vector<32x32xf32> to vector<32x32xbf16>
      %c0_115 = arith.constant 0 : index
      %c0_116 = arith.constant 0 : index
      %175 = vector.load %arg20[%c0_115, %c0_116] : memref<32x32xbf16, #tpu.memory_space<vmem>>, vector<32x32xbf16>
      %cst_117 = arith.constant dense<0.000000e+00> : vector<32x32xf32>
      %176 = tpu.matmul %174, %175, %cst_117 {dimension_numbers = #tpu.dot_dimension_numbers<[1], [0], [0], [1], [0, 0, 1, 1], [], []>} : vector<32x32xbf16>, vector<32x32xbf16>, vector<32x32xf32> -> vector<32x32xf32>
      %c0_118 = arith.constant 0 : index
      %c0_119 = arith.constant 0 : index
      %177 = vector.load %arg21[%c0_118, %c0_119] : memref<1x32xf32, #tpu.memory_space<vmem>>, vector<1x32xf32>
      %178 = vector.broadcast %177 : vector<1x32xf32> to vector<32x32xf32>
      %179 = arith.addf %176, %178 : vector<32x32xf32>
      %c0_120 = arith.constant 0 : index
      %c0_121 = arith.constant 0 : index
      %180 = vector.load %arg2[%c0_120, %c0_121] : memref<32x32xbf16, #tpu.memory_space<vmem>>, vector<32x32xbf16>
      %181 = arith.truncf %179 : vector<32x32xf32> to vector<32x32xbf16>
      %cst_122 = arith.constant dense<0.000000e+00> : vector<32x32xf32>
      %182 = tpu.matmul %180, %181, %cst_122 {dimension_numbers = #tpu.dot_dimension_numbers<[1], [0], [0], [1], [0, 0, 1, 1], [], []>} : vector<32x32xbf16>, vector<32x32xbf16>, vector<32x32xf32> -> vector<32x32xf32>
      %c0_123 = arith.constant 0 : index
      %c0_124 = arith.constant 0 : index
      %183 = vector.load %arg3[%c0_123, %c0_124] : memref<32x32xbf16, #tpu.memory_space<vmem>>, vector<32x32xbf16>
      %184 = arith.truncf %arg41 : vector<32x32xf32> to vector<32x32xbf16>
      %cst_125 = arith.constant dense<0.000000e+00> : vector<32x32xf32>
      %185 = tpu.matmul %183, %184, %cst_125 {dimension_numbers = #tpu.dot_dimension_numbers<[1], [0], [0], [1], [0, 0, 1, 1], [], []>} : vector<32x32xbf16>, vector<32x32xbf16>, vector<32x32xf32> -> vector<32x32xf32>
      %186 = arith.truncf %185 : vector<32x32xf32> to vector<32x32xbf16>
      %187 = arith.truncf %182 : vector<32x32xf32> to vector<32x32xbf16>
      %188 = arith.truncf %arg42 : vector<32x32xf32> to vector<32x32xbf16>
      %c0_126 = arith.constant 0 : index
      %c0_127 = arith.constant 0 : index
      %c0_128 = arith.constant 0 : index
      %189 = vector.load %arg25[%c0_126, %c0_127, %c0_128] : memref<4x1x32xf32, #tpu.memory_space<vmem>>, vector<1x1x32xf32>
      %190 = vector.shape_cast %189 : vector<1x1x32xf32> to vector<1x32xf32>
      %c0_129 = arith.constant 0 : index
      %c0_130 = arith.constant 0 : index
      %c0_131 = arith.constant 0 : index
      %191 = vector.load %arg22[%c0_129, %c0_130, %c0_131] : memref<4x32x32xbf16, #tpu.memory_space<vmem>>, vector<1x32x32xbf16>
      %192 = vector.shape_cast %191 : vector<1x32x32xbf16> to vector<32x32xbf16>
      %cst_132 = arith.constant dense<0.000000e+00> : vector<32x32xf32>
      %193 = tpu.matmul %186, %192, %cst_132 {dimension_numbers = #tpu.dot_dimension_numbers<[1], [0], [0], [1], [0, 0, 1, 1], [], []>} : vector<32x32xbf16>, vector<32x32xbf16>, vector<32x32xf32> -> vector<32x32xf32>
      %194 = vector.broadcast %190 : vector<1x32xf32> to vector<32x32xf32>
      %195 = arith.addf %194, %193 : vector<32x32xf32>
      %c0_133 = arith.constant 0 : index
      %c0_134 = arith.constant 0 : index
      %c0_135 = arith.constant 0 : index
      %196 = vector.load %arg23[%c0_133, %c0_134, %c0_135] : memref<4x32x32xbf16, #tpu.memory_space<vmem>>, vector<1x32x32xbf16>
      %197 = vector.shape_cast %196 : vector<1x32x32xbf16> to vector<32x32xbf16>
      %cst_136 = arith.constant dense<0.000000e+00> : vector<32x32xf32>
      %198 = tpu.matmul %187, %197, %cst_136 {dimension_numbers = #tpu.dot_dimension_numbers<[1], [0], [0], [1], [0, 0, 1, 1], [], []>} : vector<32x32xbf16>, vector<32x32xbf16>, vector<32x32xf32> -> vector<32x32xf32>
      %199 = arith.addf %195, %198 : vector<32x32xf32>
      %c0_137 = arith.constant 0 : index
      %c0_138 = arith.constant 0 : index
      %c0_139 = arith.constant 0 : index
      %200 = vector.load %arg24[%c0_137, %c0_138, %c0_139] : memref<4x32x32xbf16, #tpu.memory_space<vmem>>, vector<1x32x32xbf16>
      %201 = vector.shape_cast %200 : vector<1x32x32xbf16> to vector<32x32xbf16>
      %cst_140 = arith.constant dense<0.000000e+00> : vector<32x32xf32>
      %202 = tpu.matmul %188, %201, %cst_140 {dimension_numbers = #tpu.dot_dimension_numbers<[1], [0], [0], [1], [0, 0, 1, 1], [], []>} : vector<32x32xbf16>, vector<32x32xbf16>, vector<32x32xf32> -> vector<32x32xf32>
      %203 = arith.addf %199, %202 : vector<32x32xf32>
      %c1_141 = arith.constant 1 : index
      %c0_142 = arith.constant 0 : index
      %c0_143 = arith.constant 0 : index
      %204 = vector.load %arg25[%c1_141, %c0_142, %c0_143] : memref<4x1x32xf32, #tpu.memory_space<vmem>>, vector<1x1x32xf32>
      %205 = vector.shape_cast %204 : vector<1x1x32xf32> to vector<1x32xf32>
      %c1_144 = arith.constant 1 : index
      %c0_145 = arith.constant 0 : index
      %c0_146 = arith.constant 0 : index
      %206 = vector.load %arg22[%c1_144, %c0_145, %c0_146] : memref<4x32x32xbf16, #tpu.memory_space<vmem>>, vector<1x32x32xbf16>
      %207 = vector.shape_cast %206 : vector<1x32x32xbf16> to vector<32x32xbf16>
      %cst_147 = arith.constant dense<0.000000e+00> : vector<32x32xf32>
      %208 = tpu.matmul %186, %207, %cst_147 {dimension_numbers = #tpu.dot_dimension_numbers<[1], [0], [0], [1], [0, 0, 1, 1], [], []>} : vector<32x32xbf16>, vector<32x32xbf16>, vector<32x32xf32> -> vector<32x32xf32>
      %209 = vector.broadcast %205 : vector<1x32xf32> to vector<32x32xf32>
      %210 = arith.addf %209, %208 : vector<32x32xf32>
      %c1_148 = arith.constant 1 : index
      %c0_149 = arith.constant 0 : index
      %c0_150 = arith.constant 0 : index
      %211 = vector.load %arg23[%c1_148, %c0_149, %c0_150] : memref<4x32x32xbf16, #tpu.memory_space<vmem>>, vector<1x32x32xbf16>
      %212 = vector.shape_cast %211 : vector<1x32x32xbf16> to vector<32x32xbf16>
      %cst_151 = arith.constant dense<0.000000e+00> : vector<32x32xf32>
      %213 = tpu.matmul %187, %212, %cst_151 {dimension_numbers = #tpu.dot_dimension_numbers<[1], [0], [0], [1], [0, 0, 1, 1], [], []>} : vector<32x32xbf16>, vector<32x32xbf16>, vector<32x32xf32> -> vector<32x32xf32>
      %214 = arith.addf %210, %213 : vector<32x32xf32>
      %c1_152 = arith.constant 1 : index
      %c0_153 = arith.constant 0 : index
      %c0_154 = arith.constant 0 : index
      %215 = vector.load %arg24[%c1_152, %c0_153, %c0_154] : memref<4x32x32xbf16, #tpu.memory_space<vmem>>, vector<1x32x32xbf16>
      %216 = vector.shape_cast %215 : vector<1x32x32xbf16> to vector<32x32xbf16>
      %cst_155 = arith.constant dense<0.000000e+00> : vector<32x32xf32>
      %217 = tpu.matmul %188, %216, %cst_155 {dimension_numbers = #tpu.dot_dimension_numbers<[1], [0], [0], [1], [0, 0, 1, 1], [], []>} : vector<32x32xbf16>, vector<32x32xbf16>, vector<32x32xf32> -> vector<32x32xf32>
      %218 = arith.addf %214, %217 : vector<32x32xf32>
      %c2_156 = arith.constant 2 : index
      %c0_157 = arith.constant 0 : index
      %c0_158 = arith.constant 0 : index
      %219 = vector.load %arg25[%c2_156, %c0_157, %c0_158] : memref<4x1x32xf32, #tpu.memory_space<vmem>>, vector<1x1x32xf32>
      %220 = vector.shape_cast %219 : vector<1x1x32xf32> to vector<1x32xf32>
      %c2_159 = arith.constant 2 : index
      %c0_160 = arith.constant 0 : index
      %c0_161 = arith.constant 0 : index
      %221 = vector.load %arg22[%c2_159, %c0_160, %c0_161] : memref<4x32x32xbf16, #tpu.memory_space<vmem>>, vector<1x32x32xbf16>
      %222 = vector.shape_cast %221 : vector<1x32x32xbf16> to vector<32x32xbf16>
      %cst_162 = arith.constant dense<0.000000e+00> : vector<32x32xf32>
      %223 = tpu.matmul %186, %222, %cst_162 {dimension_numbers = #tpu.dot_dimension_numbers<[1], [0], [0], [1], [0, 0, 1, 1], [], []>} : vector<32x32xbf16>, vector<32x32xbf16>, vector<32x32xf32> -> vector<32x32xf32>
      %224 = vector.broadcast %220 : vector<1x32xf32> to vector<32x32xf32>
      %225 = arith.addf %224, %223 : vector<32x32xf32>
      %c2_163 = arith.constant 2 : index
      %c0_164 = arith.constant 0 : index
      %c0_165 = arith.constant 0 : index
      %226 = vector.load %arg23[%c2_163, %c0_164, %c0_165] : memref<4x32x32xbf16, #tpu.memory_space<vmem>>, vector<1x32x32xbf16>
      %227 = vector.shape_cast %226 : vector<1x32x32xbf16> to vector<32x32xbf16>
      %cst_166 = arith.constant dense<0.000000e+00> : vector<32x32xf32>
      %228 = tpu.matmul %187, %227, %cst_166 {dimension_numbers = #tpu.dot_dimension_numbers<[1], [0], [0], [1], [0, 0, 1, 1], [], []>} : vector<32x32xbf16>, vector<32x32xbf16>, vector<32x32xf32> -> vector<32x32xf32>
      %229 = arith.addf %225, %228 : vector<32x32xf32>
      %c2_167 = arith.constant 2 : index
      %c0_168 = arith.constant 0 : index
      %c0_169 = arith.constant 0 : index
      %230 = vector.load %arg24[%c2_167, %c0_168, %c0_169] : memref<4x32x32xbf16, #tpu.memory_space<vmem>>, vector<1x32x32xbf16>
      %231 = vector.shape_cast %230 : vector<1x32x32xbf16> to vector<32x32xbf16>
      %cst_170 = arith.constant dense<0.000000e+00> : vector<32x32xf32>
      %232 = tpu.matmul %188, %231, %cst_170 {dimension_numbers = #tpu.dot_dimension_numbers<[1], [0], [0], [1], [0, 0, 1, 1], [], []>} : vector<32x32xbf16>, vector<32x32xbf16>, vector<32x32xf32> -> vector<32x32xf32>
      %233 = arith.addf %229, %232 : vector<32x32xf32>
      %c3_171 = arith.constant 3 : index
      %c0_172 = arith.constant 0 : index
      %c0_173 = arith.constant 0 : index
      %234 = vector.load %arg25[%c3_171, %c0_172, %c0_173] : memref<4x1x32xf32, #tpu.memory_space<vmem>>, vector<1x1x32xf32>
      %235 = vector.shape_cast %234 : vector<1x1x32xf32> to vector<1x32xf32>
      %c3_174 = arith.constant 3 : index
      %c0_175 = arith.constant 0 : index
      %c0_176 = arith.constant 0 : index
      %236 = vector.load %arg22[%c3_174, %c0_175, %c0_176] : memref<4x32x32xbf16, #tpu.memory_space<vmem>>, vector<1x32x32xbf16>
      %237 = vector.shape_cast %236 : vector<1x32x32xbf16> to vector<32x32xbf16>
      %cst_177 = arith.constant dense<0.000000e+00> : vector<32x32xf32>
      %238 = tpu.matmul %186, %237, %cst_177 {dimension_numbers = #tpu.dot_dimension_numbers<[1], [0], [0], [1], [0, 0, 1, 1], [], []>} : vector<32x32xbf16>, vector<32x32xbf16>, vector<32x32xf32> -> vector<32x32xf32>
      %239 = vector.broadcast %235 : vector<1x32xf32> to vector<32x32xf32>
      %240 = arith.addf %239, %238 : vector<32x32xf32>
      %c3_178 = arith.constant 3 : index
      %c0_179 = arith.constant 0 : index
      %c0_180 = arith.constant 0 : index
      %241 = vector.load %arg23[%c3_178, %c0_179, %c0_180] : memref<4x32x32xbf16, #tpu.memory_space<vmem>>, vector<1x32x32xbf16>
      %242 = vector.shape_cast %241 : vector<1x32x32xbf16> to vector<32x32xbf16>
      %cst_181 = arith.constant dense<0.000000e+00> : vector<32x32xf32>
      %243 = tpu.matmul %187, %242, %cst_181 {dimension_numbers = #tpu.dot_dimension_numbers<[1], [0], [0], [1], [0, 0, 1, 1], [], []>} : vector<32x32xbf16>, vector<32x32xbf16>, vector<32x32xf32> -> vector<32x32xf32>
      %244 = arith.addf %240, %243 : vector<32x32xf32>
      %c3_182 = arith.constant 3 : index
      %c0_183 = arith.constant 0 : index
      %c0_184 = arith.constant 0 : index
      %245 = vector.load %arg24[%c3_182, %c0_183, %c0_184] : memref<4x32x32xbf16, #tpu.memory_space<vmem>>, vector<1x32x32xbf16>
      %246 = vector.shape_cast %245 : vector<1x32x32xbf16> to vector<32x32xbf16>
      %cst_185 = arith.constant dense<0.000000e+00> : vector<32x32xf32>
      %247 = tpu.matmul %188, %246, %cst_185 {dimension_numbers = #tpu.dot_dimension_numbers<[1], [0], [0], [1], [0, 0, 1, 1], [], []>} : vector<32x32xbf16>, vector<32x32xbf16>, vector<32x32xf32> -> vector<32x32xf32>
      %248 = arith.addf %244, %247 : vector<32x32xf32>
      %249 = arith.negf %203 : vector<32x32xf32>
      %250 = math.exp %249 : vector<32x32xf32>
      %cst_186 = arith.constant 1.000000e+00 : f32
      %251 = vector.broadcast %cst_186 : f32 to vector<32x32xf32>
      %252 = arith.addf %251, %250 : vector<32x32xf32>
      %253 = arith.divf %251, %252 : vector<32x32xf32>
      %254 = arith.negf %218 : vector<32x32xf32>
      %255 = math.exp %254 : vector<32x32xf32>
      %cst_187 = arith.constant 1.000000e+00 : f32
      %256 = vector.broadcast %cst_187 : f32 to vector<32x32xf32>
      %257 = arith.addf %256, %255 : vector<32x32xf32>
      %258 = arith.divf %256, %257 : vector<32x32xf32>
      %259 = math.tanh %233 : vector<32x32xf32>
      %260 = arith.negf %248 : vector<32x32xf32>
      %261 = math.exp %260 : vector<32x32xf32>
      %cst_188 = arith.constant 1.000000e+00 : f32
      %262 = vector.broadcast %cst_188 : f32 to vector<32x32xf32>
      %263 = arith.addf %262, %261 : vector<32x32xf32>
      %264 = arith.divf %262, %263 : vector<32x32xf32>
      %265 = arith.mulf %258, %arg43 : vector<32x32xf32>
      %266 = arith.mulf %253, %259 : vector<32x32xf32>
      %267 = arith.addf %265, %266 : vector<32x32xf32>
      %268 = math.tanh %267 : vector<32x32xf32>
      %269 = arith.mulf %264, %268 : vector<32x32xf32>
      %cst_189 = arith.constant dense<0.000000e+00> : vector<32xf32>
      %270 = vector.multi_reduction <add>, %269, %cst_189 [1] : vector<32x32xf32> to vector<32xf32>
      %271 = vector.shape_cast %270 : vector<32xf32> to vector<32x1xf32>
      %cst_190 = arith.constant 3.200000e+01 : f32
      %272 = vector.broadcast %cst_190 : f32 to vector<32x1xf32>
      %273 = arith.divf %271, %272 : vector<32x1xf32>
      %274 = vector.broadcast %273 : vector<32x1xf32> to vector<32x32xf32>
      %275 = arith.subf %269, %274 : vector<32x32xf32>
      %276 = arith.mulf %275, %275 : vector<32x32xf32>
      %cst_191 = arith.constant dense<0.000000e+00> : vector<32xf32>
      %277 = vector.multi_reduction <add>, %276, %cst_191 [1] : vector<32x32xf32> to vector<32xf32>
      %278 = vector.shape_cast %277 : vector<32xf32> to vector<32x1xf32>
      %cst_192 = arith.constant 3.200000e+01 : f32
      %279 = vector.broadcast %cst_192 : f32 to vector<32x1xf32>
      %280 = arith.divf %278, %279 : vector<32x1xf32>
      %281 = vector.broadcast %273 : vector<32x1xf32> to vector<32x32xf32>
      %282 = arith.subf %269, %281 : vector<32x32xf32>
      %cst_193 = arith.constant 9.99999974E-6 : f32
      %283 = vector.broadcast %cst_193 : f32 to vector<32x1xf32>
      %284 = arith.addf %280, %283 : vector<32x1xf32>
      %285 = math.rsqrt %284 : vector<32x1xf32>
      %286 = vector.broadcast %285 : vector<32x1xf32> to vector<32x32xf32>
      %287 = arith.mulf %282, %286 : vector<32x32xf32>
      %c0_194 = arith.constant 0 : index
      %c0_195 = arith.constant 0 : index
      %288 = vector.load %arg29[%c0_194, %c0_195] : memref<1x32xf32, #tpu.memory_space<vmem>>, vector<1x32xf32>
      %289 = vector.broadcast %288 : vector<1x32xf32> to vector<32x32xf32>
      %290 = arith.mulf %287, %289 : vector<32x32xf32>
      %c0_196 = arith.constant 0 : index
      %c0_197 = arith.constant 0 : index
      %291 = vector.load %arg30[%c0_196, %c0_197] : memref<1x32xf32, #tpu.memory_space<vmem>>, vector<1x32xf32>
      %292 = vector.broadcast %291 : vector<1x32xf32> to vector<32x32xf32>
      %293 = arith.addf %290, %292 : vector<32x32xf32>
      %294 = vector.broadcast %2 : vector<32x1xf32> to vector<32x32xf32>
      %295 = arith.mulf %293, %294 : vector<32x32xf32>
      %296 = vector.broadcast %0 : vector<32x1xf32> to vector<32x32xf32>
      %297 = arith.mulf %156, %296 : vector<32x32xf32>
      %298 = arith.addf %295, %297 : vector<32x32xf32>
      scf.yield %298, %293, %267, %156, %130 : vector<32x32xf32>, vector<32x32xf32>, vector<32x32xf32>, vector<32x32xf32>, vector<32x32xf32>
    }
    %22 = vector.broadcast %2 : vector<32x1xf32> to vector<32x32xf32>
    %23 = arith.mulf %21#0, %22 : vector<32x32xf32>
    %24 = arith.truncf %23 : vector<32x32xf32> to vector<32x32xbf16>
    %c0_14 = arith.constant 0 : index
    %c0_15 = arith.constant 0 : index
    %25 = vector.load %arg33[%c0_14, %c0_15] : memref<32x32xbf16, #tpu.memory_space<vmem>>, vector<32x32xbf16>
    %cst_16 = arith.constant dense<0.000000e+00> : vector<32x32xf32>
    %26 = tpu.matmul %24, %25, %cst_16 {dimension_numbers = #tpu.dot_dimension_numbers<[1], [0], [0], [1], [0, 0, 1, 1], [], []>} : vector<32x32xbf16>, vector<32x32xbf16>, vector<32x32xf32> -> vector<32x32xf32>
    %c0_17 = arith.constant 0 : index
    %c0_18 = arith.constant 0 : index
    %27 = vector.load %arg34[%c0_17, %c0_18] : memref<1x32xf32, #tpu.memory_space<vmem>>, vector<1x32xf32>
    %28 = vector.broadcast %27 : vector<1x32xf32> to vector<32x32xf32>
    %29 = arith.addf %26, %28 : vector<32x32xf32>
    %30 = arith.truncf %29 : vector<32x32xf32> to vector<32x32xbf16>
    %c0_19 = arith.constant 0 : index
    %c0_20 = arith.constant 0 : index
    %31 = vector.load %arg35[%c0_19, %c0_20] : memref<32x32xbf16, #tpu.memory_space<vmem>>, vector<32x32xbf16>
    %cst_21 = arith.constant dense<0.000000e+00> : vector<32x32xf32>
    %32 = tpu.matmul %30, %31, %cst_21 {dimension_numbers = #tpu.dot_dimension_numbers<[1], [0], [0], [1], [0, 0, 1, 1], [], []>} : vector<32x32xbf16>, vector<32x32xbf16>, vector<32x32xf32> -> vector<32x32xf32>
    %c0_22 = arith.constant 0 : index
    %c0_23 = arith.constant 0 : index
    %33 = vector.load %arg36[%c0_22, %c0_23] : memref<1x32xf32, #tpu.memory_space<vmem>>, vector<1x32xf32>
    %34 = vector.broadcast %33 : vector<1x32xf32> to vector<32x32xf32>
    %35 = arith.addf %32, %34 : vector<32x32xf32>
    %36 = arith.truncf %35 : vector<32x32xf32> to vector<32x32xbf16>
    %c0_24 = arith.constant 0 : index
    %c0_25 = arith.constant 0 : index
    %37 = vector.load %arg37[%c0_24, %c0_25] : memref<32x1xbf16, #tpu.memory_space<vmem>>, vector<32x1xbf16>
    %cst_26 = arith.constant dense<0.000000e+00> : vector<32x1xf32>
    %38 = tpu.matmul %36, %37, %cst_26 {dimension_numbers = #tpu.dot_dimension_numbers<[1], [0], [0], [1], [0, 0, 1, 1], [], []>} : vector<32x32xbf16>, vector<32x1xbf16>, vector<32x1xf32> -> vector<32x1xf32>
    %c0_27 = arith.constant 0 : index
    %c0_28 = arith.constant 0 : index
    %39 = vector.load %arg38[%c0_27, %c0_28] : memref<1x1xf32, #tpu.memory_space<vmem>>, vector<1x1xf32>
    %40 = vector.broadcast %39 : vector<1x1xf32> to vector<32x1xf32>
    %41 = arith.addf %38, %40 : vector<32x1xf32>
    %c0_29 = arith.constant 0 : index
    %c0_30 = arith.constant 0 : index
    %42 = vector.load %arg5[%c0_29, %c0_30] : memref<2x32xf32, #tpu.memory_space<vmem>>, vector<2x32xf32>
    %cst_31 = arith.constant dense<0.000000e+00> : vector<2x1xf32>
    %43 = tpu.matmul %42, %41, %cst_31 {dimension_numbers = #tpu.dot_dimension_numbers<[1], [0], [0], [1], [0, 0, 1, 1], [], []>} : vector<2x32xf32>, vector<32x1xf32>, vector<2x1xf32> -> vector<2x1xf32>
    %c0_32 = arith.constant 0 : index
    %c0_33 = arith.constant 0 : index
    %44 = vector.load %arg39[%c0_32, %c0_33] : memref<2x1xf32, #tpu.memory_space<vmem>>, vector<2x1xf32>
    tpu.vector_store %arg39[%c0_32, %c0_33], %43 {strides = array<i32>} : memref<2x1xf32, #tpu.memory_space<vmem>>, vector<2x1xf32>,
    return
  }
  func.func @transform_0(%arg0: i32) -> (i32, i32) {
    %c0_i32 = arith.constant 0 : i32
    %c0_i32_0 = arith.constant 0 : i32
    %c0_i32_1 = arith.constant 0 : i32
    return %c0_i32, %c0_i32_0 : i32, i32
  }
  func.func @transform_1(%arg0: i32) -> (i32, i32) {
    %c0_i32 = arith.constant 0 : i32
    %c0_i32_0 = arith.constant 0 : i32
    %c0_i32_1 = arith.constant 0 : i32
    return %c0_i32, %c0_i32_0 : i32, i32
  }
  func.func @transform_2(%arg0: i32) -> (i32, i32) {
    %c0_i32 = arith.constant 0 : i32
    %c0_i32_0 = arith.constant 0 : i32
    %c0_i32_1 = arith.constant 0 : i32
    return %c0_i32, %c0_i32_0 : i32, i32
  }
  func.func @transform_3(%arg0: i32) -> (i32, i32) {
    %c0_i32 = arith.constant 0 : i32
    %c0_i32_0 = arith.constant 0 : i32
    %c0_i32_1 = arith.constant 0 : i32
    return %c0_i32, %c0_i32_0 : i32, i32
  }
  func.func @transform_4(%arg0: i32) -> (i32, i32) {
    %c0_i32 = arith.constant 0 : i32
    %c0_i32_0 = arith.constant 0 : i32
    %c0_i32_1 = arith.constant 0 : i32
    return %c0_i32, %c0_i32_0 : i32, i32
  }
  func.func @transform_5(%arg0: i32) -> (i32, i32) {
    %c0_i32 = arith.constant 0 : i32
    %c0_i32_0 = arith.constant 0 : i32
    %c0_i32_1 = arith.constant 0 : i32
    return %c0_i32, %c0_i32_0 : i32, i32
  }
  func.func @transform_6(%arg0: i32) -> (i32, i32) {
    %c0_i32 = arith.constant 0 : i32
    %c0_i32_0 = arith.constant 0 : i32
    %c0_i32_1 = arith.constant 0 : i32
    return %c0_i32, %c0_i32_0 : i32, i32
  }
  func.func @transform_7(%arg0: i32) -> (i32, i32) {
    %c0_i32 = arith.constant 0 : i32
    %c0_i32_0 = arith.constant 0 : i32
    %c0_i32_1 = arith.constant 0 : i32
    return %c0_i32, %c0_i32_0 : i32, i32
  }
  func.func @transform_8(%arg0: i32) -> (i32, i32) {
    %c0_i32 = arith.constant 0 : i32
    %c0_i32_0 = arith.constant 0 : i32
    %c0_i32_1 = arith.constant 0 : i32
    return %c0_i32, %c0_i32_0 : i32, i32
  }
  func.func @transform_9(%arg0: i32) -> (i32, i32) {
    %c0_i32 = arith.constant 0 : i32
    %c0_i32_0 = arith.constant 0 : i32
    %c0_i32_1 = arith.constant 0 : i32
    return %c0_i32, %c0_i32_0 : i32, i32
  }
  func.func @transform_10(%arg0: i32) -> (i32, i32) {
    %c0_i32 = arith.constant 0 : i32
    %c0_i32_0 = arith.constant 0 : i32
    %c0_i32_1 = arith.constant 0 : i32
    return %c0_i32, %c0_i32_0 : i32, i32
  }
  func.func @transform_11(%arg0: i32) -> (i32, i32) {
    %c0_i32 = arith.constant 0 : i32
    %c0_i32_0 = arith.constant 0 : i32
    %c0_i32_1 = arith.constant 0 : i32
    return %c0_i32, %c0_i32_0 : i32, i32
  }
  func.func @transform_12(%arg0: i32) -> (i32, i32) {
    %c0_i32 = arith.constant 0 : i32
    %c0_i32_0 = arith.constant 0 : i32
    %c0_i32_1 = arith.constant 0 : i32
    return %c0_i32, %c0_i32_0 : i32, i32
  }
  func.func @transform_13(%arg0: i32) -> (i32, i32) {
    %c0_i32 = arith.constant 0 : i32
    %c0_i32_0 = arith.constant 0 : i32
    %c0_i32_1 = arith.constant 0 : i32
    return %c0_i32, %c0_i32_0 : i32, i32
  }
  func.func @transform_14(%arg0: i32) -> (i32, i32) {
    %c0_i32 = arith.constant 0 : i32
    %c0_i32_0 = arith.constant 0 : i32
    %c0_i32_1 = arith.constant 0 : i32
    return %c0_i32, %c0_i32_0 : i32, i32
  }
  func.func @transform_15(%arg0: i32) -> (i32, i32) {
    %c0_i32 = arith.constant 0 : i32
    %c0_i32_0 = arith.constant 0 : i32
    %c0_i32_1 = arith.constant 0 : i32
    return %c0_i32, %c0_i32_0 : i32, i32
  }
  func.func @transform_16(%arg0: i32) -> (i32, i32) {
    %c0_i32 = arith.constant 0 : i32
    %c0_i32_0 = arith.constant 0 : i32
    %c0_i32_1 = arith.constant 0 : i32
    return %c0_i32, %c0_i32_0 : i32, i32
  }
  func.func @transform_17(%arg0: i32) -> (i32, i32) {
    %c0_i32 = arith.constant 0 : i32
    %c0_i32_0 = arith.constant 0 : i32
    %c0_i32_1 = arith.constant 0 : i32
    return %c0_i32, %c0_i32_0 : i32, i32
  }
  func.func @transform_18(%arg0: i32) -> (i32, i32) {
    %c0_i32 = arith.constant 0 : i32
    %c0_i32_0 = arith.constant 0 : i32
    %c0_i32_1 = arith.constant 0 : i32
    return %c0_i32, %c0_i32_0 : i32, i32
  }
  func.func @transform_19(%arg0: i32) -> (i32, i32) {
    %c0_i32 = arith.constant 0 : i32
    %c0_i32_0 = arith.constant 0 : i32
    %c0_i32_1 = arith.constant 0 : i32
    return %c0_i32, %c0_i32_0 : i32, i32
  }
  func.func @transform_20(%arg0: i32) -> (i32, i32) {
    %c0_i32 = arith.constant 0 : i32
    %c0_i32_0 = arith.constant 0 : i32
    %c0_i32_1 = arith.constant 0 : i32
    return %c0_i32, %c0_i32_0 : i32, i32
  }
  func.func @transform_21(%arg0: i32) -> (i32, i32, i32) {
    %c0_i32 = arith.constant 0 : i32
    %c0_i32_0 = arith.constant 0 : i32
    %c0_i32_1 = arith.constant 0 : i32
    %c0_i32_2 = arith.constant 0 : i32
    return %c0_i32, %c0_i32_0, %c0_i32_1 : i32, i32, i32
  }
  func.func @transform_22(%arg0: i32) -> (i32, i32, i32) {
    %c0_i32 = arith.constant 0 : i32
    %c0_i32_0 = arith.constant 0 : i32
    %c0_i32_1 = arith.constant 0 : i32
    %c0_i32_2 = arith.constant 0 : i32
    return %c0_i32, %c0_i32_0, %c0_i32_1 : i32, i32, i32
  }
  func.func @transform_23(%arg0: i32) -> (i32, i32, i32) {
    %c0_i32 = arith.constant 0 : i32
    %c0_i32_0 = arith.constant 0 : i32
    %c0_i32_1 = arith.constant 0 : i32
    %c0_i32_2 = arith.constant 0 : i32
    return %c0_i32, %c0_i32_0, %c0_i32_1 : i32, i32, i32
  }
  func.func @transform_24(%arg0: i32) -> (i32, i32, i32) {
    %c0_i32 = arith.constant 0 : i32
    %c0_i32_0 = arith.constant 0 : i32
    %c0_i32_1 = arith.constant 0 : i32
    %c0_i32_2 = arith.constant 0 : i32
    return %c0_i32, %c0_i32_0, %c0_i32_1 : i32, i32, i32
  }
  func.func @transform_25(%arg0: i32) -> (i32, i32, i32) {
    %c0_i32 = arith.constant 0 : i32
    %c0_i32_0 = arith.constant 0 : i32
    %c0_i32_1 = arith.constant 0 : i32
    %c0_i32_2 = arith.constant 0 : i32
    return %c0_i32, %c0_i32_0, %c0_i32_1 : i32, i32, i32
  }
  func.func @transform_26(%arg0: i32) -> (i32, i32, i32) {
    %c0_i32 = arith.constant 0 : i32
    %c0_i32_0 = arith.constant 0 : i32
    %c0_i32_1 = arith.constant 0 : i32
    %c0_i32_2 = arith.constant 0 : i32
    return %c0_i32, %c0_i32_0, %c0_i32_1 : i32, i32, i32
  }
  func.func @transform_27(%arg0: i32) -> (i32, i32, i32) {
    %c0_i32 = arith.constant 0 : i32
    %c0_i32_0 = arith.constant 0 : i32
    %c0_i32_1 = arith.constant 0 : i32
    %c0_i32_2 = arith.constant 0 : i32
    return %c0_i32, %c0_i32_0, %c0_i32_1 : i32, i32, i32
  }
  func.func @transform_28(%arg0: i32) -> (i32, i32) {
    %c0_i32 = arith.constant 0 : i32
    %c0_i32_0 = arith.constant 0 : i32
    %c0_i32_1 = arith.constant 0 : i32
    return %c0_i32, %c0_i32_0 : i32, i32
  }
  func.func @transform_29(%arg0: i32) -> (i32, i32) {
    %c0_i32 = arith.constant 0 : i32
    %c0_i32_0 = arith.constant 0 : i32
    %c0_i32_1 = arith.constant 0 : i32
    return %c0_i32, %c0_i32_0 : i32, i32
  }
  func.func @transform_30(%arg0: i32) -> (i32, i32) {
    %c0_i32 = arith.constant 0 : i32
    %c0_i32_0 = arith.constant 0 : i32
    %c0_i32_1 = arith.constant 0 : i32
    return %c0_i32, %c0_i32_0 : i32, i32
  }
  func.func @transform_31(%arg0: i32) -> (i32, i32) {
    %c0_i32 = arith.constant 0 : i32
    %c0_i32_0 = arith.constant 0 : i32
    %c0_i32_1 = arith.constant 0 : i32
    return %c0_i32, %c0_i32_0 : i32, i32
  }
  func.func @transform_32(%arg0: i32) -> (i32, i32) {
    %c0_i32 = arith.constant 0 : i32
    %c0_i32_0 = arith.constant 0 : i32
    %c0_i32_1 = arith.constant 0 : i32
    return %c0_i32, %c0_i32_0 : i32, i32
  }
  func.func @transform_33(%arg0: i32) -> (i32, i32) {
    %c0_i32 = arith.constant 0 : i32
    %c0_i32_0 = arith.constant 0 : i32
    %c0_i32_1 = arith.constant 0 : i32
    return %c0_i32, %c0_i32_0 : i32, i32
  }
  func.func @transform_34(%arg0: i32) -> (i32, i32) {
    %c0_i32 = arith.constant 0 : i32
    %c0_i32_0 = arith.constant 0 : i32
    %c0_i32_1 = arith.constant 0 : i32
    return %c0_i32, %c0_i32_0 : i32, i32
  }
  func.func @transform_35(%arg0: i32) -> (i32, i32) {
    %c0_i32 = arith.constant 0 : i32
    %c0_i32_0 = arith.constant 0 : i32
    %c0_i32_1 = arith.constant 0 : i32
    return %c0_i32, %c0_i32_0 : i32, i32
  }
  func.func @transform_36(%arg0: i32) -> (i32, i32) {
    %c0_i32 = arith.constant 0 : i32
    %c0_i32_0 = arith.constant 0 : i32
    %c0_i32_1 = arith.constant 0 : i32
    return %c0_i32, %c0_i32_0 : i32, i32
  }
  func.func @transform_37(%arg0: i32) -> (i32, i32) {
    %c0_i32 = arith.constant 0 : i32
    %c0_i32_0 = arith.constant 0 : i32
    %c0_i32_1 = arith.constant 0 : i32
    return %c0_i32, %c0_i32_0 : i32, i32
  }
  func.func @transform_38(%arg0: i32) -> (i32, i32) {
    %c0_i32 = arith.constant 0 : i32
    %c0_i32_0 = arith.constant 0 : i32
    %c0_i32_1 = arith.constant 0 : i32
    return %c0_i32, %c0_i32_0 : i32, i32
  }
}

</mosaic_0001>

<llo_original>
// kernel: neurosat_forward.1
$region0: #{neurosat_forward.1}
  #allocation0 [shape = 'u32[]', space=smem, size = 0x4, offset = 0x4, fixed_abs, tag = 'smem constant byte address 0x4 - core index']
  #allocation1 [shape = 'u32[72,128]{1,0:T(1,128)}', space=vmem, size = 0x9000, scoped, tag = 'internal scratch']
  #allocation2 [shape = 'f32[1,1]{1,0:T(1,128)S(1)}', space=vmem, size = 0x200, scoped, tag = 'scoped memory for neurosat_forward.1']
  %s0 = inlined_call_operand.smem [shape: u32[39], index: -1, kind: input, shape index: {}]
  %s1 = sld [smem:[%s0]]
  %s2 = scalar_lea.smem %s0, 1
  %s3 = sld [smem:[%s2]]
  %s4 = scalar_lea.smem %s0, 2
  %s5 = sld [smem:[%s4]]
  %s6 = scalar_lea.smem %s0, 3
  %s7 = sld [smem:[%s6]]
  %s8 = scalar_lea.smem %s0, 4
  %s9 = sld [smem:[%s8]]
  %s10 = scalar_lea.smem %s0, 5
  %s11 = sld [smem:[%s10]]
  %s12 = scalar_lea.smem %s0, 6
  %s13 = sld [smem:[%s12]]
  %s14 = scalar_lea.smem %s0, 7
  %s15 = sld [smem:[%s14]]
  %s16 = scalar_lea.smem %s0, 8
  %s17 = sld [smem:[%s16]]
  %s18 = scalar_lea.smem %s0, 9
  %s19 = sld [smem:[%s18]]
  %s20 = scalar_lea.smem %s0, 10
  %s21 = sld [smem:[%s20]]
  %s22 = scalar_lea.smem %s0, 11
  %s23 = sld [smem:[%s22]]
  %s24 = scalar_lea.smem %s0, 12
  %s25 = sld [smem:[%s24]]
  %s26 = scalar_lea.smem %s0, 13
  %s27 = sld [smem:[%s26]]
  %s28 = scalar_lea.smem %s0, 14
  %s29 = sld [smem:[%s28]]
  %s30 = scalar_lea.smem %s0, 15
  %s31 = sld [smem:[%s30]]
  %s32 = scalar_lea.smem %s0, 16
  %s33 = sld [smem:[%s32]]
  %s34 = scalar_lea.smem %s0, 17
  %s35 = sld [smem:[%s34]]
  %s36 = scalar_lea.smem %s0, 18
  %s37 = sld [smem:[%s36]]
  %s38 = scalar_lea.smem %s0, 19
  %s39 = sld [smem:[%s38]]
  %s40 = scalar_lea.smem %s0, 20
  %s41 = sld [smem:[%s40]]
  %s42 = scalar_lea.smem %s0, 21
  %s43 = sld [smem:[%s42]]
  %s44 = scalar_lea.smem %s0, 22
  %s45 = sld [smem:[%s44]]
  %s46 = scalar_lea.smem %s0, 23
  %s47 = sld [smem:[%s46]]
  %s48 = scalar_lea.smem %s0, 24
  %s49 = sld [smem:[%s48]]
  %s50 = scalar_lea.smem %s0, 25
  %s51 = sld [smem:[%s50]]
  %s52 = scalar_lea.smem %s0, 26
  %s53 = sld [smem:[%s52]]
  %s54 = scalar_lea.smem %s0, 27
  %s55 = sld [smem:[%s54]]
  %s56 = scalar_lea.smem %s0, 28
  %s57 = sld [smem:[%s56]]
  %s58 = scalar_lea.smem %s0, 29
  %s59 = sld [smem:[%s58]]
  %s60 = scalar_lea.smem %s0, 30
  %s61 = sld [smem:[%s60]]
  %s62 = scalar_lea.smem %s0, 31
  %s63 = sld [smem:[%s62]]
  %s64 = scalar_lea.smem %s0, 32
  %s65 = sld [smem:[%s64]]
  %s66 = scalar_lea.smem %s0, 33
  %s67 = sld [smem:[%s66]]
  %s68 = scalar_lea.smem %s0, 34
  %s69 = sld [smem:[%s68]]
  %s70 = scalar_lea.smem %s0, 35
  %s71 = sld [smem:[%s70]]
  %s72 = scalar_lea.smem %s0, 36
  %s73 = sld [smem:[%s72]]
  %s74 = scalar_lea.smem %s0, 37
  %s75 = sld [smem:[%s74]]
  %s76 = scalar_lea.smem %s0, 38
  %s77 = sld [smem:[%s76]]
  %s78 = sld [smem:[#allocation0]]
  $region169: #{neurosat_forward.1} parent=0
    _
  %s80 = ssub.s32 1, %s78
  %s81 = scalar_select 0, %s80, %s78
  %v82 = vstv %s75
  %83 = vst [vmem:[#allocation2] sm:$0x1] %v82
  // Predicated region
  $region2: #{neurosat_forward.1} parent=0 // pred_check
    _
  $region3: #{neurosat_forward.1} parent=0 // pred_check_branch
    %85 = sbr.rel (0) target = $region5
  $region4: #{neurosat_forward.1} parent=0 // pred_region
    _
  $region5: #{neurosat_forward.1} parent=0 // pred_fallthru
    _
  // Predicated region
  $region6: #{neurosat_forward.1} parent=0 // pred_check
    _
  $region7: #{neurosat_forward.1} parent=0 // pred_check_branch
    %87 = sbr.rel (0) target = $region9
  $region8: #{neurosat_forward.1} parent=0 // pred_region
    _
  $region9: #{neurosat_forward.1} parent=0 // pred_fallthru
    _
  // Predicated region
  $region10: #{neurosat_forward.1} parent=0 // pred_check
    _
  $region11: #{neurosat_forward.1} parent=0 // pred_check_branch
    %89 = sbr.rel (0) target = $region13
  $region12: #{neurosat_forward.1} parent=0 // pred_region
    _
  $region13: #{neurosat_forward.1} parent=0 // pred_fallthru
    _
  // Predicated region
  $region14: #{neurosat_forward.1} parent=0 // pred_check
    _
  $region15: #{neurosat_forward.1} parent=0 // pred_check_branch
    %91 = sbr.rel (0) target = $region17
  $region16: #{neurosat_forward.1} parent=0 // pred_region
    _
  $region17: #{neurosat_forward.1} parent=0 // pred_fallthru
    _
  // Predicated region
  $region18: #{neurosat_forward.1} parent=0 // pred_check
    _
  $region19: #{neurosat_forward.1} parent=0 // pred_check_branch
    %93 = sbr.rel (0) target = $region21
  $region20: #{neurosat_forward.1} parent=0 // pred_region
    _
  $region21: #{neurosat_forward.1} parent=0 // pred_fallthru
    _
  // Predicated region
  $region22: #{neurosat_forward.1} parent=0 // pred_check
    _
  $region23: #{neurosat_forward.1} parent=0 // pred_check_branch
    %95 = sbr.rel (0) target = $region25
  $region24: #{neurosat_forward.1} parent=0 // pred_region
    _
  $region25: #{neurosat_forward.1} parent=0 // pred_fallthru
    _
  // Predicated region
  $region26: #{neurosat_forward.1} parent=0 // pred_check
    _
  $region27: #{neurosat_forward.1} parent=0 // pred_check_branch
    %97 = sbr.rel (0) target = $region29
  $region28: #{neurosat_forward.1} parent=0 // pred_region
    _
  $region29: #{neurosat_forward.1} parent=0 // pred_fallthru
    _
  // Predicated region
  $region30: #{neurosat_forward.1} parent=0 // pred_check
    _
  $region31: #{neurosat_forward.1} parent=0 // pred_check_branch
    %99 = sbr.rel (0) target = $region33
  $region32: #{neurosat_forward.1} parent=0 // pred_region
    _
  $region33: #{neurosat_forward.1} parent=0 // pred_fallthru
    _
  // Predicated region
  $region34: #{neurosat_forward.1} parent=0 // pred_check
    _
  $region35: #{neurosat_forward.1} parent=0 // pred_check_branch
    %101 = sbr.rel (0) target = $region37
  $region36: #{neurosat_forward.1} parent=0 // pred_region
    _
  $region37: #{neurosat_forward.1} parent=0 // pred_fallthru
    _
  // Predicated region
  $region38: #{neurosat_forward.1} parent=0 // pred_check
    _
  $region39: #{neurosat_forward.1} parent=0 // pred_check_branch
    %103 = sbr.rel (0) target = $region41
  $region40: #{neurosat_forward.1} parent=0 // pred_region
    _
  $region41: #{neurosat_forward.1} parent=0 // pred_fallthru
    _
  // Predicated region
  $region42: #{neurosat_forward.1} parent=0 // pred_check
    _
  $region43: #{neurosat_forward.1} parent=0 // pred_check_branch
    %105 = sbr.rel (0) target = $region45
  $region44: #{neurosat_forward.1} parent=0 // pred_region
    _
  $region45: #{neurosat_forward.1} parent=0 // pred_fallthru
    _
  // Predicated region
  $region46: #{neurosat_forward.1} parent=0 // pred_check
    _
  $region47: #{neurosat_forward.1} parent=0 // pred_check_branch
    %107 = sbr.rel (0) target = $region49
  $region48: #{neurosat_forward.1} parent=0 // pred_region
    _
  $region49: #{neurosat_forward.1} parent=0 // pred_fallthru
    _
  // Predicated region
  $region50: #{neurosat_forward.1} parent=0 // pred_check
    _
  $region51: #{neurosat_forward.1} parent=0 // pred_check_branch
    %109 = sbr.rel (0) target = $region53
  $region52: #{neurosat_forward.1} parent=0 // pred_region
    _
  $region53: #{neurosat_forward.1} parent=0 // pred_fallthru
    _
  // Predicated region
  $region54: #{neurosat_forward.1} parent=0 // pred_check
    _
  $region55: #{neurosat_forward.1} parent=0 // pred_check_branch
    %111 = sbr.rel (0) target = $region57
  $region56: #{neurosat_forward.1} parent=0 // pred_region
    _
  $region57: #{neurosat_forward.1} parent=0 // pred_fallthru
    _
  // Predicated region
  $region58: #{neurosat_forward.1} parent=0 // pred_check
    _
  $region59: #{neurosat_forward.1} parent=0 // pred_check_branch
    %113 = sbr.rel (0) target = $region61
  $region60: #{neurosat_forward.1} parent=0 // pred_region
    _
  $region61: #{neurosat_forward.1} parent=0 // pred_fallthru
    _
  // Predicated region
  $region62: #{neurosat_forward.1} parent=0 // pred_check
    _
  $region63: #{neurosat_forward.1} parent=0 // pred_check_branch
    %115 = sbr.rel (0) target = $region65
  $region64: #{neurosat_forward.1} parent=0 // pred_region
    _
  $region65: #{neurosat_forward.1} parent=0 // pred_fallthru
    _
  // Predicated region
  $region66: #{neurosat_forward.1} parent=0 // pred_check
    _
  $region67: #{neurosat_forward.1} parent=0 // pred_check_branch
    %117 = sbr.rel (0) target = $region69
  $region68: #{neurosat_forward.1} parent=0 // pred_region
    _
  $region69: #{neurosat_forward.1} parent=0 // pred_fallthru
    _
  // Predicated region
  $region70: #{neurosat_forward.1} parent=0 // pred_check
    _
  $region71: #{neurosat_forward.1} parent=0 // pred_check_branch
    %119 = sbr.rel (0) target = $region73
  $region72: #{neurosat_forward.1} parent=0 // pred_region
    _
  $region73: #{neurosat_forward.1} parent=0 // pred_fallthru
    _
  // Predicated region
  $region74: #{neurosat_forward.1} parent=0 // pred_check
    _
  $region75: #{neurosat_forward.1} parent=0 // pred_check_branch
    %121 = sbr.rel (0) target = $region77
  $region76: #{neurosat_forward.1} parent=0 // pred_region
    _
  $region77: #{neurosat_forward.1} parent=0 // pred_fallthru
    _
  // Predicated region
  $region78: #{neurosat_forward.1} parent=0 // pred_check
    _
  $region79: #{neurosat_forward.1} parent=0 // pred_check_branch
    %123 = sbr.rel (0) target = $region81
  $region80: #{neurosat_forward.1} parent=0 // pred_region
    _
  $region81: #{neurosat_forward.1} parent=0 // pred_fallthru
    _
  // Predicated region
  $region82: #{neurosat_forward.1} parent=0 // pred_check
    _
  $region83: #{neurosat_forward.1} parent=0 // pred_check_branch
    %125 = sbr.rel (0) target = $region85
  $region84: #{neurosat_forward.1} parent=0 // pred_region
    _
  $region85: #{neurosat_forward.1} parent=0 // pred_fallthru
    _
  // Predicated region
  $region86: #{neurosat_forward.1} parent=0 // pred_check
    _
  $region87: #{neurosat_forward.1} parent=0 // pred_check_branch
    %127 = sbr.rel (0) target = $region89
  $region88: #{neurosat_forward.1} parent=0 // pred_region
    _
  $region89: #{neurosat_forward.1} parent=0 // pred_fallthru
    _
  // Predicated region
  $region90: #{neurosat_forward.1} parent=0 // pred_check
    _
  $region91: #{neurosat_forward.1} parent=0 // pred_check_branch
    %129 = sbr.rel (0) target = $region93
  $region92: #{neurosat_forward.1} parent=0 // pred_region
    _
  $region93: #{neurosat_forward.1} parent=0 // pred_fallthru
    _
  // Predicated region
  $region94: #{neurosat_forward.1} parent=0 // pred_check
    _
  $region95: #{neurosat_forward.1} parent=0 // pred_check_branch
    %131 = sbr.rel (0) target = $region97
  $region96: #{neurosat_forward.1} parent=0 // pred_region
    _
  $region97: #{neurosat_forward.1} parent=0 // pred_fallthru
    _
  // Predicated region
  $region98: #{neurosat_forward.1} parent=0 // pred_check
    _
  $region99: #{neurosat_forward.1} parent=0 // pred_check_branch
    %133 = sbr.rel (0) target = $region101
  $region100: #{neurosat_forward.1} parent=0 // pred_region
    _
  $region101: #{neurosat_forward.1} parent=0 // pred_fallthru
    _
  // Predicated region
  $region102: #{neurosat_forward.1} parent=0 // pred_check
    _
  $region103: #{neurosat_forward.1} parent=0 // pred_check_branch
    %135 = sbr.rel (0) target = $region105
  $region104: #{neurosat_forward.1} parent=0 // pred_region
    _
  $region105: #{neurosat_forward.1} parent=0 // pred_fallthru
    _
  // Predicated region
  $region106: #{neurosat_forward.1} parent=0 // pred_check
    _
  $region107: #{neurosat_forward.1} parent=0 // pred_check_branch
    %137 = sbr.rel (0) target = $region109
  $region108: #{neurosat_forward.1} parent=0 // pred_region
    _
  $region109: #{neurosat_forward.1} parent=0 // pred_fallthru
    _
  // Predicated region
  $region110: #{neurosat_forward.1} parent=0 // pred_check
    _
  $region111: #{neurosat_forward.1} parent=0 // pred_check_branch
    %139 = sbr.rel (0) target = $region113
  $region112: #{neurosat_forward.1} parent=0 // pred_region
    _
  $region113: #{neurosat_forward.1} parent=0 // pred_fallthru
    _
  // Predicated region
  $region114: #{neurosat_forward.1} parent=0 // pred_check
    _
  $region115: #{neurosat_forward.1} parent=0 // pred_check_branch
    %141 = sbr.rel (0) target = $region117
  $region116: #{neurosat_forward.1} parent=0 // pred_region
    _
  $region117: #{neurosat_forward.1} parent=0 // pred_fallthru
    _
  // Predicated region
  $region118: #{neurosat_forward.1} parent=0 // pred_check
    _
  $region119: #{neurosat_forward.1} parent=0 // pred_check_branch
    %143 = sbr.rel (0) target = $region121
  $region120: #{neurosat_forward.1} parent=0 // pred_region
    _
  $region121: #{neurosat_forward.1} parent=0 // pred_fallthru
    _
  // Predicated region
  $region122: #{neurosat_forward.1} parent=0 // pred_check
    _
  $region123: #{neurosat_forward.1} parent=0 // pred_check_branch
    %145 = sbr.rel (0) target = $region125
  $region124: #{neurosat_forward.1} parent=0 // pred_region
    _
  $region125: #{neurosat_forward.1} parent=0 // pred_fallthru
    _
  // Predicated region
  $region126: #{neurosat_forward.1} parent=0 // pred_check
    _
  $region127: #{neurosat_forward.1} parent=0 // pred_check_branch
    %147 = sbr.rel (0) target = $region129
  $region128: #{neurosat_forward.1} parent=0 // pred_region
    _
  $region129: #{neurosat_forward.1} parent=0 // pred_fallthru
    _
  // Predicated region
  $region130: #{neurosat_forward.1} parent=0 // pred_check
    _
  $region131: #{neurosat_forward.1} parent=0 // pred_check_branch
    %149 = sbr.rel (0) target = $region133
  $region132: #{neurosat_forward.1} parent=0 // pred_region
    _
  $region133: #{neurosat_forward.1} parent=0 // pred_fallthru
    _
  // Predicated region
  $region134: #{neurosat_forward.1} parent=0 // pred_check
    _
  $region135: #{neurosat_forward.1} parent=0 // pred_check_branch
    %151 = sbr.rel (0) target = $region137
  $region136: #{neurosat_forward.1} parent=0 // pred_region
    _
  $region137: #{neurosat_forward.1} parent=0 // pred_fallthru
    _
  // Predicated region
  $region138: #{neurosat_forward.1} parent=0 // pred_check
    _
  $region139: #{neurosat_forward.1} parent=0 // pred_check_branch
    %153 = sbr.rel (0) target = $region141
  $region140: #{neurosat_forward.1} parent=0 // pred_region
    _
  $region141: #{neurosat_forward.1} parent=0 // pred_fallthru
    _
  // Predicated region
  $region142: #{neurosat_forward.1} parent=0 // pred_check
    _
  $region143: #{neurosat_forward.1} parent=0 // pred_check_branch
    %155 = sbr.rel (0) target = $region145
  $region144: #{neurosat_forward.1} parent=0 // pred_region
    _
  $region145: #{neurosat_forward.1} parent=0 // pred_fallthru
    _
  // Predicated region
  $region146: #{neurosat_forward.1} parent=0 // pred_check
    _
  $region147: #{neurosat_forward.1} parent=0 // pred_check_branch
    %157 = sbr.rel (0) target = $region149
  $region148: #{neurosat_forward.1} parent=0 // pred_region
    _
  $region149: #{neurosat_forward.1} parent=0 // pred_fallthru
    _
  // Predicated region
  $region150: #{neurosat_forward.1} parent=0 // pred_check
    _
  $region151: #{neurosat_forward.1} parent=0 // pred_check_branch
    %159 = sbr.rel (0) target = $region153
  $region152: #{neurosat_forward.1} parent=0 // pred_region
    _
  $region153: #{neurosat_forward.1} parent=0 // pred_fallthru
    _
  %v161 = vld [vmem:[%s7] sm:$0xff]
  %v162 = vld [vmem:[%s7 + $0x8] sm:$0xff]
  %v163 = vld [vmem:[%s7 + $0x10] sm:$0xff]
  %v164 = vld [vmem:[%s7 + $0x18] sm:$0xff]
  %v165 = vsub.f32 1.0, %v161
  %v166 = vsub.f32 1.0, %v162
  %v167 = vsub.f32 1.0, %v163
  %v168 = vsub.f32 1.0, %v164
  %v169 = vld [vmem:[%s1] sm:$0xf]
  %v170 = vld [vmem:[%s1 + $0x4] sm:$0xf]
  %v171 = vld [vmem:[%s1 + $0x8] sm:$0xf]
  %v172 = vld [vmem:[%s1 + $0xc] sm:$0xf]
  %v173 = vld [vmem:[%s11] sm:$0x1]
  %v174 = vld [vmem:[%s13] sm:$0x1]
  %v176 = vperm.slane %v174, 0
  %v182 = vunpack.c.l.b16 %v169
  %v183 = vunpack.c.l.b16 %v170
  %v184 = vunpack.c.l.b16 %v171
  %v185 = vunpack.c.l.b16 %v172
  %v186 = vpack.c.b16 %v183, %v182
  %v187 = vpack.c.b16 %v185, %v184
  %vm188 = vcmask 15360
  %v190 = vsel %vm188, %v186, 0
  %v193 = vsel %vm188, %v187, 0
  %vm195 = vcmask 1040384
  %v197 = vsel %vm195, %v173, 0
  %199 = vmatpush.bf16.msra.mxu0 0
  %200 = vmatpush.bf16.msra.mxu0 0
  %201 = vmatpush.bf16.msra.mxu0 0
  %202 = vmatpush.bf16.msra.mxu0 0
  %203 = vmatpush.bf16.msra.mxu0 0
  %204 = vmatpush.bf16.msra.mxu0 0
  %205 = vmatpush.bf16.msra.mxu0 0
  %206 = vmatpush.bf16.msra.mxu0 %v197
  %207 = vmatmul.bf16.gmra.mxu0 %v190
  %v208 = vpop.f32.mrf.mxu0
  %v209 = vadd.f32 %v176, %v208
  %v210 = vpop.f32.mrf.mxu0
  %v211 = vadd.f32 %v176, %v210
  %212 = vmatmul.bf16.gmra.mxu0 %v193
  %v213 = vpop.f32.mrf.mxu0
  %v214 = vadd.f32 %v176, %v213
  %v215 = vpop.f32.mrf.mxu0
  %v216 = vadd.f32 %v176, %v215
  %217 = vdwg.mxu0
  %219 = vset.pattern.permute.xlu0 0
  %220 = vperm.xlu0 %219, %v165
  %v221 = vpop.permute.xlu0 %220
  %224 = vset.pattern.permute.xlu0 0
  %225 = vperm.xlu0 %224, %v166
  %v226 = vpop.permute.xlu0 %225
  %229 = vset.pattern.permute.xlu0 0
  %230 = vperm.xlu0 %229, %v167
  %v231 = vpop.permute.xlu0 %230
  %234 = vset.pattern.permute.xlu0 0
  %235 = vperm.xlu0 %234, %v168
  %v236 = vpop.permute.xlu0 %235
  %v238 = vmul.f32 %v209, %v221
  %v239 = vmul.f32 %v211, %v226
  %v240 = vmul.f32 %v214, %v231
  %v241 = vmul.f32 %v216, %v236
  %v242 = vld [vmem:[%s15] sm:$0x1]
  %v243 = vld [vmem:[%s17] sm:$0x1]
  %v245 = vperm.slane %v243, 0
  %v248 = vsel %vm195, %v242, 0
  %250 = vmatpush.bf16.msra.mxu0 0
  %251 = vmatpush.bf16.msra.mxu0 0
  %252 = vmatpush.bf16.msra.mxu0 0
  %253 = vmatpush.bf16.msra.mxu0 0
  %254 = vmatpush.bf16.msra.mxu0 0
  %255 = vmatpush.bf16.msra.mxu0 0
  %256 = vmatpush.bf16.msra.mxu0 0
  %257 = vmatpush.bf16.msra.mxu0 %v248
  %258 = vmatmul.bf16.gmra.mxu0 %v190
  %v259 = vpop.f32.mrf.mxu0
  %v260 = vadd.f32 %v245, %v259
  %v261 = vpop.f32.mrf.mxu0
  %v262 = vadd.f32 %v245, %v261
  %263 = vmatmul.bf16.gmra.mxu0 %v193
  %v264 = vpop.f32.mrf.mxu0
  %v265 = vadd.f32 %v245, %v264
  %v266 = vpop.f32.mrf.mxu0
  %v267 = vadd.f32 %v245, %v266
  %268 = vdwg.mxu0
  %270 = vset.pattern.permute.xlu0 0
  %271 = vperm.xlu0 %270, %v161
  %v272 = vpop.permute.xlu0 %271
  %275 = vset.pattern.permute.xlu0 0
  %276 = vperm.xlu0 %275, %v162
  %v277 = vpop.permute.xlu0 %276
  %280 = vset.pattern.permute.xlu0 0
  %281 = vperm.xlu0 %280, %v163
  %v282 = vpop.permute.xlu0 %281
  %285 = vset.pattern.permute.xlu0 0
  %286 = vperm.xlu0 %285, %v164
  %v287 = vpop.permute.xlu0 %286
  %v289 = vmul.f32 %v260, %v272
  %v290 = vmul.f32 %v262, %v277
  %v291 = vmul.f32 %v265, %v282
  %v292 = vmul.f32 %v267, %v287
  %v293 = vadd.f32 %v238, %v289
  %v294 = vadd.f32 %v239, %v290
  %v295 = vadd.f32 %v240, %v291
  %v296 = vadd.f32 %v241, %v292
  loop: start=0, step=1, limit=3
  $region154: #{neurosat_forward.1} parent=0 // loop_pre_header
    _
  $region155: #{neurosat_forward.1} parent=0 // loop_header
    %s298 = sphi 0, %s302
    %p299 = scmp.ge.s32.totalorder %s298, 3
    %v303 = vphi %v293, %v2315
    %v304 = vphi %v294, %v2316
    %v305 = vphi %v295, %v2317
    %v306 = vphi %v296, %v2318
    %v307 = vphi 0.0, %v2307
    %v308 = vphi 0.0, %v2308
    %v309 = vphi 0.0, %v2309
    %v310 = vphi 0.0, %v2310
    %v311 = vphi 0.0, %v2195
    %v312 = vphi 0.0, %v2196
    %v313 = vphi 0.0, %v2197
    %v314 = vphi 0.0, %v2198
    %v315 = vphi 0.0, %v1218
    %v316 = vphi 0.0, %v1219
    %v317 = vphi 0.0, %v1220
    %v318 = vphi 0.0, %v1221
    %v319 = vphi 0.0, %v1099
    %v320 = vphi 0.0, %v1100
    %v321 = vphi 0.0, %v1101
    %v322 = vphi 0.0, %v1102
  $region156: #{neurosat_forward.1} parent=0 // loop_header_branch
    %301 = sbr.rel (%p299) target = $region160
  $region157: #{neurosat_forward.1} parent=0 // loop_body
    %v323 = vpack.c.bf16 %v304, %v303
    %v324 = vpack.c.bf16 %v306, %v305
    %v325 = vld [vmem:[%s19] sm:$0xf]
    %v326 = vld [vmem:[%s19 + $0x4] sm:$0xf]
    %v327 = vld [vmem:[%s19 + $0x8] sm:$0xf]
    %v328 = vld [vmem:[%s19 + $0xc] sm:$0xf]
    %v329 = vld [vmem:[%s21] sm:$0x1]
    %v331 = vperm.slane %v329, 0
    %v337 = vunpack.c.l.b16 %v325
    %v338 = vunpack.c.l.b16 %v326
    %v339 = vunpack.c.l.b16 %v327
    %v340 = vunpack.c.l.b16 %v328
    %v341 = vpack.c.b16 %v338, %v337
    %v342 = vpack.c.b16 %v340, %v339
    %vm345 = vcmask 261120
    %v347 = vsel %vm345, %v323, 0
    %v350 = vsel %vm345, %v324, 0
    %352 = vmatpush.bf16.msra.mxu0 0
    %353 = vmatpush.bf16.msra.mxu0 0
    %354 = vmatpush.bf16.msra.mxu0 0
    %355 = vmatpush.bf16.msra.mxu0 0
    %356 = vmatpush.bf16.msra.mxu0 0
    %357 = vmatpush.bf16.msra.mxu0 0
    %358 = vmatpush.bf16.msra.mxu0 %v342
    %359 = vmatpush.bf16.msra.mxu0 %v341
    %360 = vmatmul.bf16.gmra.mxu0 %v347
    %v361 = vpop.f32.mrf.mxu0
    %v362 = vadd.f32 %v331, %v361
    %v363 = vpop.f32.mrf.mxu0
    %v364 = vadd.f32 %v331, %v363
    %365 = vmatmul.bf16.gmra.mxu0 %v350
    %v366 = vpop.f32.mrf.mxu0
    %v367 = vadd.f32 %v331, %v366
    %v368 = vpop.f32.mrf.mxu0
    %v369 = vadd.f32 %v331, %v368
    %370 = vdwg.mxu0
    %v371 = vpack.c.bf16 %v364, %v362
    %v372 = vpack.c.bf16 %v369, %v367
    %v373 = vld [vmem:[%s23] sm:$0xf]
    %v374 = vld [vmem:[%s23 + $0x4] sm:$0xf]
    %v375 = vld [vmem:[%s23 + $0x8] sm:$0xf]
    %v376 = vld [vmem:[%s23 + $0xc] sm:$0xf]
    %v377 = vld [vmem:[%s25] sm:$0x1]
    %v379 = vperm.slane %v377, 0
    %v385 = vunpack.c.l.b16 %v373
    %v386 = vunpack.c.l.b16 %v374
    %v387 = vunpack.c.l.b16 %v375
    %v388 = vunpack.c.l.b16 %v376
    %v389 = vpack.c.b16 %v386, %v385
    %v390 = vpack.c.b16 %v388, %v387
    %v394 = vsel %vm345, %v371, 0
    %v397 = vsel %vm345, %v372, 0
    %399 = vmatpush.bf16.msra.mxu0 0
    %400 = vmatpush.bf16.msra.mxu0 0
    %401 = vmatpush.bf16.msra.mxu0 0
    %402 = vmatpush.bf16.msra.mxu0 0
    %403 = vmatpush.bf16.msra.mxu0 0
    %404 = vmatpush.bf16.msra.mxu0 0
    %405 = vmatpush.bf16.msra.mxu0 %v390
    %406 = vmatpush.bf16.msra.mxu0 %v389
    %407 = vmatmul.bf16.gmra.mxu0 %v394
    %v408 = vpop.f32.mrf.mxu0
    %v409 = vadd.f32 %v379, %v408
    %v410 = vpop.f32.mrf.mxu0
    %v411 = vadd.f32 %v379, %v410
    %412 = vmatmul.bf16.gmra.mxu0 %v397
    %v413 = vpop.f32.mrf.mxu0
    %v414 = vadd.f32 %v379, %v413
    %v415 = vpop.f32.mrf.mxu0
    %v416 = vadd.f32 %v379, %v415
    %417 = vdwg.mxu0
    %v418 = vpack.c.bf16 %v411, %v409
    %v419 = vpack.c.bf16 %v416, %v414
    %v420 = vld [vmem:[%s27] sm:$0xf]
    %v421 = vld [vmem:[%s27 + $0x4] sm:$0xf]
    %v422 = vld [vmem:[%s27 + $0x8] sm:$0xf]
    %v423 = vld [vmem:[%s27 + $0xc] sm:$0xf]
    %v424 = vld [vmem:[%s29] sm:$0x1]
    %v426 = vperm.slane %v424, 0
    %v432 = vunpack.c.l.b16 %v420
    %v433 = vunpack.c.l.b16 %v421
    %v434 = vunpack.c.l.b16 %v422
    %v435 = vunpack.c.l.b16 %v423
    %v436 = vpack.c.b16 %v433, %v432
    %v437 = vpack.c.b16 %v435, %v434
    %v441 = vsel %vm345, %v418, 0
    %v444 = vsel %vm345, %v419, 0
    %446 = vmatpush.bf16.msra.mxu0 0
    %447 = vmatpush.bf16.msra.mxu0 0
    %448 = vmatpush.bf16.msra.mxu0 0
    %449 = vmatpush.bf16.msra.mxu0 0
    %450 = vmatpush.bf16.msra.mxu0 0
    %451 = vmatpush.bf16.msra.mxu0 0
    %452 = vmatpush.bf16.msra.mxu0 %v437
    %453 = vmatpush.bf16.msra.mxu0 %v436
    %454 = vmatmul.bf16.gmra.mxu0 %v441
    %v455 = vpop.f32.mrf.mxu0
    %v456 = vadd.f32 %v426, %v455
    %v457 = vpop.f32.mrf.mxu0
    %v458 = vadd.f32 %v426, %v457
    %459 = vmatmul.bf16.gmra.mxu0 %v444
    %v460 = vpop.f32.mrf.mxu0
    %v461 = vadd.f32 %v426, %v460
    %v462 = vpop.f32.mrf.mxu0
    %v463 = vadd.f32 %v426, %v462
    %464 = vdwg.mxu0
    %v465 = vld [vmem:[%s3] sm:$0xf]
    %v466 = vld [vmem:[%s3 + $0x4] sm:$0xf]
    %v467 = vld [vmem:[%s3 + $0x8] sm:$0xf]
    %v468 = vld [vmem:[%s3 + $0xc] sm:$0xf]
    %v469 = vpack.c.bf16 %v458, %v456
    %v470 = vpack.c.bf16 %v463, %v461
    %v475 = vunpack.c.l.b16 %v465
    %v476 = vunpack.c.l.b16 %v466
    %v477 = vunpack.c.l.b16 %v467
    %v478 = vunpack.c.l.b16 %v468
    %v479 = vpack.c.b16 %v476, %v475
    %v480 = vpack.c.b16 %v478, %v477
    %v482 = vsel %vm345, %v479, 0
    %v485 = vsel %vm345, %v480, 0
    %487 = vmatpush.bf16.msra.mxu0 0
    %488 = vmatpush.bf16.msra.mxu0 0
    %489 = vmatpush.bf16.msra.mxu0 0
    %490 = vmatpush.bf16.msra.mxu0 0
    %491 = vmatpush.bf16.msra.mxu0 0
    %492 = vmatpush.bf16.msra.mxu0 0
    %493 = vmatpush.bf16.msra.mxu0 %v470
    %494 = vmatpush.bf16.msra.mxu0 %v469
    %495 = vmatmul.bf16.gmra.mxu0 %v482
    %v496 = vpop.f32.mrf.mxu0
    %v497 = vadd.f32 0.0, %v496
    %v498 = vpop.f32.mrf.mxu0
    %v499 = vadd.f32 0.0, %v498
    %500 = vmatmul.bf16.gmra.mxu0 %v485
    %v501 = vpop.f32.mrf.mxu0
    %v502 = vadd.f32 0.0, %v501
    %v503 = vpop.f32.mrf.mxu0
    %v504 = vadd.f32 0.0, %v503
    %505 = vdwg.mxu0
    %v506 = vpack.c.bf16 %v499, %v497
    %v507 = vpack.c.bf16 %v504, %v502
    %v508 = vpack.c.bf16 %v316, %v315
    %v509 = vpack.c.bf16 %v318, %v317
    %v510 = vld [vmem:[%s55] sm:$0x1]
    %v511 = vld [vmem:[%s51] sm:$0xf]
    %v512 = vld [vmem:[%s51 + $0x4] sm:$0xf]
    %v513 = vld [vmem:[%s51 + $0x8] sm:$0xf]
    %v514 = vld [vmem:[%s51 + $0xc] sm:$0xf]
    %v519 = vunpack.c.l.b16 %v511
    %v520 = vunpack.c.l.b16 %v512
    %v521 = vunpack.c.l.b16 %v513
    %v522 = vunpack.c.l.b16 %v514
    %v523 = vpack.c.b16 %v520, %v519
    %v524 = vpack.c.b16 %v522, %v521
    %v528 = vsel %vm345, %v506, 0
    %v531 = vsel %vm345, %v507, 0
    %533 = vmatpush.bf16.msra.mxu0 0
    %534 = vmatpush.bf16.msra.mxu0 0
    %535 = vmatpush.bf16.msra.mxu0 0
    %536 = vmatpush.bf16.msra.mxu0 0
    %537 = vmatpush.bf16.msra.mxu0 0
    %538 = vmatpush.bf16.msra.mxu0 0
    %539 = vmatpush.bf16.msra.mxu0 %v524
    %540 = vmatpush.bf16.msra.mxu0 %v523
    %541 = vmatmul.bf16.gmra.mxu0 %v528
    %v542 = vpop.f32.mrf.mxu0
    %v543 = vadd.f32 0.0, %v542
    %v544 = vpop.f32.mrf.mxu0
    %v545 = vadd.f32 0.0, %v544
    %546 = vmatmul.bf16.gmra.mxu0 %v531
    %v547 = vpop.f32.mrf.mxu0
    %v548 = vadd.f32 0.0, %v547
    %v549 = vpop.f32.mrf.mxu0
    %v550 = vadd.f32 0.0, %v549
    %551 = vdwg.mxu0
    %v553 = vperm.slane %v510, 0
    %v555 = vadd.f32 %v553, %v543
    %v556 = vadd.f32 %v553, %v545
    %v557 = vadd.f32 %v553, %v548
    %v558 = vadd.f32 %v553, %v550
    %v559 = vld [vmem:[%s53] sm:$0xf]
    %v560 = vld [vmem:[%s53 + $0x4] sm:$0xf]
    %v561 = vld [vmem:[%s53 + $0x8] sm:$0xf]
    %v562 = vld [vmem:[%s53 + $0xc] sm:$0xf]
    %v567 = vunpack.c.l.b16 %v559
    %v568 = vunpack.c.l.b16 %v560
    %v569 = vunpack.c.l.b16 %v561
    %v570 = vunpack.c.l.b16 %v562
    %v571 = vpack.c.b16 %v568, %v567
    %v572 = vpack.c.b16 %v570, %v569
    %v576 = vsel %vm345, %v508, 0
    %v579 = vsel %vm345, %v509, 0
    %581 = vmatpush.bf16.msra.mxu0 0
    %582 = vmatpush.bf16.msra.mxu0 0
    %583 = vmatpush.bf16.msra.mxu0 0
    %584 = vmatpush.bf16.msra.mxu0 0
    %585 = vmatpush.bf16.msra.mxu0 0
    %586 = vmatpush.bf16.msra.mxu0 0
    %587 = vmatpush.bf16.msra.mxu0 %v572
    %588 = vmatpush.bf16.msra.mxu0 %v571
    %589 = vmatmul.bf16.gmra.mxu0 %v576
    %v590 = vpop.f32.mrf.mxu0
    %v591 = vadd.f32 0.0, %v590
    %v592 = vpop.f32.mrf.mxu0
    %v593 = vadd.f32 0.0, %v592
    %594 = vmatmul.bf16.gmra.mxu0 %v579
    %v595 = vpop.f32.mrf.mxu0
    %v596 = vadd.f32 0.0, %v595
    %v597 = vpop.f32.mrf.mxu0
    %v598 = vadd.f32 0.0, %v597
    %599 = vdwg.mxu0
    %v600 = vadd.f32 %v555, %v591
    %v601 = vadd.f32 %v556, %v593
    %v602 = vadd.f32 %v557, %v596
    %v603 = vadd.f32 %v558, %v598
    %s604 = scalar_lea.vmem %s55, 1
    %v605 = vld [vmem:[%s604] sm:$0x1]
    %s606 = scalar_lea.vmem %s51, 16
    %v607 = vld [vmem:[%s606] sm:$0xf]
    %v608 = vld [vmem:[%s606 + $0x4] sm:$0xf]
    %v609 = vld [vmem:[%s606 + $0x8] sm:$0xf]
    %v610 = vld [vmem:[%s606 + $0xc] sm:$0xf]
    %v615 = vunpack.c.l.b16 %v607
    %v616 = vunpack.c.l.b16 %v608
    %v617 = vunpack.c.l.b16 %v609
    %v618 = vunpack.c.l.b16 %v610
    %v619 = vpack.c.b16 %v616, %v615
    %v620 = vpack.c.b16 %v618, %v617
    %623 = vmatpush.bf16.msra.mxu0 0
    %624 = vmatpush.bf16.msra.mxu0 0
    %625 = vmatpush.bf16.msra.mxu0 0
    %626 = vmatpush.bf16.msra.mxu0 0
    %627 = vmatpush.bf16.msra.mxu0 0
    %628 = vmatpush.bf16.msra.mxu0 0
    %629 = vmatpush.bf16.msra.mxu0 %v620
    %630 = vmatpush.bf16.msra.mxu0 %v619
    %631 = vmatmul.bf16.gmra.mxu0 %v528
    %v632 = vpop.f32.mrf.mxu0
    %v633 = vadd.f32 0.0, %v632
    %v634 = vpop.f32.mrf.mxu0
    %v635 = vadd.f32 0.0, %v634
    %636 = vmatmul.bf16.gmra.mxu0 %v531
    %v637 = vpop.f32.mrf.mxu0
    %v638 = vadd.f32 0.0, %v637
    %v639 = vpop.f32.mrf.mxu0
    %v640 = vadd.f32 0.0, %v639
    %641 = vdwg.mxu0
    %v643 = vperm.slane %v605, 0
    %v645 = vadd.f32 %v643, %v633
    %v646 = vadd.f32 %v643, %v635
    %v647 = vadd.f32 %v643, %v638
    %v648 = vadd.f32 %v643, %v640
    %s649 = scalar_lea.vmem %s53, 16
    %v650 = vld [vmem:[%s649] sm:$0xf]
    %v651 = vld [vmem:[%s649 + $0x4] sm:$0xf]
    %v652 = vld [vmem:[%s649 + $0x8] sm:$0xf]
    %v653 = vld [vmem:[%s649 + $0xc] sm:$0xf]
    %v658 = vunpack.c.l.b16 %v650
    %v659 = vunpack.c.l.b16 %v651
    %v660 = vunpack.c.l.b16 %v652
    %v661 = vunpack.c.l.b16 %v653
    %v662 = vpack.c.b16 %v659, %v658
    %v663 = vpack.c.b16 %v661, %v660
    %666 = vmatpush.bf16.msra.mxu0 0
    %667 = vmatpush.bf16.msra.mxu0 0
    %668 = vmatpush.bf16.msra.mxu0 0
    %669 = vmatpush.bf16.msra.mxu0 0
    %670 = vmatpush.bf16.msra.mxu0 0
    %671 = vmatpush.bf16.msra.mxu0 0
    %672 = vmatpush.bf16.msra.mxu0 %v663
    %673 = vmatpush.bf16.msra.mxu0 %v662
    %674 = vmatmul.bf16.gmra.mxu0 %v576
    %v675 = vpop.f32.mrf.mxu0
    %v676 = vadd.f32 0.0, %v675
    %v677 = vpop.f32.mrf.mxu0
    %v678 = vadd.f32 0.0, %v677
    %679 = vmatmul.bf16.gmra.mxu0 %v579
    %v680 = vpop.f32.mrf.mxu0
    %v681 = vadd.f32 0.0, %v680
    %v682 = vpop.f32.mrf.mxu0
    %v683 = vadd.f32 0.0, %v682
    %684 = vdwg.mxu0
    %v685 = vadd.f32 %v645, %v676
    %v686 = vadd.f32 %v646, %v678
    %v687 = vadd.f32 %v647, %v681
    %v688 = vadd.f32 %v648, %v683
    %s689 = scalar_lea.vmem %s55, 2
    %v690 = vld [vmem:[%s689] sm:$0x1]
    %s691 = scalar_lea.vmem %s51, 32
    %v692 = vld [vmem:[%s691] sm:$0xf]
    %v693 = vld [vmem:[%s691 + $0x4] sm:$0xf]
    %v694 = vld [vmem:[%s691 + $0x8] sm:$0xf]
    %v695 = vld [vmem:[%s691 + $0xc] sm:$0xf]
    %v700 = vunpack.c.l.b16 %v692
    %v701 = vunpack.c.l.b16 %v693
    %v702 = vunpack.c.l.b16 %v694
    %v703 = vunpack.c.l.b16 %v695
    %v704 = vpack.c.b16 %v701, %v700
    %v705 = vpack.c.b16 %v703, %v702
    %708 = vmatpush.bf16.msra.mxu0 0
    %709 = vmatpush.bf16.msra.mxu0 0
    %710 = vmatpush.bf16.msra.mxu0 0
    %711 = vmatpush.bf16.msra.mxu0 0
    %712 = vmatpush.bf16.msra.mxu0 0
    %713 = vmatpush.bf16.msra.mxu0 0
    %714 = vmatpush.bf16.msra.mxu0 %v705
    %715 = vmatpush.bf16.msra.mxu0 %v704
    %716 = vmatmul.bf16.gmra.mxu0 %v528
    %v717 = vpop.f32.mrf.mxu0
    %v718 = vadd.f32 0.0, %v717
    %v719 = vpop.f32.mrf.mxu0
    %v720 = vadd.f32 0.0, %v719
    %721 = vmatmul.bf16.gmra.mxu0 %v531
    %v722 = vpop.f32.mrf.mxu0
    %v723 = vadd.f32 0.0, %v722
    %v724 = vpop.f32.mrf.mxu0
    %v725 = vadd.f32 0.0, %v724
    %726 = vdwg.mxu0
    %v728 = vperm.slane %v690, 0
    %v730 = vadd.f32 %v728, %v718
    %v731 = vadd.f32 %v728, %v720
    %v732 = vadd.f32 %v728, %v723
    %v733 = vadd.f32 %v728, %v725
    %s734 = scalar_lea.vmem %s53, 32
    %v735 = vld [vmem:[%s734] sm:$0xf]
    %v736 = vld [vmem:[%s734 + $0x4] sm:$0xf]
    %v737 = vld [vmem:[%s734 + $0x8] sm:$0xf]
    %v738 = vld [vmem:[%s734 + $0xc] sm:$0xf]
    %v743 = vunpack.c.l.b16 %v735
    %v744 = vunpack.c.l.b16 %v736
    %v745 = vunpack.c.l.b16 %v737
    %v746 = vunpack.c.l.b16 %v738
    %v747 = vpack.c.b16 %v744, %v743
    %v748 = vpack.c.b16 %v746, %v745
    %751 = vmatpush.bf16.msra.mxu0 0
    %752 = vmatpush.bf16.msra.mxu0 0
    %753 = vmatpush.bf16.msra.mxu0 0
    %754 = vmatpush.bf16.msra.mxu0 0
    %755 = vmatpush.bf16.msra.mxu0 0
    %756 = vmatpush.bf16.msra.mxu0 0
    %757 = vmatpush.bf16.msra.mxu0 %v748
    %758 = vmatpush.bf16.msra.mxu0 %v747
    %759 = vmatmul.bf16.gmra.mxu0 %v576
    %v760 = vpop.f32.mrf.mxu0
    %v761 = vadd.f32 0.0, %v760
    %v762 = vpop.f32.mrf.mxu0
    %v763 = vadd.f32 0.0, %v762
    %764 = vmatmul.bf16.gmra.mxu0 %v579
    %v765 = vpop.f32.mrf.mxu0
    %v766 = vadd.f32 0.0, %v765
    %v767 = vpop.f32.mrf.mxu0
    %v768 = vadd.f32 0.0, %v767
    %769 = vdwg.mxu0
    %v770 = vadd.f32 %v730, %v761
    %v771 = vadd.f32 %v731, %v763
    %v772 = vadd.f32 %v732, %v766
    %v773 = vadd.f32 %v733, %v768
    %s774 = scalar_lea.vmem %s55, 3
    %v775 = vld [vmem:[%s774] sm:$0x1]
    %s776 = scalar_lea.vmem %s51, 48
    %v777 = vld [vmem:[%s776] sm:$0xf]
    %v778 = vld [vmem:[%s776 + $0x4] sm:$0xf]
    %v779 = vld [vmem:[%s776 + $0x8] sm:$0xf]
    %v780 = vld [vmem:[%s776 + $0xc] sm:$0xf]
    %v785 = vunpack.c.l.b16 %v777
    %v786 = vunpack.c.l.b16 %v778
    %v787 = vunpack.c.l.b16 %v779
    %v788 = vunpack.c.l.b16 %v780
    %v789 = vpack.c.b16 %v786, %v785
    %v790 = vpack.c.b16 %v788, %v787
    %793 = vmatpush.bf16.msra.mxu0 0
    %794 = vmatpush.bf16.msra.mxu0 0
    %795 = vmatpush.bf16.msra.mxu0 0
    %796 = vmatpush.bf16.msra.mxu0 0
    %797 = vmatpush.bf16.msra.mxu0 0
    %798 = vmatpush.bf16.msra.mxu0 0
    %799 = vmatpush.bf16.msra.mxu0 %v790
    %800 = vmatpush.bf16.msra.mxu0 %v789
    %801 = vmatmul.bf16.gmra.mxu0 %v528
    %v802 = vpop.f32.mrf.mxu0
    %v803 = vadd.f32 0.0, %v802
    %v804 = vpop.f32.mrf.mxu0
    %v805 = vadd.f32 0.0, %v804
    %806 = vmatmul.bf16.gmra.mxu0 %v531
    %v807 = vpop.f32.mrf.mxu0
    %v808 = vadd.f32 0.0, %v807
    %v809 = vpop.f32.mrf.mxu0
    %v810 = vadd.f32 0.0, %v809
    %811 = vdwg.mxu0
    %v813 = vperm.slane %v775, 0
    %v815 = vadd.f32 %v813, %v803
    %v816 = vadd.f32 %v813, %v805
    %v817 = vadd.f32 %v813, %v808
    %v818 = vadd.f32 %v813, %v810
    %s819 = scalar_lea.vmem %s53, 48
    %v820 = vld [vmem:[%s819] sm:$0xf]
    %v821 = vld [vmem:[%s819 + $0x4] sm:$0xf]
    %v822 = vld [vmem:[%s819 + $0x8] sm:$0xf]
    %v823 = vld [vmem:[%s819 + $0xc] sm:$0xf]
    %v828 = vunpack.c.l.b16 %v820
    %v829 = vunpack.c.l.b16 %v821
    %v830 = vunpack.c.l.b16 %v822
    %v831 = vunpack.c.l.b16 %v823
    %v832 = vpack.c.b16 %v829, %v828
    %v833 = vpack.c.b16 %v831, %v830
    %836 = vmatpush.bf16.msra.mxu0 0
    %837 = vmatpush.bf16.msra.mxu0 0
    %838 = vmatpush.bf16.msra.mxu0 0
    %839 = vmatpush.bf16.msra.mxu0 0
    %840 = vmatpush.bf16.msra.mxu0 0
    %841 = vmatpush.bf16.msra.mxu0 0
    %842 = vmatpush.bf16.msra.mxu0 %v833
    %843 = vmatpush.bf16.msra.mxu0 %v832
    %844 = vmatmul.bf16.gmra.mxu0 %v576
    %v845 = vpop.f32.mrf.mxu0
    %v846 = vadd.f32 0.0, %v845
    %v847 = vpop.f32.mrf.mxu0
    %v848 = vadd.f32 0.0, %v847
    %849 = vmatmul.bf16.gmra.mxu0 %v579
    %v850 = vpop.f32.mrf.mxu0
    %v851 = vadd.f32 0.0, %v850
    %v852 = vpop.f32.mrf.mxu0
    %v853 = vadd.f32 0.0, %v852
    %854 = vdwg.mxu0
    %v855 = vadd.f32 %v815, %v846
    %v856 = vadd.f32 %v816, %v848
    %v857 = vadd.f32 %v817, %v851
    %v858 = vadd.f32 %v818, %v853
    %v859 = vxor.u32 %v600, 2147483648
    %v860 = vxor.u32 %v601, 2147483648
    %v861 = vxor.u32 %v602, 2147483648
    %v862 = vxor.u32 %v603, 2147483648
    %v863 = vmul.f32 %v859, 1.442695
    %v864 = vpow.pop %v863
    %v865 = vmul.f32 %v860, 1.442695
    %v866 = vpow.pop %v865
    %v867 = vmul.f32 %v861, 1.442695
    %v868 = vpow.pop %v867
    %v869 = vmul.f32 %v862, 1.442695
    %v870 = vpow.pop %v869
    %v871 = vadd.f32 %v864, 1.0
    %v872 = vadd.f32 %v866, 1.0
    %v873 = vadd.f32 %v868, 1.0
    %v874 = vadd.f32 %v870, 1.0
    %v875 = vrcp.pop %v871
    %v876 = vmul.f32 %v871, %v875
    %v877 = vsub.f32 1.0, %v876
    %v878 = vmul.f32 %v875, %v877
    %v879 = vadd.f32 %v875, %v878
    %vm880 = vweird.f32 %v871
    %vm881 = vweird.f32 %v875
    %vm882 = vmor %vm880, %vm881
    %v883 = vsel %vm882, %v875, %v879
    %v884 = vand.u32 2147483647, %v871
    %vm885 = vcmp.eq.f32.partialorder %v884, 8.507059e+37
    %v886 = vand.u32 %v871, 2147483648
    %v887 = vor.u32 1.1754944e-38, %v886
    %v888 = vsel %vm885, %v887, %v883
    %v889 = vmul.f32 1.0, %v888
    %v890 = vrcp.pop %v872
    %v891 = vmul.f32 %v872, %v890
    %v892 = vsub.f32 1.0, %v891
    %v893 = vmul.f32 %v890, %v892
    %v894 = vadd.f32 %v890, %v893
    %vm895 = vweird.f32 %v872
    %vm896 = vweird.f32 %v890
    %vm897 = vmor %vm895, %vm896
    %v898 = vsel %vm897, %v890, %v894
    %v899 = vand.u32 2147483647, %v872
    %vm900 = vcmp.eq.f32.partialorder %v899, 8.507059e+37
    %v901 = vand.u32 %v872, 2147483648
    %v902 = vor.u32 1.1754944e-38, %v901
    %v903 = vsel %vm900, %v902, %v898
    %v904 = vmul.f32 1.0, %v903
    %v905 = vrcp.pop %v873
    %v906 = vmul.f32 %v873, %v905
    %v907 = vsub.f32 1.0, %v906
    %v908 = vmul.f32 %v905, %v907
    %v909 = vadd.f32 %v905, %v908
    %vm910 = vweird.f32 %v873
    %vm911 = vweird.f32 %v905
    %vm912 = vmor %vm910, %vm911
    %v913 = vsel %vm912, %v905, %v909
    %v914 = vand.u32 2147483647, %v873
    %vm915 = vcmp.eq.f32.partialorder %v914, 8.507059e+37
    %v916 = vand.u32 %v873, 2147483648
    %v917 = vor.u32 1.1754944e-38, %v916
    %v918 = vsel %vm915, %v917, %v913
    %v919 = vmul.f32 1.0, %v918
    %v920 = vrcp.pop %v874
    %v921 = vmul.f32 %v874, %v920
    %v922 = vsub.f32 1.0, %v921
    %v923 = vmul.f32 %v920, %v922
    %v924 = vadd.f32 %v920, %v923
    %vm925 = vweird.f32 %v874
    %vm926 = vweird.f32 %v920
    %vm927 = vmor %vm925, %vm926
    %v928 = vsel %vm927, %v920, %v924
    %v929 = vand.u32 2147483647, %v874
    %vm930 = vcmp.eq.f32.partialorder %v929, 8.507059e+37
    %v931 = vand.u32 %v874, 2147483648
    %v932 = vor.u32 1.1754944e-38, %v931
    %v933 = vsel %vm930, %v932, %v928
    %v934 = vmul.f32 1.0, %v933
    %v935 = vxor.u32 %v685, 2147483648
    %v936 = vxor.u32 %v686, 2147483648
    %v937 = vxor.u32 %v687, 2147483648
    %v938 = vxor.u32 %v688, 2147483648
    %v939 = vmul.f32 %v935, 1.442695
    %v940 = vpow.pop %v939
    %v941 = vmul.f32 %v936, 1.442695
    %v942 = vpow.pop %v941
    %v943 = vmul.f32 %v937, 1.442695
    %v944 = vpow.pop %v943
    %v945 = vmul.f32 %v938, 1.442695
    %v946 = vpow.pop %v945
    %v947 = vadd.f32 %v940, 1.0
    %v948 = vadd.f32 %v942, 1.0
    %v949 = vadd.f32 %v944, 1.0
    %v950 = vadd.f32 %v946, 1.0
    %v951 = vrcp.pop %v947
    %v952 = vmul.f32 %v947, %v951
    %v953 = vsub.f32 1.0, %v952
    %v954 = vmul.f32 %v951, %v953
    %v955 = vadd.f32 %v951, %v954
    %vm956 = vweird.f32 %v947
    %vm957 = vweird.f32 %v951
    %vm958 = vmor %vm956, %vm957
    %v959 = vsel %vm958, %v951, %v955
    %v960 = vand.u32 2147483647, %v947
    %vm961 = vcmp.eq.f32.partialorder %v960, 8.507059e+37
    %v962 = vand.u32 %v947, 2147483648
    %v963 = vor.u32 1.1754944e-38, %v962
    %v964 = vsel %vm961, %v963, %v959
    %v965 = vmul.f32 1.0, %v964
    %v966 = vrcp.pop %v948
    %v967 = vmul.f32 %v948, %v966
    %v968 = vsub.f32 1.0, %v967
    %v969 = vmul.f32 %v966, %v968
    %v970 = vadd.f32 %v966, %v969
    %vm971 = vweird.f32 %v948
    %vm972 = vweird.f32 %v966
    %vm973 = vmor %vm971, %vm972
    %v974 = vsel %vm973, %v966, %v970
    %v975 = vand.u32 2147483647, %v948
    %vm976 = vcmp.eq.f32.partialorder %v975, 8.507059e+37
    %v977 = vand.u32 %v948, 2147483648
    %v978 = vor.u32 1.1754944e-38, %v977
    %v979 = vsel %vm976, %v978, %v974
    %v980 = vmul.f32 1.0, %v979
    %v981 = vrcp.pop %v949
    %v982 = vmul.f32 %v949, %v981
    %v983 = vsub.f32 1.0, %v982
    %v984 = vmul.f32 %v981, %v983
    %v985 = vadd.f32 %v981, %v984
    %vm986 = vweird.f32 %v949
    %vm987 = vweird.f32 %v981
    %vm988 = vmor %vm986, %vm987
    %v989 = vsel %vm988, %v981, %v985
    %v990 = vand.u32 2147483647, %v949
    %vm991 = vcmp.eq.f32.partialorder %v990, 8.507059e+37
    %v992 = vand.u32 %v949, 2147483648
    %v993 = vor.u32 1.1754944e-38, %v992
    %v994 = vsel %vm991, %v993, %v989
    %v995 = vmul.f32 1.0, %v994
    %v996 = vrcp.pop %v950
    %v997 = vmul.f32 %v950, %v996
    %v998 = vsub.f32 1.0, %v997
    %v999 = vmul.f32 %v996, %v998
    %v1000 = vadd.f32 %v996, %v999
    %vm1001 = vweird.f32 %v950
    %vm1002 = vweird.f32 %v996
    %vm1003 = vmor %vm1001, %vm1002
    %v1004 = vsel %vm1003, %v996, %v1000
    %v1005 = vand.u32 2147483647, %v950
    %vm1006 = vcmp.eq.f32.partialorder %v1005, 8.507059e+37
    %v1007 = vand.u32 %v950, 2147483648
    %v1008 = vor.u32 1.1754944e-38, %v1007
    %v1009 = vsel %vm1006, %v1008, %v1004
    %v1010 = vmul.f32 1.0, %v1009
    %v1011 = vtanh.pop %v770
    %v1012 = vtanh.pop %v771
    %v1013 = vtanh.pop %v772
    %v1014 = vtanh.pop %v773
    %v1015 = vxor.u32 %v855, 2147483648
    %v1016 = vxor.u32 %v856, 2147483648
    %v1017 = vxor.u32 %v857, 2147483648
    %v1018 = vxor.u32 %v858, 2147483648
    %v1019 = vmul.f32 %v1015, 1.442695
    %v1020 = vpow.pop %v1019
    %v1021 = vmul.f32 %v1016, 1.442695
    %v1022 = vpow.pop %v1021
    %v1023 = vmul.f32 %v1017, 1.442695
    %v1024 = vpow.pop %v1023
    %v1025 = vmul.f32 %v1018, 1.442695
    %v1026 = vpow.pop %v1025
    %v1027 = vadd.f32 %v1020, 1.0
    %v1028 = vadd.f32 %v1022, 1.0
    %v1029 = vadd.f32 %v1024, 1.0
    %v1030 = vadd.f32 %v1026, 1.0
    %v1031 = vrcp.pop %v1027
    %v1032 = vmul.f32 %v1027, %v1031
    %v1033 = vsub.f32 1.0, %v1032
    %v1034 = vmul.f32 %v1031, %v1033
    %v1035 = vadd.f32 %v1031, %v1034
    %vm1036 = vweird.f32 %v1027
    %vm1037 = vweird.f32 %v1031
    %vm1038 = vmor %vm1036, %vm1037
    %v1039 = vsel %vm1038, %v1031, %v1035
    %v1040 = vand.u32 2147483647, %v1027
    %vm1041 = vcmp.eq.f32.partialorder %v1040, 8.507059e+37
    %v1042 = vand.u32 %v1027, 2147483648
    %v1043 = vor.u32 1.1754944e-38, %v1042
    %v1044 = vsel %vm1041, %v1043, %v1039
    %v1045 = vmul.f32 1.0, %v1044
    %v1046 = vrcp.pop %v1028
    %v1047 = vmul.f32 %v1028, %v1046
    %v1048 = vsub.f32 1.0, %v1047
    %v1049 = vmul.f32 %v1046, %v1048
    %v1050 = vadd.f32 %v1046, %v1049
    %vm1051 = vweird.f32 %v1028
    %vm1052 = vweird.f32 %v1046
    %vm1053 = vmor %vm1051, %vm1052
    %v1054 = vsel %vm1053, %v1046, %v1050
    %v1055 = vand.u32 2147483647, %v1028
    %vm1056 = vcmp.eq.f32.partialorder %v1055, 8.507059e+37
    %v1057 = vand.u32 %v1028, 2147483648
    %v1058 = vor.u32 1.1754944e-38, %v1057
    %v1059 = vsel %vm1056, %v1058, %v1054
    %v1060 = vmul.f32 1.0, %v1059
    %v1061 = vrcp.pop %v1029
    %v1062 = vmul.f32 %v1029, %v1061
    %v1063 = vsub.f32 1.0, %v1062
    %v1064 = vmul.f32 %v1061, %v1063
    %v1065 = vadd.f32 %v1061, %v1064
    %vm1066 = vweird.f32 %v1029
    %vm1067 = vweird.f32 %v1061
    %vm1068 = vmor %vm1066, %vm1067
    %v1069 = vsel %vm1068, %v1061, %v1065
    %v1070 = vand.u32 2147483647, %v1029
    %vm1071 = vcmp.eq.f32.partialorder %v1070, 8.507059e+37
    %v1072 = vand.u32 %v1029, 2147483648
    %v1073 = vor.u32 1.1754944e-38, %v1072
    %v1074 = vsel %vm1071, %v1073, %v1069
    %v1075 = vmul.f32 1.0, %v1074
    %v1076 = vrcp.pop %v1030
    %v1077 = vmul.f32 %v1030, %v1076
    %v1078 = vsub.f32 1.0, %v1077
    %v1079 = vmul.f32 %v1076, %v1078
    %v1080 = vadd.f32 %v1076, %v1079
    %vm1081 = vweird.f32 %v1030
    %vm1082 = vweird.f32 %v1076
    %vm1083 = vmor %vm1081, %vm1082
    %v1084 = vsel %vm1083, %v1076, %v1080
    %v1085 = vand.u32 2147483647, %v1030
    %vm1086 = vcmp.eq.f32.partialorder %v1085, 8.507059e+37
    %v1087 = vand.u32 %v1030, 2147483648
    %v1088 = vor.u32 1.1754944e-38, %v1087
    %v1089 = vsel %vm1086, %v1088, %v1084
    %v1090 = vmul.f32 1.0, %v1089
    %v1091 = vmul.f32 %v965, %v319
    %v1092 = vmul.f32 %v980, %v320
    %v1093 = vmul.f32 %v995, %v321
    %v1094 = vmul.f32 %v1010, %v322
    %v1095 = vmul.f32 %v889, %v1011
    %v1096 = vmul.f32 %v904, %v1012
    %v1097 = vmul.f32 %v919, %v1013
    %v1098 = vmul.f32 %v934, %v1014
    %v1099 = vadd.f32 %v1091, %v1095
    %v1100 = vadd.f32 %v1092, %v1096
    %v1101 = vadd.f32 %v1093, %v1097
    %v1102 = vadd.f32 %v1094, %v1098
    %v1103 = vtanh.pop %v1099
    %v1104 = vtanh.pop %v1100
    %v1105 = vtanh.pop %v1101
    %v1106 = vtanh.pop %v1102
    %v1107 = vmul.f32 %v1045, %v1103
    %v1108 = vmul.f32 %v1060, %v1104
    %v1109 = vmul.f32 %v1075, %v1105
    %v1110 = vmul.f32 %v1090, %v1106
    %v1111 = vsel %vm345, %v1107, 0.0
    %1112 = vadd.xlane.f32.xlu0 %v1111
    %v1113 = vpop.xlane.xlu0 %1112
    %v1114 = vsel %vm345, %v1108, 0.0
    %1115 = vadd.xlane.f32.xlu0 %v1114
    %v1116 = vpop.xlane.xlu0 %1115
    %v1117 = vsel %vm345, %v1109, 0.0
    %1118 = vadd.xlane.f32.xlu0 %v1117
    %v1119 = vpop.xlane.xlu0 %1118
    %v1120 = vsel %vm345, %v1110, 0.0
    %1121 = vadd.xlane.f32.xlu0 %v1120
    %v1122 = vpop.xlane.xlu0 %1121
    %v1123 = vrcp.pop 32.0
    %v1124 = vmul.f32 32.0, %v1123
    %v1125 = vsub.f32 1.0, %v1124
    %v1126 = vmul.f32 %v1123, %v1125
    %v1127 = vadd.f32 %v1123, %v1126
    %vm1128 = vweird.f32 %v1123
    %v1129 = vsel %vm1128, %v1123, %v1127
    %v1130 = vmul.f32 %v1113, %v1129
    %v1131 = vmul.f32 %v1116, %v1129
    %v1132 = vmul.f32 %v1119, %v1129
    %v1133 = vmul.f32 %v1122, %v1129
    %v1134 = vsub.f32 %v1107, %v1130
    %v1135 = vsub.f32 %v1108, %v1131
    %v1136 = vsub.f32 %v1109, %v1132
    %v1137 = vsub.f32 %v1110, %v1133
    %v1138 = vmul.f32 %v1134, %v1134
    %v1139 = vmul.f32 %v1135, %v1135
    %v1140 = vmul.f32 %v1136, %v1136
    %v1141 = vmul.f32 %v1137, %v1137
    %v1142 = vsel %vm345, %v1138, 0.0
    %1143 = vadd.xlane.f32.xlu0 %v1142
    %v1144 = vpop.xlane.xlu0 %1143
    %v1145 = vsel %vm345, %v1139, 0.0
    %1146 = vadd.xlane.f32.xlu0 %v1145
    %v1147 = vpop.xlane.xlu0 %1146
    %v1148 = vsel %vm345, %v1140, 0.0
    %1149 = vadd.xlane.f32.xlu0 %v1148
    %v1150 = vpop.xlane.xlu0 %1149
    %v1151 = vsel %vm345, %v1141, 0.0
    %1152 = vadd.xlane.f32.xlu0 %v1151
    %v1153 = vpop.xlane.xlu0 %1152
    %v1154 = vmul.f32 %v1144, %v1129
    %v1155 = vmul.f32 %v1147, %v1129
    %v1156 = vmul.f32 %v1150, %v1129
    %v1157 = vmul.f32 %v1153, %v1129
    %v1158 = vadd.f32 %v1154, 1e-05
    %v1159 = vadd.f32 %v1155, 1e-05
    %v1160 = vadd.f32 %v1156, 1e-05
    %v1161 = vadd.f32 %v1157, 1e-05
    %v1162 = vrsqrt.pop %v1158
    %v1163 = vmul.f32 %v1162, %v1158
    %v1164 = vmul.f32 %v1163, %v1162
    %v1165 = vmul.f32 0.5, %v1164
    %v1166 = vsub.f32 1.5, %v1165
    %v1167 = vmul.f32 %v1162, %v1166
    %vm1168 = vweird.f32 %v1158
    %vm1169 = vweird.f32 %v1162
    %vm1170 = vmor %vm1168, %vm1169
    %v1171 = vsel %vm1170, %v1162, %v1167
    %v1172 = vrsqrt.pop %v1159
    %v1173 = vmul.f32 %v1172, %v1159
    %v1174 = vmul.f32 %v1173, %v1172
    %v1175 = vmul.f32 0.5, %v1174
    %v1176 = vsub.f32 1.5, %v1175
    %v1177 = vmul.f32 %v1172, %v1176
    %vm1178 = vweird.f32 %v1159
    %vm1179 = vweird.f32 %v1172
    %vm1180 = vmor %vm1178, %vm1179
    %v1181 = vsel %vm1180, %v1172, %v1177
    %v1182 = vrsqrt.pop %v1160
    %v1183 = vmul.f32 %v1182, %v1160
    %v1184 = vmul.f32 %v1183, %v1182
    %v1185 = vmul.f32 0.5, %v1184
    %v1186 = vsub.f32 1.5, %v1185
    %v1187 = vmul.f32 %v1182, %v1186
    %vm1188 = vweird.f32 %v1160
    %vm1189 = vweird.f32 %v1182
    %vm1190 = vmor %vm1188, %vm1189
    %v1191 = vsel %vm1190, %v1182, %v1187
    %v1192 = vrsqrt.pop %v1161
    %v1193 = vmul.f32 %v1192, %v1161
    %v1194 = vmul.f32 %v1193, %v1192
    %v1195 = vmul.f32 0.5, %v1194
    %v1196 = vsub.f32 1.5, %v1195
    %v1197 = vmul.f32 %v1192, %v1196
    %vm1198 = vweird.f32 %v1161
    %vm1199 = vweird.f32 %v1192
    %vm1200 = vmor %vm1198, %vm1199
    %v1201 = vsel %vm1200, %v1192, %v1197
    %v1202 = vmul.f32 %v1134, %v1171
    %v1203 = vmul.f32 %v1135, %v1181
    %v1204 = vmul.f32 %v1136, %v1191
    %v1205 = vmul.f32 %v1137, %v1201
    %v1206 = vld [vmem:[%s61] sm:$0x1]
    %v1208 = vperm.slane %v1206, 0
    %v1210 = vmul.f32 %v1202, %v1208
    %v1211 = vmul.f32 %v1203, %v1208
    %v1212 = vmul.f32 %v1204, %v1208
    %v1213 = vmul.f32 %v1205, %v1208
    %v1214 = vld [vmem:[%s63] sm:$0x1]
    %v1216 = vperm.slane %v1214, 0
    %v1218 = vadd.f32 %v1210, %v1216
    %v1219 = vadd.f32 %v1211, %v1216
    %v1220 = vadd.f32 %v1212, %v1216
    %v1221 = vadd.f32 %v1213, %v1216
    %v1222 = vmul.f32 %v303, %v221
    %v1223 = vmul.f32 %v304, %v226
    %v1224 = vmul.f32 %v305, %v231
    %v1225 = vmul.f32 %v306, %v236
    %v1226 = vmul.f32 %v1218, %v272
    %v1227 = vmul.f32 %v1219, %v277
    %v1228 = vmul.f32 %v1220, %v282
    %v1229 = vmul.f32 %v1221, %v287
    %v1230 = vadd.f32 %v1222, %v1226
    %v1231 = vadd.f32 %v1223, %v1227
    %v1232 = vadd.f32 %v1224, %v1228
    %v1233 = vadd.f32 %v1225, %v1229
    %v1234 = vpack.c.bf16 %v1231, %v1230
    %v1235 = vpack.c.bf16 %v1233, %v1232
    %v1236 = vld [vmem:[%s31] sm:$0xf]
    %v1237 = vld [vmem:[%s31 + $0x4] sm:$0xf]
    %v1238 = vld [vmem:[%s31 + $0x8] sm:$0xf]
    %v1239 = vld [vmem:[%s31 + $0xc] sm:$0xf]
    %v1240 = vld [vmem:[%s33] sm:$0x1]
    %v1242 = vperm.slane %v1240, 0
    %v1248 = vunpack.c.l.b16 %v1236
    %v1249 = vunpack.c.l.b16 %v1237
    %v1250 = vunpack.c.l.b16 %v1238
    %v1251 = vunpack.c.l.b16 %v1239
    %v1252 = vpack.c.b16 %v1249, %v1248
    %v1253 = vpack.c.b16 %v1251, %v1250
    %v1257 = vsel %vm345, %v1234, 0
    %v1260 = vsel %vm345, %v1235, 0
    %1262 = vmatpush.bf16.msra.mxu0 0
    %1263 = vmatpush.bf16.msra.mxu0 0
    %1264 = vmatpush.bf16.msra.mxu0 0
    %1265 = vmatpush.bf16.msra.mxu0 0
    %1266 = vmatpush.bf16.msra.mxu0 0
    %1267 = vmatpush.bf16.msra.mxu0 0
    %1268 = vmatpush.bf16.msra.mxu0 %v1253
    %1269 = vmatpush.bf16.msra.mxu0 %v1252
    %1270 = vmatmul.bf16.gmra.mxu0 %v1257
    %v1271 = vpop.f32.mrf.mxu0
    %v1272 = vadd.f32 %v1242, %v1271
    %v1273 = vpop.f32.mrf.mxu0
    %v1274 = vadd.f32 %v1242, %v1273
    %1275 = vmatmul.bf16.gmra.mxu0 %v1260
    %v1276 = vpop.f32.mrf.mxu0
    %v1277 = vadd.f32 %v1242, %v1276
    %v1278 = vpop.f32.mrf.mxu0
    %v1279 = vadd.f32 %v1242, %v1278
    %1280 = vdwg.mxu0
    %v1281 = vpack.c.bf16 %v1274, %v1272
    %v1282 = vpack.c.bf16 %v1279, %v1277
    %v1283 = vld [vmem:[%s35] sm:$0xf]
    %v1284 = vld [vmem:[%s35 + $0x4] sm:$0xf]
    %v1285 = vld [vmem:[%s35 + $0x8] sm:$0xf]
    %v1286 = vld [vmem:[%s35 + $0xc] sm:$0xf]
    %v1287 = vld [vmem:[%s37] sm:$0x1]
    %v1289 = vperm.slane %v1287, 0
    %v1295 = vunpack.c.l.b16 %v1283
    %v1296 = vunpack.c.l.b16 %v1284
    %v1297 = vunpack.c.l.b16 %v1285
    %v1298 = vunpack.c.l.b16 %v1286
    %v1299 = vpack.c.b16 %v1296, %v1295
    %v1300 = vpack.c.b16 %v1298, %v1297
    %v1304 = vsel %vm345, %v1281, 0
    %v1307 = vsel %vm345, %v1282, 0
    %1309 = vmatpush.bf16.msra.mxu0 0
    %1310 = vmatpush.bf16.msra.mxu0 0
    %1311 = vmatpush.bf16.msra.mxu0 0
    %1312 = vmatpush.bf16.msra.mxu0 0
    %1313 = vmatpush.bf16.msra.mxu0 0
    %1314 = vmatpush.bf16.msra.mxu0 0
    %1315 = vmatpush.bf16.msra.mxu0 %v1300
    %1316 = vmatpush.bf16.msra.mxu0 %v1299
    %1317 = vmatmul.bf16.gmra.mxu0 %v1304
    %v1318 = vpop.f32.mrf.mxu0
    %v1319 = vadd.f32 %v1289, %v1318
    %v1320 = vpop.f32.mrf.mxu0
    %v1321 = vadd.f32 %v1289, %v1320
    %1322 = vmatmul.bf16.gmra.mxu0 %v1307
    %v1323 = vpop.f32.mrf.mxu0
    %v1324 = vadd.f32 %v1289, %v1323
    %v1325 = vpop.f32.mrf.mxu0
    %v1326 = vadd.f32 %v1289, %v1325
    %1327 = vdwg.mxu0
    %v1328 = vpack.c.bf16 %v1321, %v1319
    %v1329 = vpack.c.bf16 %v1326, %v1324
    %v1330 = vld [vmem:[%s39] sm:$0xf]
    %v1331 = vld [vmem:[%s39 + $0x4] sm:$0xf]
    %v1332 = vld [vmem:[%s39 + $0x8] sm:$0xf]
    %v1333 = vld [vmem:[%s39 + $0xc] sm:$0xf]
    %v1334 = vld [vmem:[%s41] sm:$0x1]
    %v1336 = vperm.slane %v1334, 0
    %v1342 = vunpack.c.l.b16 %v1330
    %v1343 = vunpack.c.l.b16 %v1331
    %v1344 = vunpack.c.l.b16 %v1332
    %v1345 = vunpack.c.l.b16 %v1333
    %v1346 = vpack.c.b16 %v1343, %v1342
    %v1347 = vpack.c.b16 %v1345, %v1344
    %v1351 = vsel %vm345, %v1328, 0
    %v1354 = vsel %vm345, %v1329, 0
    %1356 = vmatpush.bf16.msra.mxu0 0
    %1357 = vmatpush.bf16.msra.mxu0 0
    %1358 = vmatpush.bf16.msra.mxu0 0
    %1359 = vmatpush.bf16.msra.mxu0 0
    %1360 = vmatpush.bf16.msra.mxu0 0
    %1361 = vmatpush.bf16.msra.mxu0 0
    %1362 = vmatpush.bf16.msra.mxu0 %v1347
    %1363 = vmatpush.bf16.msra.mxu0 %v1346
    %1364 = vmatmul.bf16.gmra.mxu0 %v1351
    %v1365 = vpop.f32.mrf.mxu0
    %v1366 = vadd.f32 %v1336, %v1365
    %v1367 = vpop.f32.mrf.mxu0
    %v1368 = vadd.f32 %v1336, %v1367
    %1369 = vmatmul.bf16.gmra.mxu0 %v1354
    %v1370 = vpop.f32.mrf.mxu0
    %v1371 = vadd.f32 %v1336, %v1370
    %v1372 = vpop.f32.mrf.mxu0
    %v1373 = vadd.f32 %v1336, %v1372
    %1374 = vdwg.mxu0
    %v1375 = vpack.c.bf16 %v1368, %v1366
    %v1376 = vpack.c.bf16 %v1373, %v1371
    %1377 = vmatpush.bf16.msra.mxu0 0
    %1378 = vmatpush.bf16.msra.mxu0 0
    %1379 = vmatpush.bf16.msra.mxu0 0
    %1380 = vmatpush.bf16.msra.mxu0 0
    %1381 = vmatpush.bf16.msra.mxu0 0
    %1382 = vmatpush.bf16.msra.mxu0 0
    %1383 = vmatpush.bf16.msra.mxu0 %v1376
    %1384 = vmatpush.bf16.msra.mxu0 %v1375
    %1385 = vmatmul.bf16.gmra.mxu0 %v482
    %v1386 = vpop.f32.mrf.mxu0
    %v1387 = vadd.f32 0.0, %v1386
    %v1388 = vpop.f32.mrf.mxu0
    %v1389 = vadd.f32 0.0, %v1388
    %1390 = vmatmul.bf16.gmra.mxu0 %v485
    %v1391 = vpop.f32.mrf.mxu0
    %v1392 = vadd.f32 0.0, %v1391
    %v1393 = vpop.f32.mrf.mxu0
    %v1394 = vadd.f32 0.0, %v1393
    %1395 = vdwg.mxu0
    %v1396 = vld [vmem:[%s5] sm:$0xf]
    %v1397 = vld [vmem:[%s5 + $0x4] sm:$0xf]
    %v1398 = vld [vmem:[%s5 + $0x8] sm:$0xf]
    %v1399 = vld [vmem:[%s5 + $0xc] sm:$0xf]
    %v1404 = vunpack.c.l.b16 %v1396
    %v1405 = vunpack.c.l.b16 %v1397
    %v1406 = vunpack.c.l.b16 %v1398
    %v1407 = vunpack.c.l.b16 %v1399
    %v1408 = vpack.c.b16 %v1405, %v1404
    %v1409 = vpack.c.b16 %v1407, %v1406
    %v1411 = vsel %vm345, %v1408, 0
    %v1414 = vsel %vm345, %v1409, 0
    %1416 = vmatpush.bf16.msra.mxu0 0
    %1417 = vmatpush.bf16.msra.mxu0 0
    %1418 = vmatpush.bf16.msra.mxu0 0
    %1419 = vmatpush.bf16.msra.mxu0 0
    %1420 = vmatpush.bf16.msra.mxu0 0
    %1421 = vmatpush.bf16.msra.mxu0 0
    %1422 = vmatpush.bf16.msra.mxu0 %v324
    %1423 = vmatpush.bf16.msra.mxu0 %v323
    %1424 = vmatmul.bf16.gmra.mxu0 %v1411
    %v1425 = vpop.f32.mrf.mxu0
    %v1426 = vadd.f32 0.0, %v1425
    %v1427 = vpop.f32.mrf.mxu0
    %v1428 = vadd.f32 0.0, %v1427
    %1429 = vmatmul.bf16.gmra.mxu0 %v1414
    %v1430 = vpop.f32.mrf.mxu0
    %v1431 = vadd.f32 0.0, %v1430
    %v1432 = vpop.f32.mrf.mxu0
    %v1433 = vadd.f32 0.0, %v1432
    %1434 = vdwg.mxu0
    %v1435 = vpack.c.bf16 %v1428, %v1426
    %v1436 = vpack.c.bf16 %v1433, %v1431
    %v1437 = vpack.c.bf16 %v1389, %v1387
    %v1438 = vpack.c.bf16 %v1394, %v1392
    %v1439 = vpack.c.bf16 %v308, %v307
    %v1440 = vpack.c.bf16 %v310, %v309
    %v1441 = vld [vmem:[%s49] sm:$0x1]
    %v1442 = vld [vmem:[%s43] sm:$0xf]
    %v1443 = vld [vmem:[%s43 + $0x4] sm:$0xf]
    %v1444 = vld [vmem:[%s43 + $0x8] sm:$0xf]
    %v1445 = vld [vmem:[%s43 + $0xc] sm:$0xf]
    %v1450 = vunpack.c.l.b16 %v1442
    %v1451 = vunpack.c.l.b16 %v1443
    %v1452 = vunpack.c.l.b16 %v1444
    %v1453 = vunpack.c.l.b16 %v1445
    %v1454 = vpack.c.b16 %v1451, %v1450
    %v1455 = vpack.c.b16 %v1453, %v1452
    %v1459 = vsel %vm345, %v1435, 0
    %v1462 = vsel %vm345, %v1436, 0
    %1464 = vmatpush.bf16.msra.mxu0 0
    %1465 = vmatpush.bf16.msra.mxu0 0
    %1466 = vmatpush.bf16.msra.mxu0 0
    %1467 = vmatpush.bf16.msra.mxu0 0
    %1468 = vmatpush.bf16.msra.mxu0 0
    %1469 = vmatpush.bf16.msra.mxu0 0
    %1470 = vmatpush.bf16.msra.mxu0 %v1455
    %1471 = vmatpush.bf16.msra.mxu0 %v1454
    %1472 = vmatmul.bf16.gmra.mxu0 %v1459
    %v1473 = vpop.f32.mrf.mxu0
    %v1474 = vadd.f32 0.0, %v1473
    %v1475 = vpop.f32.mrf.mxu0
    %v1476 = vadd.f32 0.0, %v1475
    %1477 = vmatmul.bf16.gmra.mxu0 %v1462
    %v1478 = vpop.f32.mrf.mxu0
    %v1479 = vadd.f32 0.0, %v1478
    %v1480 = vpop.f32.mrf.mxu0
    %v1481 = vadd.f32 0.0, %v1480
    %1482 = vdwg.mxu0
    %v1484 = vperm.slane %v1441, 0
    %v1486 = vadd.f32 %v1484, %v1474
    %v1487 = vadd.f32 %v1484, %v1476
    %v1488 = vadd.f32 %v1484, %v1479
    %v1489 = vadd.f32 %v1484, %v1481
    %v1490 = vld [vmem:[%s45] sm:$0xf]
    %v1491 = vld [vmem:[%s45 + $0x4] sm:$0xf]
    %v1492 = vld [vmem:[%s45 + $0x8] sm:$0xf]
    %v1493 = vld [vmem:[%s45 + $0xc] sm:$0xf]
    %v1498 = vunpack.c.l.b16 %v1490
    %v1499 = vunpack.c.l.b16 %v1491
    %v1500 = vunpack.c.l.b16 %v1492
    %v1501 = vunpack.c.l.b16 %v1493
    %v1502 = vpack.c.b16 %v1499, %v1498
    %v1503 = vpack.c.b16 %v1501, %v1500
    %v1507 = vsel %vm345, %v1437, 0
    %v1510 = vsel %vm345, %v1438, 0
    %1512 = vmatpush.bf16.msra.mxu0 0
    %1513 = vmatpush.bf16.msra.mxu0 0
    %1514 = vmatpush.bf16.msra.mxu0 0
    %1515 = vmatpush.bf16.msra.mxu0 0
    %1516 = vmatpush.bf16.msra.mxu0 0
    %1517 = vmatpush.bf16.msra.mxu0 0
    %1518 = vmatpush.bf16.msra.mxu0 %v1503
    %1519 = vmatpush.bf16.msra.mxu0 %v1502
    %1520 = vmatmul.bf16.gmra.mxu0 %v1507
    %v1521 = vpop.f32.mrf.mxu0
    %v1522 = vadd.f32 0.0, %v1521
    %v1523 = vpop.f32.mrf.mxu0
    %v1524 = vadd.f32 0.0, %v1523
    %1525 = vmatmul.bf16.gmra.mxu0 %v1510
    %v1526 = vpop.f32.mrf.mxu0
    %v1527 = vadd.f32 0.0, %v1526
    %v1528 = vpop.f32.mrf.mxu0
    %v1529 = vadd.f32 0.0, %v1528
    %1530 = vdwg.mxu0
    %v1531 = vadd.f32 %v1486, %v1522
    %v1532 = vadd.f32 %v1487, %v1524
    %v1533 = vadd.f32 %v1488, %v1527
    %v1534 = vadd.f32 %v1489, %v1529
    %v1535 = vld [vmem:[%s47] sm:$0xf]
    %v1536 = vld [vmem:[%s47 + $0x4] sm:$0xf]
    %v1537 = vld [vmem:[%s47 + $0x8] sm:$0xf]
    %v1538 = vld [vmem:[%s47 + $0xc] sm:$0xf]
    %v1543 = vunpack.c.l.b16 %v1535
    %v1544 = vunpack.c.l.b16 %v1536
    %v1545 = vunpack.c.l.b16 %v1537
    %v1546 = vunpack.c.l.b16 %v1538
    %v1547 = vpack.c.b16 %v1544, %v1543
    %v1548 = vpack.c.b16 %v1546, %v1545
    %v1552 = vsel %vm345, %v1439, 0
    %v1555 = vsel %vm345, %v1440, 0
    %1557 = vmatpush.bf16.msra.mxu0 0
    %1558 = vmatpush.bf16.msra.mxu0 0
    %1559 = vmatpush.bf16.msra.mxu0 0
    %1560 = vmatpush.bf16.msra.mxu0 0
    %1561 = vmatpush.bf16.msra.mxu0 0
    %1562 = vmatpush.bf16.msra.mxu0 0
    %1563 = vmatpush.bf16.msra.mxu0 %v1548
    %1564 = vmatpush.bf16.msra.mxu0 %v1547
    %1565 = vmatmul.bf16.gmra.mxu0 %v1552
    %v1566 = vpop.f32.mrf.mxu0
    %v1567 = vadd.f32 0.0, %v1566
    %v1568 = vpop.f32.mrf.mxu0
    %v1569 = vadd.f32 0.0, %v1568
    %1570 = vmatmul.bf16.gmra.mxu0 %v1555
    %v1571 = vpop.f32.mrf.mxu0
    %v1572 = vadd.f32 0.0, %v1571
    %v1573 = vpop.f32.mrf.mxu0
    %v1574 = vadd.f32 0.0, %v1573
    %1575 = vdwg.mxu0
    %v1576 = vadd.f32 %v1531, %v1567
    %v1577 = vadd.f32 %v1532, %v1569
    %v1578 = vadd.f32 %v1533, %v1572
    %v1579 = vadd.f32 %v1534, %v1574
    %s1580 = scalar_lea.vmem %s49, 1
    %v1581 = vld [vmem:[%s1580] sm:$0x1]
    %s1582 = scalar_lea.vmem %s43, 16
    %v1583 = vld [vmem:[%s1582] sm:$0xf]
    %v1584 = vld [vmem:[%s1582 + $0x4] sm:$0xf]
    %v1585 = vld [vmem:[%s1582 + $0x8] sm:$0xf]
    %v1586 = vld [vmem:[%s1582 + $0xc] sm:$0xf]
    %v1591 = vunpack.c.l.b16 %v1583
    %v1592 = vunpack.c.l.b16 %v1584
    %v1593 = vunpack.c.l.b16 %v1585
    %v1594 = vunpack.c.l.b16 %v1586
    %v1595 = vpack.c.b16 %v1592, %v1591
    %v1596 = vpack.c.b16 %v1594, %v1593
    %1599 = vmatpush.bf16.msra.mxu0 0
    %1600 = vmatpush.bf16.msra.mxu0 0
    %1601 = vmatpush.bf16.msra.mxu0 0
    %1602 = vmatpush.bf16.msra.mxu0 0
    %1603 = vmatpush.bf16.msra.mxu0 0
    %1604 = vmatpush.bf16.msra.mxu0 0
    %1605 = vmatpush.bf16.msra.mxu0 %v1596
    %1606 = vmatpush.bf16.msra.mxu0 %v1595
    %1607 = vmatmul.bf16.gmra.mxu0 %v1459
    %v1608 = vpop.f32.mrf.mxu0
    %v1609 = vadd.f32 0.0, %v1608
    %v1610 = vpop.f32.mrf.mxu0
    %v1611 = vadd.f32 0.0, %v1610
    %1612 = vmatmul.bf16.gmra.mxu0 %v1462
    %v1613 = vpop.f32.mrf.mxu0
    %v1614 = vadd.f32 0.0, %v1613
    %v1615 = vpop.f32.mrf.mxu0
    %v1616 = vadd.f32 0.0, %v1615
    %1617 = vdwg.mxu0
    %v1619 = vperm.slane %v1581, 0
    %v1621 = vadd.f32 %v1619, %v1609
    %v1622 = vadd.f32 %v1619, %v1611
    %v1623 = vadd.f32 %v1619, %v1614
    %v1624 = vadd.f32 %v1619, %v1616
    %s1625 = scalar_lea.vmem %s45, 16
    %v1626 = vld [vmem:[%s1625] sm:$0xf]
    %v1627 = vld [vmem:[%s1625 + $0x4] sm:$0xf]
    %v1628 = vld [vmem:[%s1625 + $0x8] sm:$0xf]
    %v1629 = vld [vmem:[%s1625 + $0xc] sm:$0xf]
    %v1634 = vunpack.c.l.b16 %v1626
    %v1635 = vunpack.c.l.b16 %v1627
    %v1636 = vunpack.c.l.b16 %v1628
    %v1637 = vunpack.c.l.b16 %v1629
    %v1638 = vpack.c.b16 %v1635, %v1634
    %v1639 = vpack.c.b16 %v1637, %v1636
    %1642 = vmatpush.bf16.msra.mxu0 0
    %1643 = vmatpush.bf16.msra.mxu0 0
    %1644 = vmatpush.bf16.msra.mxu0 0
    %1645 = vmatpush.bf16.msra.mxu0 0
    %1646 = vmatpush.bf16.msra.mxu0 0
    %1647 = vmatpush.bf16.msra.mxu0 0
    %1648 = vmatpush.bf16.msra.mxu0 %v1639
    %1649 = vmatpush.bf16.msra.mxu0 %v1638
    %1650 = vmatmul.bf16.gmra.mxu0 %v1507
    %v1651 = vpop.f32.mrf.mxu0
    %v1652 = vadd.f32 0.0, %v1651
    %v1653 = vpop.f32.mrf.mxu0
    %v1654 = vadd.f32 0.0, %v1653
    %1655 = vmatmul.bf16.gmra.mxu0 %v1510
    %v1656 = vpop.f32.mrf.mxu0
    %v1657 = vadd.f32 0.0, %v1656
    %v1658 = vpop.f32.mrf.mxu0
    %v1659 = vadd.f32 0.0, %v1658
    %1660 = vdwg.mxu0
    %v1661 = vadd.f32 %v1621, %v1652
    %v1662 = vadd.f32 %v1622, %v1654
    %v1663 = vadd.f32 %v1623, %v1657
    %v1664 = vadd.f32 %v1624, %v1659
    %s1665 = scalar_lea.vmem %s47, 16
    %v1666 = vld [vmem:[%s1665] sm:$0xf]
    %v1667 = vld [vmem:[%s1665 + $0x4] sm:$0xf]
    %v1668 = vld [vmem:[%s1665 + $0x8] sm:$0xf]
    %v1669 = vld [vmem:[%s1665 + $0xc] sm:$0xf]
    %v1674 = vunpack.c.l.b16 %v1666
    %v1675 = vunpack.c.l.b16 %v1667
    %v1676 = vunpack.c.l.b16 %v1668
    %v1677 = vunpack.c.l.b16 %v1669
    %v1678 = vpack.c.b16 %v1675, %v1674
    %v1679 = vpack.c.b16 %v1677, %v1676
    %1682 = vmatpush.bf16.msra.mxu0 0
    %1683 = vmatpush.bf16.msra.mxu0 0
    %1684 = vmatpush.bf16.msra.mxu0 0
    %1685 = vmatpush.bf16.msra.mxu0 0
    %1686 = vmatpush.bf16.msra.mxu0 0
    %1687 = vmatpush.bf16.msra.mxu0 0
    %1688 = vmatpush.bf16.msra.mxu0 %v1679
    %1689 = vmatpush.bf16.msra.mxu0 %v1678
    %1690 = vmatmul.bf16.gmra.mxu0 %v1552
    %v1691 = vpop.f32.mrf.mxu0
    %v1692 = vadd.f32 0.0, %v1691
    %v1693 = vpop.f32.mrf.mxu0
    %v1694 = vadd.f32 0.0, %v1693
    %1695 = vmatmul.bf16.gmra.mxu0 %v1555
    %v1696 = vpop.f32.mrf.mxu0
    %v1697 = vadd.f32 0.0, %v1696
    %v1698 = vpop.f32.mrf.mxu0
    %v1699 = vadd.f32 0.0, %v1698
    %1700 = vdwg.mxu0
    %v1701 = vadd.f32 %v1661, %v1692
    %v1702 = vadd.f32 %v1662, %v1694
    %v1703 = vadd.f32 %v1663, %v1697
    %v1704 = vadd.f32 %v1664, %v1699
    %s1705 = scalar_lea.vmem %s49, 2
    %v1706 = vld [vmem:[%s1705] sm:$0x1]
    %s1707 = scalar_lea.vmem %s43, 32
    %v1708 = vld [vmem:[%s1707] sm:$0xf]
    %v1709 = vld [vmem:[%s1707 + $0x4] sm:$0xf]
    %v1710 = vld [vmem:[%s1707 + $0x8] sm:$0xf]
    %v1711 = vld [vmem:[%s1707 + $0xc] sm:$0xf]
    %v1716 = vunpack.c.l.b16 %v1708
    %v1717 = vunpack.c.l.b16 %v1709
    %v1718 = vunpack.c.l.b16 %v1710
    %v1719 = vunpack.c.l.b16 %v1711
    %v1720 = vpack.c.b16 %v1717, %v1716
    %v1721 = vpack.c.b16 %v1719, %v1718
    %1724 = vmatpush.bf16.msra.mxu0 0
    %1725 = vmatpush.bf16.msra.mxu0 0
    %1726 = vmatpush.bf16.msra.mxu0 0
    %1727 = vmatpush.bf16.msra.mxu0 0
    %1728 = vmatpush.bf16.msra.mxu0 0
    %1729 = vmatpush.bf16.msra.mxu0 0
    %1730 = vmatpush.bf16.msra.mxu0 %v1721
    %1731 = vmatpush.bf16.msra.mxu0 %v1720
    %1732 = vmatmul.bf16.gmra.mxu0 %v1459
    %v1733 = vpop.f32.mrf.mxu0
    %v1734 = vadd.f32 0.0, %v1733
    %v1735 = vpop.f32.mrf.mxu0
    %v1736 = vadd.f32 0.0, %v1735
    %1737 = vmatmul.bf16.gmra.mxu0 %v1462
    %v1738 = vpop.f32.mrf.mxu0
    %v1739 = vadd.f32 0.0, %v1738
    %v1740 = vpop.f32.mrf.mxu0
    %v1741 = vadd.f32 0.0, %v1740
    %1742 = vdwg.mxu0
    %v1744 = vperm.slane %v1706, 0
    %v1746 = vadd.f32 %v1744, %v1734
    %v1747 = vadd.f32 %v1744, %v1736
    %v1748 = vadd.f32 %v1744, %v1739
    %v1749 = vadd.f32 %v1744, %v1741
    %s1750 = scalar_lea.vmem %s45, 32
    %v1751 = vld [vmem:[%s1750] sm:$0xf]
    %v1752 = vld [vmem:[%s1750 + $0x4] sm:$0xf]
    %v1753 = vld [vmem:[%s1750 + $0x8] sm:$0xf]
    %v1754 = vld [vmem:[%s1750 + $0xc] sm:$0xf]
    %v1759 = vunpack.c.l.b16 %v1751
    %v1760 = vunpack.c.l.b16 %v1752
    %v1761 = vunpack.c.l.b16 %v1753
    %v1762 = vunpack.c.l.b16 %v1754
    %v1763 = vpack.c.b16 %v1760, %v1759
    %v1764 = vpack.c.b16 %v1762, %v1761
    %1767 = vmatpush.bf16.msra.mxu0 0
    %1768 = vmatpush.bf16.msra.mxu0 0
    %1769 = vmatpush.bf16.msra.mxu0 0
    %1770 = vmatpush.bf16.msra.mxu0 0
    %1771 = vmatpush.bf16.msra.mxu0 0
    %1772 = vmatpush.bf16.msra.mxu0 0
    %1773 = vmatpush.bf16.msra.mxu0 %v1764
    %1774 = vmatpush.bf16.msra.mxu0 %v1763
    %1775 = vmatmul.bf16.gmra.mxu0 %v1507
    %v1776 = vpop.f32.mrf.mxu0
    %v1777 = vadd.f32 0.0, %v1776
    %v1778 = vpop.f32.mrf.mxu0
    %v1779 = vadd.f32 0.0, %v1778
    %1780 = vmatmul.bf16.gmra.mxu0 %v1510
    %v1781 = vpop.f32.mrf.mxu0
    %v1782 = vadd.f32 0.0, %v1781
    %v1783 = vpop.f32.mrf.mxu0
    %v1784 = vadd.f32 0.0, %v1783
    %1785 = vdwg.mxu0
    %v1786 = vadd.f32 %v1746, %v1777
    %v1787 = vadd.f32 %v1747, %v1779
    %v1788 = vadd.f32 %v1748, %v1782
    %v1789 = vadd.f32 %v1749, %v1784
    %s1790 = scalar_lea.vmem %s47, 32
    %v1791 = vld [vmem:[%s1790] sm:$0xf]
    %v1792 = vld [vmem:[%s1790 + $0x4] sm:$0xf]
    %v1793 = vld [vmem:[%s1790 + $0x8] sm:$0xf]
    %v1794 = vld [vmem:[%s1790 + $0xc] sm:$0xf]
    %v1799 = vunpack.c.l.b16 %v1791
    %v1800 = vunpack.c.l.b16 %v1792
    %v1801 = vunpack.c.l.b16 %v1793
    %v1802 = vunpack.c.l.b16 %v1794
    %v1803 = vpack.c.b16 %v1800, %v1799
    %v1804 = vpack.c.b16 %v1802, %v1801
    %1807 = vmatpush.bf16.msra.mxu0 0
    %1808 = vmatpush.bf16.msra.mxu0 0
    %1809 = vmatpush.bf16.msra.mxu0 0
    %1810 = vmatpush.bf16.msra.mxu0 0
    %1811 = vmatpush.bf16.msra.mxu0 0
    %1812 = vmatpush.bf16.msra.mxu0 0
    %1813 = vmatpush.bf16.msra.mxu0 %v1804
    %1814 = vmatpush.bf16.msra.mxu0 %v1803
    %1815 = vmatmul.bf16.gmra.mxu0 %v1552
    %v1816 = vpop.f32.mrf.mxu0
    %v1817 = vadd.f32 0.0, %v1816
    %v1818 = vpop.f32.mrf.mxu0
    %v1819 = vadd.f32 0.0, %v1818
    %1820 = vmatmul.bf16.gmra.mxu0 %v1555
    %v1821 = vpop.f32.mrf.mxu0
    %v1822 = vadd.f32 0.0, %v1821
    %v1823 = vpop.f32.mrf.mxu0
    %v1824 = vadd.f32 0.0, %v1823
    %1825 = vdwg.mxu0
    %v1826 = vadd.f32 %v1786, %v1817
    %v1827 = vadd.f32 %v1787, %v1819
    %v1828 = vadd.f32 %v1788, %v1822
    %v1829 = vadd.f32 %v1789, %v1824
    %s1830 = scalar_lea.vmem %s49, 3
    %v1831 = vld [vmem:[%s1830] sm:$0x1]
    %s1832 = scalar_lea.vmem %s43, 48
    %v1833 = vld [vmem:[%s1832] sm:$0xf]
    %v1834 = vld [vmem:[%s1832 + $0x4] sm:$0xf]
    %v1835 = vld [vmem:[%s1832 + $0x8] sm:$0xf]
    %v1836 = vld [vmem:[%s1832 + $0xc] sm:$0xf]
    %v1841 = vunpack.c.l.b16 %v1833
    %v1842 = vunpack.c.l.b16 %v1834
    %v1843 = vunpack.c.l.b16 %v1835
    %v1844 = vunpack.c.l.b16 %v1836
    %v1845 = vpack.c.b16 %v1842, %v1841
    %v1846 = vpack.c.b16 %v1844, %v1843
    %1849 = vmatpush.bf16.msra.mxu0 0
    %1850 = vmatpush.bf16.msra.mxu0 0
    %1851 = vmatpush.bf16.msra.mxu0 0
    %1852 = vmatpush.bf16.msra.mxu0 0
    %1853 = vmatpush.bf16.msra.mxu0 0
    %1854 = vmatpush.bf16.msra.mxu0 0
    %1855 = vmatpush.bf16.msra.mxu0 %v1846
    %1856 = vmatpush.bf16.msra.mxu0 %v1845
    %1857 = vmatmul.bf16.gmra.mxu0 %v1459
    %v1858 = vpop.f32.mrf.mxu0
    %v1859 = vadd.f32 0.0, %v1858
    %v1860 = vpop.f32.mrf.mxu0
    %v1861 = vadd.f32 0.0, %v1860
    %1862 = vmatmul.bf16.gmra.mxu0 %v1462
    %v1863 = vpop.f32.mrf.mxu0
    %v1864 = vadd.f32 0.0, %v1863
    %v1865 = vpop.f32.mrf.mxu0
    %v1866 = vadd.f32 0.0, %v1865
    %1867 = vdwg.mxu0
    %v1869 = vperm.slane %v1831, 0
    %v1871 = vadd.f32 %v1869, %v1859
    %v1872 = vadd.f32 %v1869, %v1861
    %v1873 = vadd.f32 %v1869, %v1864
    %v1874 = vadd.f32 %v1869, %v1866
    %s1875 = scalar_lea.vmem %s45, 48
    %v1876 = vld [vmem:[%s1875] sm:$0xf]
    %v1877 = vld [vmem:[%s1875 + $0x4] sm:$0xf]
    %v1878 = vld [vmem:[%s1875 + $0x8] sm:$0xf]
    %v1879 = vld [vmem:[%s1875 + $0xc] sm:$0xf]
    %v1884 = vunpack.c.l.b16 %v1876
    %v1885 = vunpack.c.l.b16 %v1877
    %v1886 = vunpack.c.l.b16 %v1878
    %v1887 = vunpack.c.l.b16 %v1879
    %v1888 = vpack.c.b16 %v1885, %v1884
    %v1889 = vpack.c.b16 %v1887, %v1886
    %1892 = vmatpush.bf16.msra.mxu0 0
    %1893 = vmatpush.bf16.msra.mxu0 0
    %1894 = vmatpush.bf16.msra.mxu0 0
    %1895 = vmatpush.bf16.msra.mxu0 0
    %1896 = vmatpush.bf16.msra.mxu0 0
    %1897 = vmatpush.bf16.msra.mxu0 0
    %1898 = vmatpush.bf16.msra.mxu0 %v1889
    %1899 = vmatpush.bf16.msra.mxu0 %v1888
    %1900 = vmatmul.bf16.gmra.mxu0 %v1507
    %v1901 = vpop.f32.mrf.mxu0
    %v1902 = vadd.f32 0.0, %v1901
    %v1903 = vpop.f32.mrf.mxu0
    %v1904 = vadd.f32 0.0, %v1903
    %1905 = vmatmul.bf16.gmra.mxu0 %v1510
    %v1906 = vpop.f32.mrf.mxu0
    %v1907 = vadd.f32 0.0, %v1906
    %v1908 = vpop.f32.mrf.mxu0
    %v1909 = vadd.f32 0.0, %v1908
    %1910 = vdwg.mxu0
    %v1911 = vadd.f32 %v1871, %v1902
    %v1912 = vadd.f32 %v1872, %v1904
    %v1913 = vadd.f32 %v1873, %v1907
    %v1914 = vadd.f32 %v1874, %v1909
    %s1915 = scalar_lea.vmem %s47, 48
    %v1916 = vld [vmem:[%s1915] sm:$0xf]
    %v1917 = vld [vmem:[%s1915 + $0x4] sm:$0xf]
    %v1918 = vld [vmem:[%s1915 + $0x8] sm:$0xf]
    %v1919 = vld [vmem:[%s1915 + $0xc] sm:$0xf]
    %v1924 = vunpack.c.l.b16 %v1916
    %v1925 = vunpack.c.l.b16 %v1917
    %v1926 = vunpack.c.l.b16 %v1918
    %v1927 = vunpack.c.l.b16 %v1919
    %v1928 = vpack.c.b16 %v1925, %v1924
    %v1929 = vpack.c.b16 %v1927, %v1926
    %1932 = vmatpush.bf16.msra.mxu0 0
    %1933 = vmatpush.bf16.msra.mxu0 0
    %1934 = vmatpush.bf16.msra.mxu0 0
    %1935 = vmatpush.bf16.msra.mxu0 0
    %1936 = vmatpush.bf16.msra.mxu0 0
    %1937 = vmatpush.bf16.msra.mxu0 0
    %1938 = vmatpush.bf16.msra.mxu0 %v1929
    %1939 = vmatpush.bf16.msra.mxu0 %v1928
    %1940 = vmatmul.bf16.gmra.mxu0 %v1552
    %v1941 = vpop.f32.mrf.mxu0
    %v1942 = vadd.f32 0.0, %v1941
    %v1943 = vpop.f32.mrf.mxu0
    %v1944 = vadd.f32 0.0, %v1943
    %1945 = vmatmul.bf16.gmra.mxu0 %v1555
    %v1946 = vpop.f32.mrf.mxu0
    %v1947 = vadd.f32 0.0, %v1946
    %v1948 = vpop.f32.mrf.mxu0
    %v1949 = vadd.f32 0.0, %v1948
    %1950 = vdwg.mxu0
    %v1951 = vadd.f32 %v1911, %v1942
    %v1952 = vadd.f32 %v1912, %v1944
    %v1953 = vadd.f32 %v1913, %v1947
    %v1954 = vadd.f32 %v1914, %v1949
    %v1955 = vxor.u32 %v1576, 2147483648
    %v1956 = vxor.u32 %v1577, 2147483648
    %v1957 = vxor.u32 %v1578, 2147483648
    %v1958 = vxor.u32 %v1579, 2147483648
    %v1959 = vmul.f32 %v1955, 1.442695
    %v1960 = vpow.pop %v1959
    %v1961 = vmul.f32 %v1956, 1.442695
    %v1962 = vpow.pop %v1961
    %v1963 = vmul.f32 %v1957, 1.442695
    %v1964 = vpow.pop %v1963
    %v1965 = vmul.f32 %v1958, 1.442695
    %v1966 = vpow.pop %v1965
    %v1967 = vadd.f32 %v1960, 1.0
    %v1968 = vadd.f32 %v1962, 1.0
    %v1969 = vadd.f32 %v1964, 1.0
    %v1970 = vadd.f32 %v1966, 1.0
    %v1971 = vrcp.pop %v1967
    %v1972 = vmul.f32 %v1967, %v1971
    %v1973 = vsub.f32 1.0, %v1972
    %v1974 = vmul.f32 %v1971, %v1973
    %v1975 = vadd.f32 %v1971, %v1974
    %vm1976 = vweird.f32 %v1967
    %vm1977 = vweird.f32 %v1971
    %vm1978 = vmor %vm1976, %vm1977
    %v1979 = vsel %vm1978, %v1971, %v1975
    %v1980 = vand.u32 2147483647, %v1967
    %vm1981 = vcmp.eq.f32.partialorder %v1980, 8.507059e+37
    %v1982 = vand.u32 %v1967, 2147483648
    %v1983 = vor.u32 1.1754944e-38, %v1982
    %v1984 = vsel %vm1981, %v1983, %v1979
    %v1985 = vmul.f32 1.0, %v1984
    %v1986 = vrcp.pop %v1968
    %v1987 = vmul.f32 %v1968, %v1986
    %v1988 = vsub.f32 1.0, %v1987
    %v1989 = vmul.f32 %v1986, %v1988
    %v1990 = vadd.f32 %v1986, %v1989
    %vm1991 = vweird.f32 %v1968
    %vm1992 = vweird.f32 %v1986
    %vm1993 = vmor %vm1991, %vm1992
    %v1994 = vsel %vm1993, %v1986, %v1990
    %v1995 = vand.u32 2147483647, %v1968
    %vm1996 = vcmp.eq.f32.partialorder %v1995, 8.507059e+37
    %v1997 = vand.u32 %v1968, 2147483648
    %v1998 = vor.u32 1.1754944e-38, %v1997
    %v1999 = vsel %vm1996, %v1998, %v1994
    %v2000 = vmul.f32 1.0, %v1999
    %v2001 = vrcp.pop %v1969
    %v2002 = vmul.f32 %v1969, %v2001
    %v2003 = vsub.f32 1.0, %v2002
    %v2004 = vmul.f32 %v2001, %v2003
    %v2005 = vadd.f32 %v2001, %v2004
    %vm2006 = vweird.f32 %v1969
    %vm2007 = vweird.f32 %v2001
    %vm2008 = vmor %vm2006, %vm2007
    %v2009 = vsel %vm2008, %v2001, %v2005
    %v2010 = vand.u32 2147483647, %v1969
    %vm2011 = vcmp.eq.f32.partialorder %v2010, 8.507059e+37
    %v2012 = vand.u32 %v1969, 2147483648
    %v2013 = vor.u32 1.1754944e-38, %v2012
    %v2014 = vsel %vm2011, %v2013, %v2009
    %v2015 = vmul.f32 1.0, %v2014
    %v2016 = vrcp.pop %v1970
    %v2017 = vmul.f32 %v1970, %v2016
    %v2018 = vsub.f32 1.0, %v2017
    %v2019 = vmul.f32 %v2016, %v2018
    %v2020 = vadd.f32 %v2016, %v2019
    %vm2021 = vweird.f32 %v1970
    %vm2022 = vweird.f32 %v2016
    %vm2023 = vmor %vm2021, %vm2022
    %v2024 = vsel %vm2023, %v2016, %v2020
    %v2025 = vand.u32 2147483647, %v1970
    %vm2026 = vcmp.eq.f32.partialorder %v2025, 8.507059e+37
    %v2027 = vand.u32 %v1970, 2147483648
    %v2028 = vor.u32 1.1754944e-38, %v2027
    %v2029 = vsel %vm2026, %v2028, %v2024
    %v2030 = vmul.f32 1.0, %v2029
    %v2031 = vxor.u32 %v1701, 2147483648
    %v2032 = vxor.u32 %v1702, 2147483648
    %v2033 = vxor.u32 %v1703, 2147483648
    %v2034 = vxor.u32 %v1704, 2147483648
    %v2035 = vmul.f32 %v2031, 1.442695
    %v2036 = vpow.pop %v2035
    %v2037 = vmul.f32 %v2032, 1.442695
    %v2038 = vpow.pop %v2037
    %v2039 = vmul.f32 %v2033, 1.442695
    %v2040 = vpow.pop %v2039
    %v2041 = vmul.f32 %v2034, 1.442695
    %v2042 = vpow.pop %v2041
    %v2043 = vadd.f32 %v2036, 1.0
    %v2044 = vadd.f32 %v2038, 1.0
    %v2045 = vadd.f32 %v2040, 1.0
    %v2046 = vadd.f32 %v2042, 1.0
    %v2047 = vrcp.pop %v2043
    %v2048 = vmul.f32 %v2043, %v2047
    %v2049 = vsub.f32 1.0, %v2048
    %v2050 = vmul.f32 %v2047, %v2049
    %v2051 = vadd.f32 %v2047, %v2050
    %vm2052 = vweird.f32 %v2043
    %vm2053 = vweird.f32 %v2047
    %vm2054 = vmor %vm2052, %vm2053
    %v2055 = vsel %vm2054, %v2047, %v2051
    %v2056 = vand.u32 2147483647, %v2043
    %vm2057 = vcmp.eq.f32.partialorder %v2056, 8.507059e+37
    %v2058 = vand.u32 %v2043, 2147483648
    %v2059 = vor.u32 1.1754944e-38, %v2058
    %v2060 = vsel %vm2057, %v2059, %v2055
    %v2061 = vmul.f32 1.0, %v2060
    %v2062 = vrcp.pop %v2044
    %v2063 = vmul.f32 %v2044, %v2062
    %v2064 = vsub.f32 1.0, %v2063
    %v2065 = vmul.f32 %v2062, %v2064
    %v2066 = vadd.f32 %v2062, %v2065
    %vm2067 = vweird.f32 %v2044
    %vm2068 = vweird.f32 %v2062
    %vm2069 = vmor %vm2067, %vm2068
    %v2070 = vsel %vm2069, %v2062, %v2066
    %v2071 = vand.u32 2147483647, %v2044
    %vm2072 = vcmp.eq.f32.partialorder %v2071, 8.507059e+37
    %v2073 = vand.u32 %v2044, 2147483648
    %v2074 = vor.u32 1.1754944e-38, %v2073
    %v2075 = vsel %vm2072, %v2074, %v2070
    %v2076 = vmul.f32 1.0, %v2075
    %v2077 = vrcp.pop %v2045
    %v2078 = vmul.f32 %v2045, %v2077
    %v2079 = vsub.f32 1.0, %v2078
    %v2080 = vmul.f32 %v2077, %v2079
    %v2081 = vadd.f32 %v2077, %v2080
    %vm2082 = vweird.f32 %v2045
    %vm2083 = vweird.f32 %v2077
    %vm2084 = vmor %vm2082, %vm2083
    %v2085 = vsel %vm2084, %v2077, %v2081
    %v2086 = vand.u32 2147483647, %v2045
    %vm2087 = vcmp.eq.f32.partialorder %v2086, 8.507059e+37
    %v2088 = vand.u32 %v2045, 2147483648
    %v2089 = vor.u32 1.1754944e-38, %v2088
    %v2090 = vsel %vm2087, %v2089, %v2085
    %v2091 = vmul.f32 1.0, %v2090
    %v2092 = vrcp.pop %v2046
    %v2093 = vmul.f32 %v2046, %v2092
    %v2094 = vsub.f32 1.0, %v2093
    %v2095 = vmul.f32 %v2092, %v2094
    %v2096 = vadd.f32 %v2092, %v2095
    %vm2097 = vweird.f32 %v2046
    %vm2098 = vweird.f32 %v2092
    %vm2099 = vmor %vm2097, %vm2098
    %v2100 = vsel %vm2099, %v2092, %v2096
    %v2101 = vand.u32 2147483647, %v2046
    %vm2102 = vcmp.eq.f32.partialorder %v2101, 8.507059e+37
    %v2103 = vand.u32 %v2046, 2147483648
    %v2104 = vor.u32 1.1754944e-38, %v2103
    %v2105 = vsel %vm2102, %v2104, %v2100
    %v2106 = vmul.f32 1.0, %v2105
    %v2107 = vtanh.pop %v1826
    %v2108 = vtanh.pop %v1827
    %v2109 = vtanh.pop %v1828
    %v2110 = vtanh.pop %v1829
    %v2111 = vxor.u32 %v1951, 2147483648
    %v2112 = vxor.u32 %v1952, 2147483648
    %v2113 = vxor.u32 %v1953, 2147483648
    %v2114 = vxor.u32 %v1954, 2147483648
    %v2115 = vmul.f32 %v2111, 1.442695
    %v2116 = vpow.pop %v2115
    %v2117 = vmul.f32 %v2112, 1.442695
    %v2118 = vpow.pop %v2117
    %v2119 = vmul.f32 %v2113, 1.442695
    %v2120 = vpow.pop %v2119
    %v2121 = vmul.f32 %v2114, 1.442695
    %v2122 = vpow.pop %v2121
    %v2123 = vadd.f32 %v2116, 1.0
    %v2124 = vadd.f32 %v2118, 1.0
    %v2125 = vadd.f32 %v2120, 1.0
    %v2126 = vadd.f32 %v2122, 1.0
    %v2127 = vrcp.pop %v2123
    %v2128 = vmul.f32 %v2123, %v2127
    %v2129 = vsub.f32 1.0, %v2128
    %v2130 = vmul.f32 %v2127, %v2129
    %v2131 = vadd.f32 %v2127, %v2130
    %vm2132 = vweird.f32 %v2123
    %vm2133 = vweird.f32 %v2127
    %vm2134 = vmor %vm2132, %vm2133
    %v2135 = vsel %vm2134, %v2127, %v2131
    %v2136 = vand.u32 2147483647, %v2123
    %vm2137 = vcmp.eq.f32.partialorder %v2136, 8.507059e+37
    %v2138 = vand.u32 %v2123, 2147483648
    %v2139 = vor.u32 1.1754944e-38, %v2138
    %v2140 = vsel %vm2137, %v2139, %v2135
    %v2141 = vmul.f32 1.0, %v2140
    %v2142 = vrcp.pop %v2124
    %v2143 = vmul.f32 %v2124, %v2142
    %v2144 = vsub.f32 1.0, %v2143
    %v2145 = vmul.f32 %v2142, %v2144
    %v2146 = vadd.f32 %v2142, %v2145
    %vm2147 = vweird.f32 %v2124
    %vm2148 = vweird.f32 %v2142
    %vm2149 = vmor %vm2147, %vm2148
    %v2150 = vsel %vm2149, %v2142, %v2146
    %v2151 = vand.u32 2147483647, %v2124
    %vm2152 = vcmp.eq.f32.partialorder %v2151, 8.507059e+37
    %v2153 = vand.u32 %v2124, 2147483648
    %v2154 = vor.u32 1.1754944e-38, %v2153
    %v2155 = vsel %vm2152, %v2154, %v2150
    %v2156 = vmul.f32 1.0, %v2155
    %v2157 = vrcp.pop %v2125
    %v2158 = vmul.f32 %v2125, %v2157
    %v2159 = vsub.f32 1.0, %v2158
    %v2160 = vmul.f32 %v2157, %v2159
    %v2161 = vadd.f32 %v2157, %v2160
    %vm2162 = vweird.f32 %v2125
    %vm2163 = vweird.f32 %v2157
    %vm2164 = vmor %vm2162, %vm2163
    %v2165 = vsel %vm2164, %v2157, %v2161
    %v2166 = vand.u32 2147483647, %v2125
    %vm2167 = vcmp.eq.f32.partialorder %v2166, 8.507059e+37
    %v2168 = vand.u32 %v2125, 2147483648
    %v2169 = vor.u32 1.1754944e-38, %v2168
    %v2170 = vsel %vm2167, %v2169, %v2165
    %v2171 = vmul.f32 1.0, %v2170
    %v2172 = vrcp.pop %v2126
    %v2173 = vmul.f32 %v2126, %v2172
    %v2174 = vsub.f32 1.0, %v2173
    %v2175 = vmul.f32 %v2172, %v2174
    %v2176 = vadd.f32 %v2172, %v2175
    %vm2177 = vweird.f32 %v2126
    %vm2178 = vweird.f32 %v2172
    %vm2179 = vmor %vm2177, %vm2178
    %v2180 = vsel %vm2179, %v2172, %v2176
    %v2181 = vand.u32 2147483647, %v2126
    %vm2182 = vcmp.eq.f32.partialorder %v2181, 8.507059e+37
    %v2183 = vand.u32 %v2126, 2147483648
    %v2184 = vor.u32 1.1754944e-38, %v2183
    %v2185 = vsel %vm2182, %v2184, %v2180
    %v2186 = vmul.f32 1.0, %v2185
    %v2187 = vmul.f32 %v2061, %v311
    %v2188 = vmul.f32 %v2076, %v312
    %v2189 = vmul.f32 %v2091, %v313
    %v2190 = vmul.f32 %v2106, %v314
    %v2191 = vmul.f32 %v1985, %v2107
    %v2192 = vmul.f32 %v2000, %v2108
    %v2193 = vmul.f32 %v2015, %v2109
    %v2194 = vmul.f32 %v2030, %v2110
    %v2195 = vadd.f32 %v2187, %v2191
    %v2196 = vadd.f32 %v2188, %v2192
    %v2197 = vadd.f32 %v2189, %v2193
    %v2198 = vadd.f32 %v2190, %v2194
    %v2199 = vtanh.pop %v2195
    %v2200 = vtanh.pop %v2196
    %v2201 = vtanh.pop %v2197
    %v2202 = vtanh.pop %v2198
    %v2203 = vmul.f32 %v2141, %v2199
    %v2204 = vmul.f32 %v2156, %v2200
    %v2205 = vmul.f32 %v2171, %v2201
    %v2206 = vmul.f32 %v2186, %v2202
    %v2207 = vsel %vm345, %v2203, 0.0
    %2208 = vadd.xlane.f32.xlu0 %v2207
    %v2209 = vpop.xlane.xlu0 %2208
    %v2210 = vsel %vm345, %v2204, 0.0
    %2211 = vadd.xlane.f32.xlu0 %v2210
    %v2212 = vpop.xlane.xlu0 %2211
    %v2213 = vsel %vm345, %v2205, 0.0
    %2214 = vadd.xlane.f32.xlu0 %v2213
    %v2215 = vpop.xlane.xlu0 %2214
    %v2216 = vsel %vm345, %v2206, 0.0
    %2217 = vadd.xlane.f32.xlu0 %v2216
    %v2218 = vpop.xlane.xlu0 %2217
    %v2219 = vmul.f32 %v2209, %v1129
    %v2220 = vmul.f32 %v2212, %v1129
    %v2221 = vmul.f32 %v2215, %v1129
    %v2222 = vmul.f32 %v2218, %v1129
    %v2223 = vsub.f32 %v2203, %v2219
    %v2224 = vsub.f32 %v2204, %v2220
    %v2225 = vsub.f32 %v2205, %v2221
    %v2226 = vsub.f32 %v2206, %v2222
    %v2227 = vmul.f32 %v2223, %v2223
    %v2228 = vmul.f32 %v2224, %v2224
    %v2229 = vmul.f32 %v2225, %v2225
    %v2230 = vmul.f32 %v2226, %v2226
    %v2231 = vsel %vm345, %v2227, 0.0
    %2232 = vadd.xlane.f32.xlu0 %v2231
    %v2233 = vpop.xlane.xlu0 %2232
    %v2234 = vsel %vm345, %v2228, 0.0
    %2235 = vadd.xlane.f32.xlu0 %v2234
    %v2236 = vpop.xlane.xlu0 %2235
    %v2237 = vsel %vm345, %v2229, 0.0
    %2238 = vadd.xlane.f32.xlu0 %v2237
    %v2239 = vpop.xlane.xlu0 %2238
    %v2240 = vsel %vm345, %v2230, 0.0
    %2241 = vadd.xlane.f32.xlu0 %v2240
    %v2242 = vpop.xlane.xlu0 %2241
    %v2243 = vmul.f32 %v2233, %v1129
    %v2244 = vmul.f32 %v2236, %v1129
    %v2245 = vmul.f32 %v2239, %v1129
    %v2246 = vmul.f32 %v2242, %v1129
    %v2247 = vadd.f32 %v2243, 1e-05
    %v2248 = vadd.f32 %v2244, 1e-05
    %v2249 = vadd.f32 %v2245, 1e-05
    %v2250 = vadd.f32 %v2246, 1e-05
    %v2251 = vrsqrt.pop %v2247
    %v2252 = vmul.f32 %v2251, %v2247
    %v2253 = vmul.f32 %v2252, %v2251
    %v2254 = vmul.f32 0.5, %v2253
    %v2255 = vsub.f32 1.5, %v2254
    %v2256 = vmul.f32 %v2251, %v2255
    %vm2257 = vweird.f32 %v2247
    %vm2258 = vweird.f32 %v2251
    %vm2259 = vmor %vm2257, %vm2258
    %v2260 = vsel %vm2259, %v2251, %v2256
    %v2261 = vrsqrt.pop %v2248
    %v2262 = vmul.f32 %v2261, %v2248
    %v2263 = vmul.f32 %v2262, %v2261
    %v2264 = vmul.f32 0.5, %v2263
    %v2265 = vsub.f32 1.5, %v2264
    %v2266 = vmul.f32 %v2261, %v2265
    %vm2267 = vweird.f32 %v2248
    %vm2268 = vweird.f32 %v2261
    %vm2269 = vmor %vm2267, %vm2268
    %v2270 = vsel %vm2269, %v2261, %v2266
    %v2271 = vrsqrt.pop %v2249
    %v2272 = vmul.f32 %v2271, %v2249
    %v2273 = vmul.f32 %v2272, %v2271
    %v2274 = vmul.f32 0.5, %v2273
    %v2275 = vsub.f32 1.5, %v2274
    %v2276 = vmul.f32 %v2271, %v2275
    %vm2277 = vweird.f32 %v2249
    %vm2278 = vweird.f32 %v2271
    %vm2279 = vmor %vm2277, %vm2278
    %v2280 = vsel %vm2279, %v2271, %v2276
    %v2281 = vrsqrt.pop %v2250
    %v2282 = vmul.f32 %v2281, %v2250
    %v2283 = vmul.f32 %v2282, %v2281
    %v2284 = vmul.f32 0.5, %v2283
    %v2285 = vsub.f32 1.5, %v2284
    %v2286 = vmul.f32 %v2281, %v2285
    %vm2287 = vweird.f32 %v2250
    %vm2288 = vweird.f32 %v2281
    %vm2289 = vmor %vm2287, %vm2288
    %v2290 = vsel %vm2289, %v2281, %v2286
    %v2291 = vmul.f32 %v2223, %v2260
    %v2292 = vmul.f32 %v2224, %v2270
    %v2293 = vmul.f32 %v2225, %v2280
    %v2294 = vmul.f32 %v2226, %v2290
    %v2295 = vld [vmem:[%s57] sm:$0x1]
    %v2297 = vperm.slane %v2295, 0
    %v2299 = vmul.f32 %v2291, %v2297
    %v2300 = vmul.f32 %v2292, %v2297
    %v2301 = vmul.f32 %v2293, %v2297
    %v2302 = vmul.f32 %v2294, %v2297
    %v2303 = vld [vmem:[%s59] sm:$0x1]
    %v2305 = vperm.slane %v2303, 0
    %v2307 = vadd.f32 %v2299, %v2305
    %v2308 = vadd.f32 %v2300, %v2305
    %v2309 = vadd.f32 %v2301, %v2305
    %v2310 = vadd.f32 %v2302, %v2305
    %v2311 = vmul.f32 %v2307, %v221
    %v2312 = vmul.f32 %v2308, %v226
    %v2313 = vmul.f32 %v2309, %v231
    %v2314 = vmul.f32 %v2310, %v236
    %v2315 = vadd.f32 %v2311, %v1226
    %v2316 = vadd.f32 %v2312, %v1227
    %v2317 = vadd.f32 %v2313, %v1228
    %v2318 = vadd.f32 %v2314, %v1229
  $region158: #{neurosat_forward.1} parent=0 // loop_footer
    %s302 = sadd.s32 1, %s298
  $region159: #{neurosat_forward.1} parent=0 // loop_footer_branch
    %297 = sbr.rel target = $region155
  $region160: #{neurosat_forward.1} parent=0 // loop_exit
    _
  %v2319 = vmul.f32 %v303, %v221
  %v2320 = vmul.f32 %v304, %v226
  %v2321 = vmul.f32 %v305, %v231
  %v2322 = vmul.f32 %v306, %v236
  %v2323 = vpack.c.bf16 %v2320, %v2319
  %v2324 = vpack.c.bf16 %v2322, %v2321
  %v2325 = vld [vmem:[%s65] sm:$0xf]
  %v2326 = vld [vmem:[%s65 + $0x4] sm:$0xf]
  %v2327 = vld [vmem:[%s65 + $0x8] sm:$0xf]
  %v2328 = vld [vmem:[%s65 + $0xc] sm:$0xf]
  %v2329 = vld [vmem:[%s67] sm:$0x1]
  %v2331 = vperm.slane %v2329, 0
  %v2337 = vunpack.c.l.b16 %v2325
  %v2338 = vunpack.c.l.b16 %v2326
  %v2339 = vunpack.c.l.b16 %v2327
  %v2340 = vunpack.c.l.b16 %v2328
  %v2341 = vpack.c.b16 %v2338, %v2337
  %v2342 = vpack.c.b16 %v2340, %v2339
  %vm2345 = vcmask 261120
  %v2347 = vsel %vm2345, %v2323, 0
  %v2350 = vsel %vm2345, %v2324, 0
  %2352 = vmatpush.bf16.msra.mxu0 0
  %2353 = vmatpush.bf16.msra.mxu0 0
  %2354 = vmatpush.bf16.msra.mxu0 0
  %2355 = vmatpush.bf16.msra.mxu0 0
  %2356 = vmatpush.bf16.msra.mxu0 0
  %2357 = vmatpush.bf16.msra.mxu0 0
  %2358 = vmatpush.bf16.msra.mxu0 %v2342
  %2359 = vmatpush.bf16.msra.mxu0 %v2341
  %2360 = vmatmul.bf16.gmra.mxu0 %v2347
  %v2361 = vpop.f32.mrf.mxu0
  %v2362 = vadd.f32 %v2331, %v2361
  %v2363 = vpop.f32.mrf.mxu0
  %v2364 = vadd.f32 %v2331, %v2363
  %2365 = vmatmul.bf16.gmra.mxu0 %v2350
  %v2366 = vpop.f32.mrf.mxu0
  %v2367 = vadd.f32 %v2331, %v2366
  %v2368 = vpop.f32.mrf.mxu0
  %v2369 = vadd.f32 %v2331, %v2368
  %2370 = vdwg.mxu0
  %v2371 = vpack.c.bf16 %v2364, %v2362
  %v2372 = vpack.c.bf16 %v2369, %v2367
  %v2373 = vld [vmem:[%s69] sm:$0xf]
  %v2374 = vld [vmem:[%s69 + $0x4] sm:$0xf]
  %v2375 = vld [vmem:[%s69 + $0x8] sm:$0xf]
  %v2376 = vld [vmem:[%s69 + $0xc] sm:$0xf]
  %v2377 = vld [vmem:[%s71] sm:$0x1]
  %v2379 = vperm.slane %v2377, 0
  %v2385 = vunpack.c.l.b16 %v2373
  %v2386 = vunpack.c.l.b16 %v2374
  %v2387 = vunpack.c.l.b16 %v2375
  %v2388 = vunpack.c.l.b16 %v2376
  %v2389 = vpack.c.b16 %v2386, %v2385
  %v2390 = vpack.c.b16 %v2388, %v2387
  %v2394 = vsel %vm2345, %v2371, 0
  %v2397 = vsel %vm2345, %v2372, 0
  %2399 = vmatpush.bf16.msra.mxu0 0
  %2400 = vmatpush.bf16.msra.mxu0 0
  %2401 = vmatpush.bf16.msra.mxu0 0
  %2402 = vmatpush.bf16.msra.mxu0 0
  %2403 = vmatpush.bf16.msra.mxu0 0
  %2404 = vmatpush.bf16.msra.mxu0 0
  %2405 = vmatpush.bf16.msra.mxu0 %v2390
  %2406 = vmatpush.bf16.msra.mxu0 %v2389
  %2407 = vmatmul.bf16.gmra.mxu0 %v2394
  %v2408 = vpop.f32.mrf.mxu0
  %v2409 = vadd.f32 %v2379, %v2408
  %v2410 = vpop.f32.mrf.mxu0
  %v2411 = vadd.f32 %v2379, %v2410
  %2412 = vmatmul.bf16.gmra.mxu0 %v2397
  %v2413 = vpop.f32.mrf.mxu0
  %v2414 = vadd.f32 %v2379, %v2413
  %v2415 = vpop.f32.mrf.mxu0
  %v2416 = vadd.f32 %v2379, %v2415
  %2417 = vdwg.mxu0
  %v2418 = vpack.c.bf16 %v2411, %v2409
  %v2419 = vpack.c.bf16 %v2416, %v2414
  %v2420 = vld [vmem:[%s73] sm:$0xf]
  %v2421 = vld [vmem:[%s73 + $0x4] sm:$0xf]
  %v2422 = vld [vmem:[%s73 + $0x8] sm:$0xf]
  %v2423 = vld [vmem:[%s73 + $0xc] sm:$0xf]
  %v2424 = vld [vmem:[#allocation2] sm:$0x1]
  %v2426 = vperm.slane %v2424, 0
  %v2432 = vunpack.c.l.b16 %v2420
  %v2433 = vunpack.c.l.b16 %v2421
  %v2434 = vunpack.c.l.b16 %v2422
  %v2435 = vunpack.c.l.b16 %v2423
  %v2436 = vpack.c.b16 %v2433, %v2432
  %v2437 = vpack.c.b16 %v2435, %v2434
  %v2441 = vsel %vm2345, %v2418, 0
  %v2444 = vsel %vm2345, %v2419, 0
  %2446 = vmatpush.bf16.msra.mxu0 0
  %2447 = vmatpush.bf16.msra.mxu0 0
  %2448 = vmatpush.bf16.msra.mxu0 0
  %2449 = vmatpush.bf16.msra.mxu0 0
  %2450 = vmatpush.bf16.msra.mxu0 0
  %2451 = vmatpush.bf16.msra.mxu0 0
  %2452 = vmatpush.bf16.msra.mxu0 %v2437
  %2453 = vmatpush.bf16.msra.mxu0 %v2436
  %2454 = vmatmul.bf16.gmra.mxu0 %v2441
  %v2455 = vpop.f32.mrf.mxu0
  %v2456 = vadd.f32 %v2426, %v2455
  %v2457 = vpop.f32.mrf.mxu0
  %v2458 = vadd.f32 %v2426, %v2457
  %2459 = vmatmul.bf16.gmra.mxu0 %v2444
  %v2460 = vpop.f32.mrf.mxu0
  %v2461 = vadd.f32 %v2426, %v2460
  %v2462 = vpop.f32.mrf.mxu0
  %v2463 = vadd.f32 %v2426, %v2462
  %2464 = vdwg.mxu0
  %v2465 = vld [vmem:[%s9] sm:$0x3]
  %v2467 = vsel %vm2345, %v2465, 0
  %2469 = vmatpush.msra.mxu0 0.0
  %2470 = vmatpush.msra.mxu0 0.0
  %2471 = vmatpush.msra.mxu0 0.0
  %2472 = vmatpush.msra.mxu0 0.0
  %2473 = vmatpush.msra.mxu0 0.0
  %2474 = vmatpush.msra.mxu0 0.0
  %2475 = vmatpush.msra.mxu0 0.0
  %2476 = vmatpush.msra.mxu0 0.0
  %2477 = vmatpush.msra.mxu0 0.0
  %2478 = vmatpush.msra.mxu0 0.0
  %2479 = vmatpush.msra.mxu0 0.0
  %2480 = vmatpush.msra.mxu0 0.0
  %2481 = vmatpush.msra.mxu0 %v2463
  %2482 = vmatpush.msra.mxu0 %v2461
  %2483 = vmatpush.msra.mxu0 %v2458
  %2484 = vmatpush.msra.mxu0 %v2456
  %2485 = vmatmul.f32.gmra.mxu0 %v2467
  %v2486 = vpop.f32.mrf.mxu0
  %v2487 = vadd.f32 0.0, %v2486
  %2488 = vdwg.mxu0
  %vm2489 = vcmask 1024
  %2490 = vst.msk [vmem:[%s77] sm:$0x3] %vm2489, %v2487
  // Predicated region
  $region161: #{neurosat_forward.1} parent=0 // pred_check
    _
  $region162: #{neurosat_forward.1} parent=0 // pred_check_branch
    %2492 = sbr.rel (0) target = $region164
  $region163: #{neurosat_forward.1} parent=0 // pred_region
    _
  $region164: #{neurosat_forward.1} parent=0 // pred_fallthru
    _
  // Predicated region
  $region165: #{neurosat_forward.1} parent=0 // pred_check
    _
  $region166: #{neurosat_forward.1} parent=0 // pred_check_branch
    %2494 = sbr.rel (0) target = $region168
  $region167: #{neurosat_forward.1} parent=0 // pred_region
    _
  $region168: #{neurosat_forward.1} parent=0 // pred_fallthru
    _

</llo_original>
